<compile_context>
chip_gen: v6e
topology: v6e:2x2x1
jax: 0.10.0
libtpu: 0.0.40
codegen_flags: <defaults>
</compile_context>

<pallas_src>
import functools

import numpy as np
import jax
import jax.numpy as jnp
from jax.experimental import pallas as pl
from jax.experimental.pallas import tpu as pltpu


# ConvTranspose2d(k=4, s=2, p=1): output row oh = 2*i + ph gets contributions from
# (kernel_row kh, input_row_offset dh):  ph=0 -> (1,0),(3,-1);  ph=1 -> (2,0),(0,+1)
# (same decomposition along the width axis).
_TAPS = {0: ((1, 0), (3, -1)), 1: ((2, 0), (0, 1))}
_SLOPE = 0.01  # nn.LeakyReLU() default


def _lrelu(x):
    return jnp.where(x >= 0.0, x, _SLOPE * x)


# ----------------------------------------------------------------------------
# Fused kernel: linear -> 4x upblock -> 1x1 head, all in VMEM / vregs.
# ----------------------------------------------------------------------------
def _decoder_kernel(x_ref, lin_w_ref, lin_b_ref,
                    u0_ref, w0_ref, b0_ref,
                    u1_ref, w1_ref, b1_ref,
                    u2_ref, w2_ref, b2_ref,
                    u3_ref, w3_ref, b3_ref,
                    hw_ref, hb_ref, o_ref):
    f32 = jnp.float32

    # Linear + LeakyReLU.  Columns of lin_w are pre-permuted so y is NHWC-flat:
    # per batch row, columns = [image row 0 (64) | image row 1 (64)].
    y = jnp.dot(x_ref[...], lin_w_ref[...], preferred_element_type=f32) + lin_b_ref[...]
    y = _lrelu(y)

    stages = ((u0_ref, w0_ref, b0_ref), (u1_ref, w1_ref, b1_ref),
              (u2_ref, w2_ref, b2_ref), (u3_ref, w3_ref, b3_ref))
    for u_ref, w_ref, b_ref in stages:
        half = y.shape[1] // 2
        yl, yr = y[:, :half], y[:, half:]          # previous stage's two row parities
        # Exact 0/1 glue GEMMs: interleave parities into image-row order, with the
        # +-1 row shift and per-image zero padding baked into u_ref at pack time.
        xa = (jnp.dot(u_ref[0], yl, preferred_element_type=f32)
              + jnp.dot(u_ref[1], yr, preferred_element_type=f32))   # rows shifted -1
        xc = (jnp.dot(u_ref[2], yl, preferred_element_type=f32)
              + jnp.dot(u_ref[3], yr, preferred_element_type=f32))   # center rows
        xb = (jnp.dot(u_ref[4], yl, preferred_element_type=f32)
              + jnp.dot(u_ref[5], yr, preferred_element_type=f32))   # rows shifted +1
        xbig = jnp.concatenate([xa, xc, xb], axis=1)                 # (M, 192)
        # One merged MXU GEMM per stage: K=192 (3 row taps), N=128/256 (both parities).
        y = _lrelu(jnp.dot(xbig, w_ref[...], preferred_element_type=f32) + b_ref[...])

    # Fused 1x1 conv head (block-diagonal over width and parity), no activation.
    out = jnp.dot(y, hw_ref[...], preferred_element_type=f32) + hb_ref[...]
    o_ref[...] = out.astype(o_ref.dtype)


# ----------------------------------------------------------------------------
# Parameters: raw (PyTorch-like) + packing into kernel-ready folded matrices.
# ----------------------------------------------------------------------------
def init_raw_params(key, *, w, h, in_channels, out_channels, ch_mult):
    f_in = in_channels * ch_mult
    f_out = out_channels * ch_mult
    h16, w16 = h // 16, w // 16
    lin_in = 16 * f_in
    lin_out = 8 * f_in * w16 * h16
    chans = [8 * f_in, 4 * f_in, 2 * f_in, f_in, f_out]
    keys = jax.random.split(key, 12)
    raw = {
        "lin_w": jax.random.normal(keys[0], (lin_in, lin_out), jnp.float32) * 0.1,
        "lin_b": jax.random.normal(keys[1], (lin_out,), jnp.float32) * 0.05,
    }
    for i in range(4):
        cin, cout = chans[i], chans[i + 1]
        raw[f"up{i}_w"] = jax.random.normal(keys[2 + 2 * i], (cin, cout, 4, 4), jnp.float32) * 0.1
        raw[f"up{i}_b"] = jax.random.normal(keys[3 + 2 * i], (cout,), jnp.float32) * 0.05
    raw["head_w"] = jax.random.normal(keys[10], (f_out, out_channels), jnp.float32) * 0.1
    raw["head_b"] = jax.random.normal(keys[11], (out_channels,), jnp.float32) * 0.05
    return raw


def pack_params(raw, *, w, h, in_channels, out_channels, ch_mult, batch):
    f_in = in_channels * ch_mult
    f_out = out_channels * ch_mult
    h16, w16 = h // 16, w // 16
    assert h16 == 2, "packing assumes the linear output spans exactly 2 image rows (h == 32)"
    chans = [8 * f_in, 4 * f_in, 2 * f_in, f_in, f_out]
    c0 = chans[0]
    B = batch

    # Linear: permute output columns to NHWC-flat (i, j, c) order; pre-shape the bias.
    lin_w = np.asarray(raw["lin_w"])
    lin_b = np.asarray(raw["lin_b"])
    n_idx = np.arange(c0 * h16 * w16).reshape(c0, h16, w16)
    perm = np.transpose(n_idx, (1, 2, 0)).reshape(-1)
    packed = {"lin_w": jnp.asarray(lin_w[:, perm]),
              "lin_b": jnp.asarray(lin_b[perm][None, :])}

    H, W = h16, w16
    for s in range(4):
        cin, cout = chans[s], chans[s + 1]
        wt = np.asarray(raw[f"up{s}_w"])          # (Cin, Cout, 4, 4) PyTorch ConvTranspose2d
        b = np.asarray(raw[f"up{s}_b"])
        K, ncol = W * cin, 2 * W * cout
        nc = np.zeros((2, K, ncol), np.float32)   # center row tap (dh = 0)
        ne = np.zeros((2, K, ncol), np.float32)   # edge row tap (dh = -1 for ph=0, +1 for ph=1)
        for ph in (0, 1):
            (kh_c, _), (kh_e, _) = _TAPS[ph]
            for pw in (0, 1):
                for kw, dw in _TAPS[pw]:
                    for j in range(W):
                        jp = j + dw
                        if 0 <= jp < W:           # width zero-padding folded in here
                            rows = slice(jp * cin, (jp + 1) * cin)
                            cols = slice((2 * j + pw) * cout, (2 * j + pw + 1) * cout)
                            nc[ph, rows, cols] = wt[:, :, kh_c, kw]
                            ne[ph, rows, cols] = wt[:, :, kh_e, kw]
        # Merged weight (3K, 2*ncol): K-blocks [above | center | below], N-halves [parity0|parity1].
        wbig = np.zeros((3 * K, 2 * ncol), np.float32)
        wbig[0 * K:1 * K, 0:ncol] = ne[0]
        wbig[1 * K:2 * K, 0:ncol] = nc[0]
        wbig[1 * K:2 * K, ncol:2 * ncol] = nc[1]
        wbig[2 * K:3 * K, ncol:2 * ncol] = ne[1]
        packed[f"up{s}_w"] = jnp.asarray(wbig)
        packed[f"up{s}_b"] = jnp.asarray(np.tile(b, 4 * W)[None, :].astype(np.float32))

        # Row-expansion matrices (exact 0/1): interleave the previous stage's two
        # output-row parities into image-row order; UA/UB additionally fold the +-1
        # row shift and the per-image height zero-padding.
        m_in, h_prev = B * H, H // 2
        m_prev = B * h_prev
        uc = np.zeros((2, m_in, m_prev), np.float32)
        for bb in range(B):
            for i in range(h_prev):
                for p in (0, 1):
                    uc[p, bb * H + 2 * i + p, bb * h_prev + i] = 1.0
        ua = np.zeros_like(uc)
        ub = np.zeros_like(uc)
        for p in (0, 1):
            for m in range(m_in):
                r = m % H
                if r >= 1:
                    ua[p, m] = uc[p, m - 1]
                if r <= H - 2:
                    ub[p, m] = uc[p, m + 1]
        packed[f"up{s}_u"] = jnp.asarray(
            np.stack([ua[0], ua[1], uc[0], uc[1], ub[0], ub[1]], axis=0))
        H, W = 2 * H, 2 * W

    # 1x1 head: one block-diagonal GEMM over (parity x width) positions + tiled bias.
    hw = np.asarray(raw["head_w"])   # (f_out, out_channels)
    hb = np.asarray(raw["head_b"])
    ncol3 = w * f_out                # per-parity width of the stage-3 output
    ocol = w * out_channels          # per-parity width of the head output
    hbig = np.zeros((2 * ncol3, 2 * ocol), np.float32)
    for p in (0, 1):
        for q in range(w):
            hbig[p * ncol3 + q * f_out:p * ncol3 + (q + 1) * f_out,
                 p * ocol + q * out_channels:p * ocol + (q + 1) * out_channels] = hw
    packed["head_w"] = jnp.asarray(hbig)
    packed["head_b"] = jnp.asarray(np.tile(hb, 2 * w)[None, :].astype(np.float32))
    return packed


# ----------------------------------------------------------------------------
# Forward: a single fused pallas_call + one tiny XLA transpose to NCHW.
# ----------------------------------------------------------------------------
def decoder_forward(x, params, *, w, h, in_channels, out_channels, ch_mult):
    B = x.shape[0]
    out_rows = B * (h // 2)
    out_cols = 2 * w * out_channels
    vmem = pl.BlockSpec(memory_space=pltpu.MemorySpace.VMEM)

    ins = (x, params["lin_w"], params["lin_b"])
    for s in range(4):
        ins = ins + (params[f"up{s}_u"], params[f"up{s}_w"], params[f"up{s}_b"])
    ins = ins + (params["head_w"], params["head_b"])

    out2d = pl.pallas_call(
        _decoder_kernel,
        out_shape=jax.ShapeDtypeStruct((out_rows, out_cols), jnp.float32),
        in_specs=[vmem] * len(ins),
        out_specs=vmem,
    )(*ins)

    # Rows = (b, i) with i the stage-3 input row; cols = (parity p, width, channel).
    out = out2d.reshape(B, h // 2, 2, w, out_channels)        # (b, i, p, w, c)
    # TODO(synk): the final 8 KB NHWC-ish -> NCHW relayout stays in XLA on purpose
    # (cheaper than an in-kernel transpose at this size).
    return jnp.transpose(out, (0, 4, 1, 2, 3)).reshape(B, out_channels, h, w)


# ----------------------------------------------------------------------------
# Pure-JAX reference (same _TAPS decomposition, independent of the kernel layouts).
# ----------------------------------------------------------------------------
def reference_forward(x, raw, *, w, h, in_channels, out_channels, ch_mult):
    f_in = in_channels * ch_mult
    B = x.shape[0]
    h16, w16 = h // 16, w // 16
    y = jnp.dot(x, raw["lin_w"], precision="highest") + raw["lin_b"]
    y = jnp.where(y >= 0, y, _SLOPE * y)
    y = y.reshape(B, 8 * f_in, h16, w16).transpose(0, 2, 3, 1)
    for s in range(4):
        wt, b = raw[f"up{s}_w"], raw[f"up{s}_b"]
        Bq, H, W, _ = y.shape
        cout = wt.shape[1]
        xp = jnp.pad(y, ((0, 0), (1, 1), (1, 1), (0, 0)))
        out = jnp.zeros((Bq, 2 * H, 2 * W, cout), jnp.float32)
        for ph in (0, 1):
            for pw in (0, 1):
                acc = jnp.zeros((Bq, H, W, cout), jnp.float32)
                for kh, dh in _TAPS[ph]:
                    for kw, dw in _TAPS[pw]:
                        acc = acc + jnp.einsum(
                            "bhwc,cd->bhwd",
                            xp[:, 1 + dh:1 + dh + H, 1 + dw:1 + dw + W, :],
                            wt[:, :, kh, kw], precision="highest")
                acc = acc + b
                acc = jnp.where(acc >= 0, acc, _SLOPE * acc)
                out = out.at[:, ph::2, pw::2, :].set(acc)
        y = out
    out = jnp.einsum("bhwc,cd->bhwd", y, raw["head_w"], precision="highest") + raw["head_b"]
    return out.transpose(0, 3, 1, 2)


if __name__ == "__main__":
    # Small config: w=h=32, in_channels=2, out_channels=2, ch_mult=2
    # -> factor_in=4, latent dim = 16*factor_in = 64, output (B, 2, 32, 32)
    W_IMG, H_IMG = 32, 32
    IN_CH, OUT_CH, CH_MULT = 2, 2, 2
    B = 2
    cfg = dict(w=W_IMG, h=H_IMG, in_channels=IN_CH, out_channels=OUT_CH, ch_mult=CH_MULT)

    key = jax.random.PRNGKey(0)
    pkey, xkey = jax.random.split(key)
    raw = init_raw_params(pkey, **cfg)
    params = pack_params(raw, batch=B, **cfg)
    x = jax.random.normal(xkey, (B, 16 * IN_CH * CH_MULT), jnp.float32)

    fwd = jax.jit(functools.partial(decoder_forward, **cfg))
    out = jax.block_until_ready(fwd(x, params))

    assert out.shape == (B, OUT_CH, H_IMG, W_IMG), out.shape
    assert bool(jnp.all(jnp.isfinite(out)))

    ref = reference_forward(x, raw, **cfg)
    err = float(jnp.max(jnp.abs(out - ref)))
    assert err < 2e-3, f"max abs err vs reference: {err}"
    print("KERNEL_OK")
</pallas_src>

<mosaic_0001>
module attributes {stable_mosaic.version = 11 : i64} {
  func.func @_decoder_kernel(%arg0: memref<2x64xf32, #tpu.memory_space<vmem>>, %arg1: memref<64x128xf32, #tpu.memory_space<vmem>>, %arg2: memref<1x128xf32, #tpu.memory_space<vmem>>, %arg3: memref<6x4x2xf32, #tpu.memory_space<vmem>>, %arg4: memref<192x128xf32, #tpu.memory_space<vmem>>, %arg5: memref<1x128xf32, #tpu.memory_space<vmem>>, %arg6: memref<6x8x4xf32, #tpu.memory_space<vmem>>, %arg7: memref<192x128xf32, #tpu.memory_space<vmem>>, %arg8: memref<1x128xf32, #tpu.memory_space<vmem>>, %arg9: memref<6x16x8xf32, #tpu.memory_space<vmem>>, %arg10: memref<192x128xf32, #tpu.memory_space<vmem>>, %arg11: memref<1x128xf32, #tpu.memory_space<vmem>>, %arg12: memref<6x32x16xf32, #tpu.memory_space<vmem>>, %arg13: memref<192x256xf32, #tpu.memory_space<vmem>>, %arg14: memref<1x256xf32, #tpu.memory_space<vmem>>, %arg15: memref<256x128xf32, #tpu.memory_space<vmem>>, %arg16: memref<1x128xf32, #tpu.memory_space<vmem>>, %arg17: memref<32x128xf32, #tpu.memory_space<vmem>>) attributes {dimension_semantics = [], scalar_prefetch = 0 : i64, scratch_operands = 0 : i64, tpu.core_type = #tpu.core_type<tc>} {
    %c0 = arith.constant 0 : index
    %c0_0 = arith.constant 0 : index
    %0 = vector.load %arg0[%c0, %c0_0] : memref<2x64xf32, #tpu.memory_space<vmem>>, vector<2x64xf32>
    %c0_1 = arith.constant 0 : index
    %c0_2 = arith.constant 0 : index
    %1 = vector.load %arg1[%c0_1, %c0_2] : memref<64x128xf32, #tpu.memory_space<vmem>>, vector<64x128xf32>
    %cst = arith.constant dense<0.000000e+00> : vector<2x128xf32>
    %2 = tpu.matmul %0, %1, %cst {dimension_numbers = #tpu.dot_dimension_numbers<[1], [0], [0], [1], [0, 0, 1, 1], [], []>} : vector<2x64xf32>, vector<64x128xf32>, vector<2x128xf32> -> vector<2x128xf32>
    %c0_3 = arith.constant 0 : index
    %c0_4 = arith.constant 0 : index
    %3 = vector.load %arg2[%c0_3, %c0_4] : memref<1x128xf32, #tpu.memory_space<vmem>>, vector<1x128xf32>
    %4 = vector.broadcast %3 : vector<1x128xf32> to vector<2x128xf32>
    %5 = arith.addf %2, %4 : vector<2x128xf32>
    %cst_5 = arith.constant 0.000000e+00 : f32
    %6 = vector.broadcast %cst_5 : f32 to vector<2x128xf32>
    %7 = arith.cmpf oge, %5, %6 : vector<2x128xf32>
    %cst_6 = arith.constant 0.00999999977 : f32
    %8 = vector.broadcast %cst_6 : f32 to vector<2x128xf32>
    %9 = arith.mulf %8, %5 : vector<2x128xf32>
    %10 = arith.select %7, %5, %9 : vector<2x128xi1>, vector<2x128xf32>
    %11 = vector.extract_strided_slice %10 {offsets = [0, 0], sizes = [2, 64], strides = [1, 1]} : vector<2x128xf32> to vector<2x64xf32>
    %12 = vector.extract_strided_slice %10 {offsets = [0, 64], sizes = [2, 64], strides = [1, 1]} : vector<2x128xf32> to vector<2x64xf32>
    %c0_7 = arith.constant 0 : index
    %c0_8 = arith.constant 0 : index
    %c0_9 = arith.constant 0 : index
    %13 = vector.load %arg3[%c0_7, %c0_8, %c0_9] : memref<6x4x2xf32, #tpu.memory_space<vmem>>, vector<1x4x2xf32>
    %14 = vector.shape_cast %13 : vector<1x4x2xf32> to vector<4x2xf32>
    %cst_10 = arith.constant dense<0.000000e+00> : vector<4x64xf32>
    %15 = tpu.matmul %14, %11, %cst_10 {dimension_numbers = #tpu.dot_dimension_numbers<[1], [0], [0], [1], [0, 0, 1, 1], [], []>} : vector<4x2xf32>, vector<2x64xf32>, vector<4x64xf32> -> vector<4x64xf32>
    %c1 = arith.constant 1 : index
    %c0_11 = arith.constant 0 : index
    %c0_12 = arith.constant 0 : index
    %16 = vector.load %arg3[%c1, %c0_11, %c0_12] : memref<6x4x2xf32, #tpu.memory_space<vmem>>, vector<1x4x2xf32>
    %17 = vector.shape_cast %16 : vector<1x4x2xf32> to vector<4x2xf32>
    %cst_13 = arith.constant dense<0.000000e+00> : vector<4x64xf32>
    %18 = tpu.matmul %17, %12, %cst_13 {dimension_numbers = #tpu.dot_dimension_numbers<[1], [0], [0], [1], [0, 0, 1, 1], [], []>} : vector<4x2xf32>, vector<2x64xf32>, vector<4x64xf32> -> vector<4x64xf32>
    %19 = arith.addf %15, %18 : vector<4x64xf32>
    %c2 = arith.constant 2 : index
    %c0_14 = arith.constant 0 : index
    %c0_15 = arith.constant 0 : index
    %20 = vector.load %arg3[%c2, %c0_14, %c0_15] : memref<6x4x2xf32, #tpu.memory_space<vmem>>, vector<1x4x2xf32>
    %21 = vector.shape_cast %20 : vector<1x4x2xf32> to vector<4x2xf32>
    %cst_16 = arith.constant dense<0.000000e+00> : vector<4x64xf32>
    %22 = tpu.matmul %21, %11, %cst_16 {dimension_numbers = #tpu.dot_dimension_numbers<[1], [0], [0], [1], [0, 0, 1, 1], [], []>} : vector<4x2xf32>, vector<2x64xf32>, vector<4x64xf32> -> vector<4x64xf32>
    %c3 = arith.constant 3 : index
    %c0_17 = arith.constant 0 : index
    %c0_18 = arith.constant 0 : index
    %23 = vector.load %arg3[%c3, %c0_17, %c0_18] : memref<6x4x2xf32, #tpu.memory_space<vmem>>, vector<1x4x2xf32>
    %24 = vector.shape_cast %23 : vector<1x4x2xf32> to vector<4x2xf32>
    %cst_19 = arith.constant dense<0.000000e+00> : vector<4x64xf32>
    %25 = tpu.matmul %24, %12, %cst_19 {dimension_numbers = #tpu.dot_dimension_numbers<[1], [0], [0], [1], [0, 0, 1, 1], [], []>} : vector<4x2xf32>, vector<2x64xf32>, vector<4x64xf32> -> vector<4x64xf32>
    %26 = arith.addf %22, %25 : vector<4x64xf32>
    %c4 = arith.constant 4 : index
    %c0_20 = arith.constant 0 : index
    %c0_21 = arith.constant 0 : index
    %27 = vector.load %arg3[%c4, %c0_20, %c0_21] : memref<6x4x2xf32, #tpu.memory_space<vmem>>, vector<1x4x2xf32>
    %28 = vector.shape_cast %27 : vector<1x4x2xf32> to vector<4x2xf32>
    %cst_22 = arith.constant dense<0.000000e+00> : vector<4x64xf32>
    %29 = tpu.matmul %28, %11, %cst_22 {dimension_numbers = #tpu.dot_dimension_numbers<[1], [0], [0], [1], [0, 0, 1, 1], [], []>} : vector<4x2xf32>, vector<2x64xf32>, vector<4x64xf32> -> vector<4x64xf32>
    %c5 = arith.constant 5 : index
    %c0_23 = arith.constant 0 : index
    %c0_24 = arith.constant 0 : index
    %30 = vector.load %arg3[%c5, %c0_23, %c0_24] : memref<6x4x2xf32, #tpu.memory_space<vmem>>, vector<1x4x2xf32>
    %31 = vector.shape_cast %30 : vector<1x4x2xf32> to vector<4x2xf32>
    %cst_25 = arith.constant dense<0.000000e+00> : vector<4x64xf32>
    %32 = tpu.matmul %31, %12, %cst_25 {dimension_numbers = #tpu.dot_dimension_numbers<[1], [0], [0], [1], [0, 0, 1, 1], [], []>} : vector<4x2xf32>, vector<2x64xf32>, vector<4x64xf32> -> vector<4x64xf32>
    %33 = arith.addf %29, %32 : vector<4x64xf32>
    %34 = tpu.concatenate %19, %26, %33 in 1 : vector<4x64xf32>, vector<4x64xf32>, vector<4x64xf32> -> vector<4x192xf32>
    %c0_26 = arith.constant 0 : index
    %c0_27 = arith.constant 0 : index
    %35 = vector.load %arg4[%c0_26, %c0_27] : memref<192x128xf32, #tpu.memory_space<vmem>>, vector<192x128xf32>
    %cst_28 = arith.constant dense<0.000000e+00> : vector<4x128xf32>
    %36 = tpu.matmul %34, %35, %cst_28 {dimension_numbers = #tpu.dot_dimension_numbers<[1], [0], [0], [1], [0, 0, 1, 1], [], []>} : vector<4x192xf32>, vector<192x128xf32>, vector<4x128xf32> -> vector<4x128xf32>
    %c0_29 = arith.constant 0 : index
    %c0_30 = arith.constant 0 : index
    %37 = vector.load %arg5[%c0_29, %c0_30] : memref<1x128xf32, #tpu.memory_space<vmem>>, vector<1x128xf32>
    %38 = vector.broadcast %37 : vector<1x128xf32> to vector<4x128xf32>
    %39 = arith.addf %36, %38 : vector<4x128xf32>
    %cst_31 = arith.constant 0.000000e+00 : f32
    %40 = vector.broadcast %cst_31 : f32 to vector<4x128xf32>
    %41 = arith.cmpf oge, %39, %40 : vector<4x128xf32>
    %cst_32 = arith.constant 0.00999999977 : f32
    %42 = vector.broadcast %cst_32 : f32 to vector<4x128xf32>
    %43 = arith.mulf %42, %39 : vector<4x128xf32>
    %44 = arith.select %41, %39, %43 : vector<4x128xi1>, vector<4x128xf32>
    %45 = vector.extract_strided_slice %44 {offsets = [0, 0], sizes = [4, 64], strides = [1, 1]} : vector<4x128xf32> to vector<4x64xf32>
    %46 = vector.extract_strided_slice %44 {offsets = [0, 64], sizes = [4, 64], strides = [1, 1]} : vector<4x128xf32> to vector<4x64xf32>
    %c0_33 = arith.constant 0 : index
    %c0_34 = arith.constant 0 : index
    %c0_35 = arith.constant 0 : index
    %47 = vector.load %arg6[%c0_33, %c0_34, %c0_35] : memref<6x8x4xf32, #tpu.memory_space<vmem>>, vector<1x8x4xf32>
    %48 = vector.shape_cast %47 : vector<1x8x4xf32> to vector<8x4xf32>
    %cst_36 = arith.constant dense<0.000000e+00> : vector<8x64xf32>
    %49 = tpu.matmul %48, %45, %cst_36 {dimension_numbers = #tpu.dot_dimension_numbers<[1], [0], [0], [1], [0, 0, 1, 1], [], []>} : vector<8x4xf32>, vector<4x64xf32>, vector<8x64xf32> -> vector<8x64xf32>
    %c1_37 = arith.constant 1 : index
    %c0_38 = arith.constant 0 : index
    %c0_39 = arith.constant 0 : index
    %50 = vector.load %arg6[%c1_37, %c0_38, %c0_39] : memref<6x8x4xf32, #tpu.memory_space<vmem>>, vector<1x8x4xf32>
    %51 = vector.shape_cast %50 : vector<1x8x4xf32> to vector<8x4xf32>
    %cst_40 = arith.constant dense<0.000000e+00> : vector<8x64xf32>
    %52 = tpu.matmul %51, %46, %cst_40 {dimension_numbers = #tpu.dot_dimension_numbers<[1], [0], [0], [1], [0, 0, 1, 1], [], []>} : vector<8x4xf32>, vector<4x64xf32>, vector<8x64xf32> -> vector<8x64xf32>
    %53 = arith.addf %49, %52 : vector<8x64xf32>
    %c2_41 = arith.constant 2 : index
    %c0_42 = arith.constant 0 : index
    %c0_43 = arith.constant 0 : index
    %54 = vector.load %arg6[%c2_41, %c0_42, %c0_43] : memref<6x8x4xf32, #tpu.memory_space<vmem>>, vector<1x8x4xf32>
    %55 = vector.shape_cast %54 : vector<1x8x4xf32> to vector<8x4xf32>
    %cst_44 = arith.constant dense<0.000000e+00> : vector<8x64xf32>
    %56 = tpu.matmul %55, %45, %cst_44 {dimension_numbers = #tpu.dot_dimension_numbers<[1], [0], [0], [1], [0, 0, 1, 1], [], []>} : vector<8x4xf32>, vector<4x64xf32>, vector<8x64xf32> -> vector<8x64xf32>
    %c3_45 = arith.constant 3 : index
    %c0_46 = arith.constant 0 : index
    %c0_47 = arith.constant 0 : index
    %57 = vector.load %arg6[%c3_45, %c0_46, %c0_47] : memref<6x8x4xf32, #tpu.memory_space<vmem>>, vector<1x8x4xf32>
    %58 = vector.shape_cast %57 : vector<1x8x4xf32> to vector<8x4xf32>
    %cst_48 = arith.constant dense<0.000000e+00> : vector<8x64xf32>
    %59 = tpu.matmul %58, %46, %cst_48 {dimension_numbers = #tpu.dot_dimension_numbers<[1], [0], [0], [1], [0, 0, 1, 1], [], []>} : vector<8x4xf32>, vector<4x64xf32>, vector<8x64xf32> -> vector<8x64xf32>
    %60 = arith.addf %56, %59 : vector<8x64xf32>
    %c4_49 = arith.constant 4 : index
    %c0_50 = arith.constant 0 : index
    %c0_51 = arith.constant 0 : index
    %61 = vector.load %arg6[%c4_49, %c0_50, %c0_51] : memref<6x8x4xf32, #tpu.memory_space<vmem>>, vector<1x8x4xf32>
    %62 = vector.shape_cast %61 : vector<1x8x4xf32> to vector<8x4xf32>
    %cst_52 = arith.constant dense<0.000000e+00> : vector<8x64xf32>
    %63 = tpu.matmul %62, %45, %cst_52 {dimension_numbers = #tpu.dot_dimension_numbers<[1], [0], [0], [1], [0, 0, 1, 1], [], []>} : vector<8x4xf32>, vector<4x64xf32>, vector<8x64xf32> -> vector<8x64xf32>
    %c5_53 = arith.constant 5 : index
    %c0_54 = arith.constant 0 : index
    %c0_55 = arith.constant 0 : index
    %64 = vector.load %arg6[%c5_53, %c0_54, %c0_55] : memref<6x8x4xf32, #tpu.memory_space<vmem>>, vector<1x8x4xf32>
    %65 = vector.shape_cast %64 : vector<1x8x4xf32> to vector<8x4xf32>
    %cst_56 = arith.constant dense<0.000000e+00> : vector<8x64xf32>
    %66 = tpu.matmul %65, %46, %cst_56 {dimension_numbers = #tpu.dot_dimension_numbers<[1], [0], [0], [1], [0, 0, 1, 1], [], []>} : vector<8x4xf32>, vector<4x64xf32>, vector<8x64xf32> -> vector<8x64xf32>
    %67 = arith.addf %63, %66 : vector<8x64xf32>
    %68 = tpu.concatenate %53, %60, %67 in 1 : vector<8x64xf32>, vector<8x64xf32>, vector<8x64xf32> -> vector<8x192xf32>
    %c0_57 = arith.constant 0 : index
    %c0_58 = arith.constant 0 : index
    %69 = vector.load %arg7[%c0_57, %c0_58] : memref<192x128xf32, #tpu.memory_space<vmem>>, vector<192x128xf32>
    %cst_59 = arith.constant dense<0.000000e+00> : vector<8x128xf32>
    %70 = tpu.matmul %68, %69, %cst_59 {dimension_numbers = #tpu.dot_dimension_numbers<[1], [0], [0], [1], [0, 0, 1, 1], [], []>} : vector<8x192xf32>, vector<192x128xf32>, vector<8x128xf32> -> vector<8x128xf32>
    %c0_60 = arith.constant 0 : index
    %c0_61 = arith.constant 0 : index
    %71 = vector.load %arg8[%c0_60, %c0_61] : memref<1x128xf32, #tpu.memory_space<vmem>>, vector<1x128xf32>
    %72 = vector.broadcast %71 : vector<1x128xf32> to vector<8x128xf32>
    %73 = arith.addf %70, %72 : vector<8x128xf32>
    %cst_62 = arith.constant 0.000000e+00 : f32
    %74 = vector.broadcast %cst_62 : f32 to vector<8x128xf32>
    %75 = arith.cmpf oge, %73, %74 : vector<8x128xf32>
    %cst_63 = arith.constant 0.00999999977 : f32
    %76 = vector.broadcast %cst_63 : f32 to vector<8x128xf32>
    %77 = arith.mulf %76, %73 : vector<8x128xf32>
    %78 = arith.select %75, %73, %77 : vector<8x128xi1>, vector<8x128xf32>
    %79 = vector.extract_strided_slice %78 {offsets = [0, 0], sizes = [8, 64], strides = [1, 1]} : vector<8x128xf32> to vector<8x64xf32>
    %80 = vector.extract_strided_slice %78 {offsets = [0, 64], sizes = [8, 64], strides = [1, 1]} : vector<8x128xf32> to vector<8x64xf32>
    %c0_64 = arith.constant 0 : index
    %c0_65 = arith.constant 0 : index
    %c0_66 = arith.constant 0 : index
    %81 = vector.load %arg9[%c0_64, %c0_65, %c0_66] : memref<6x16x8xf32, #tpu.memory_space<vmem>>, vector<1x16x8xf32>
    %82 = vector.shape_cast %81 : vector<1x16x8xf32> to vector<16x8xf32>
    %cst_67 = arith.constant dense<0.000000e+00> : vector<16x64xf32>
    %83 = tpu.matmul %82, %79, %cst_67 {dimension_numbers = #tpu.dot_dimension_numbers<[1], [0], [0], [1], [0, 0, 1, 1], [], []>} : vector<16x8xf32>, vector<8x64xf32>, vector<16x64xf32> -> vector<16x64xf32>
    %c1_68 = arith.constant 1 : index
    %c0_69 = arith.constant 0 : index
    %c0_70 = arith.constant 0 : index
    %84 = vector.load %arg9[%c1_68, %c0_69, %c0_70] : memref<6x16x8xf32, #tpu.memory_space<vmem>>, vector<1x16x8xf32>
    %85 = vector.shape_cast %84 : vector<1x16x8xf32> to vector<16x8xf32>
    %cst_71 = arith.constant dense<0.000000e+00> : vector<16x64xf32>
    %86 = tpu.matmul %85, %80, %cst_71 {dimension_numbers = #tpu.dot_dimension_numbers<[1], [0], [0], [1], [0, 0, 1, 1], [], []>} : vector<16x8xf32>, vector<8x64xf32>, vector<16x64xf32> -> vector<16x64xf32>
    %87 = arith.addf %83, %86 : vector<16x64xf32>
    %c2_72 = arith.constant 2 : index
    %c0_73 = arith.constant 0 : index
    %c0_74 = arith.constant 0 : index
    %88 = vector.load %arg9[%c2_72, %c0_73, %c0_74] : memref<6x16x8xf32, #tpu.memory_space<vmem>>, vector<1x16x8xf32>
    %89 = vector.shape_cast %88 : vector<1x16x8xf32> to vector<16x8xf32>
    %cst_75 = arith.constant dense<0.000000e+00> : vector<16x64xf32>
    %90 = tpu.matmul %89, %79, %cst_75 {dimension_numbers = #tpu.dot_dimension_numbers<[1], [0], [0], [1], [0, 0, 1, 1], [], []>} : vector<16x8xf32>, vector<8x64xf32>, vector<16x64xf32> -> vector<16x64xf32>
    %c3_76 = arith.constant 3 : index
    %c0_77 = arith.constant 0 : index
    %c0_78 = arith.constant 0 : index
    %91 = vector.load %arg9[%c3_76, %c0_77, %c0_78] : memref<6x16x8xf32, #tpu.memory_space<vmem>>, vector<1x16x8xf32>
    %92 = vector.shape_cast %91 : vector<1x16x8xf32> to vector<16x8xf32>
    %cst_79 = arith.constant dense<0.000000e+00> : vector<16x64xf32>
    %93 = tpu.matmul %92, %80, %cst_79 {dimension_numbers = #tpu.dot_dimension_numbers<[1], [0], [0], [1], [0, 0, 1, 1], [], []>} : vector<16x8xf32>, vector<8x64xf32>, vector<16x64xf32> -> vector<16x64xf32>
    %94 = arith.addf %90, %93 : vector<16x64xf32>
    %c4_80 = arith.constant 4 : index
    %c0_81 = arith.constant 0 : index
    %c0_82 = arith.constant 0 : index
    %95 = vector.load %arg9[%c4_80, %c0_81, %c0_82] : memref<6x16x8xf32, #tpu.memory_space<vmem>>, vector<1x16x8xf32>
    %96 = vector.shape_cast %95 : vector<1x16x8xf32> to vector<16x8xf32>
    %cst_83 = arith.constant dense<0.000000e+00> : vector<16x64xf32>
    %97 = tpu.matmul %96, %79, %cst_83 {dimension_numbers = #tpu.dot_dimension_numbers<[1], [0], [0], [1], [0, 0, 1, 1], [], []>} : vector<16x8xf32>, vector<8x64xf32>, vector<16x64xf32> -> vector<16x64xf32>
    %c5_84 = arith.constant 5 : index
    %c0_85 = arith.constant 0 : index
    %c0_86 = arith.constant 0 : index
    %98 = vector.load %arg9[%c5_84, %c0_85, %c0_86] : memref<6x16x8xf32, #tpu.memory_space<vmem>>, vector<1x16x8xf32>
    %99 = vector.shape_cast %98 : vector<1x16x8xf32> to vector<16x8xf32>
    %cst_87 = arith.constant dense<0.000000e+00> : vector<16x64xf32>
    %100 = tpu.matmul %99, %80, %cst_87 {dimension_numbers = #tpu.dot_dimension_numbers<[1], [0], [0], [1], [0, 0, 1, 1], [], []>} : vector<16x8xf32>, vector<8x64xf32>, vector<16x64xf32> -> vector<16x64xf32>
    %101 = arith.addf %97, %100 : vector<16x64xf32>
    %102 = tpu.concatenate %87, %94, %101 in 1 : vector<16x64xf32>, vector<16x64xf32>, vector<16x64xf32> -> vector<16x192xf32>
    %c0_88 = arith.constant 0 : index
    %c0_89 = arith.constant 0 : index
    %103 = vector.load %arg10[%c0_88, %c0_89] : memref<192x128xf32, #tpu.memory_space<vmem>>, vector<192x128xf32>
    %cst_90 = arith.constant dense<0.000000e+00> : vector<16x128xf32>
    %104 = tpu.matmul %102, %103, %cst_90 {dimension_numbers = #tpu.dot_dimension_numbers<[1], [0], [0], [1], [0, 0, 1, 1], [], []>} : vector<16x192xf32>, vector<192x128xf32>, vector<16x128xf32> -> vector<16x128xf32>
    %c0_91 = arith.constant 0 : index
    %c0_92 = arith.constant 0 : index
    %105 = vector.load %arg11[%c0_91, %c0_92] : memref<1x128xf32, #tpu.memory_space<vmem>>, vector<1x128xf32>
    %106 = vector.broadcast %105 : vector<1x128xf32> to vector<16x128xf32>
    %107 = arith.addf %104, %106 : vector<16x128xf32>
    %cst_93 = arith.constant 0.000000e+00 : f32
    %108 = vector.broadcast %cst_93 : f32 to vector<16x128xf32>
    %109 = arith.cmpf oge, %107, %108 : vector<16x128xf32>
    %cst_94 = arith.constant 0.00999999977 : f32
    %110 = vector.broadcast %cst_94 : f32 to vector<16x128xf32>
    %111 = arith.mulf %110, %107 : vector<16x128xf32>
    %112 = arith.select %109, %107, %111 : vector<16x128xi1>, vector<16x128xf32>
    %113 = vector.extract_strided_slice %112 {offsets = [0, 0], sizes = [16, 64], strides = [1, 1]} : vector<16x128xf32> to vector<16x64xf32>
    %114 = vector.extract_strided_slice %112 {offsets = [0, 64], sizes = [16, 64], strides = [1, 1]} : vector<16x128xf32> to vector<16x64xf32>
    %c0_95 = arith.constant 0 : index
    %c0_96 = arith.constant 0 : index
    %c0_97 = arith.constant 0 : index
    %115 = vector.load %arg12[%c0_95, %c0_96, %c0_97] : memref<6x32x16xf32, #tpu.memory_space<vmem>>, vector<1x32x16xf32>
    %116 = vector.shape_cast %115 : vector<1x32x16xf32> to vector<32x16xf32>
    %cst_98 = arith.constant dense<0.000000e+00> : vector<32x64xf32>
    %117 = tpu.matmul %116, %113, %cst_98 {dimension_numbers = #tpu.dot_dimension_numbers<[1], [0], [0], [1], [0, 0, 1, 1], [], []>} : vector<32x16xf32>, vector<16x64xf32>, vector<32x64xf32> -> vector<32x64xf32>
    %c1_99 = arith.constant 1 : index
    %c0_100 = arith.constant 0 : index
    %c0_101 = arith.constant 0 : index
    %118 = vector.load %arg12[%c1_99, %c0_100, %c0_101] : memref<6x32x16xf32, #tpu.memory_space<vmem>>, vector<1x32x16xf32>
    %119 = vector.shape_cast %118 : vector<1x32x16xf32> to vector<32x16xf32>
    %cst_102 = arith.constant dense<0.000000e+00> : vector<32x64xf32>
    %120 = tpu.matmul %119, %114, %cst_102 {dimension_numbers = #tpu.dot_dimension_numbers<[1], [0], [0], [1], [0, 0, 1, 1], [], []>} : vector<32x16xf32>, vector<16x64xf32>, vector<32x64xf32> -> vector<32x64xf32>
    %121 = arith.addf %117, %120 : vector<32x64xf32>
    %c2_103 = arith.constant 2 : index
    %c0_104 = arith.constant 0 : index
    %c0_105 = arith.constant 0 : index
    %122 = vector.load %arg12[%c2_103, %c0_104, %c0_105] : memref<6x32x16xf32, #tpu.memory_space<vmem>>, vector<1x32x16xf32>
    %123 = vector.shape_cast %122 : vector<1x32x16xf32> to vector<32x16xf32>
    %cst_106 = arith.constant dense<0.000000e+00> : vector<32x64xf32>
    %124 = tpu.matmul %123, %113, %cst_106 {dimension_numbers = #tpu.dot_dimension_numbers<[1], [0], [0], [1], [0, 0, 1, 1], [], []>} : vector<32x16xf32>, vector<16x64xf32>, vector<32x64xf32> -> vector<32x64xf32>
    %c3_107 = arith.constant 3 : index
    %c0_108 = arith.constant 0 : index
    %c0_109 = arith.constant 0 : index
    %125 = vector.load %arg12[%c3_107, %c0_108, %c0_109] : memref<6x32x16xf32, #tpu.memory_space<vmem>>, vector<1x32x16xf32>
    %126 = vector.shape_cast %125 : vector<1x32x16xf32> to vector<32x16xf32>
    %cst_110 = arith.constant dense<0.000000e+00> : vector<32x64xf32>
    %127 = tpu.matmul %126, %114, %cst_110 {dimension_numbers = #tpu.dot_dimension_numbers<[1], [0], [0], [1], [0, 0, 1, 1], [], []>} : vector<32x16xf32>, vector<16x64xf32>, vector<32x64xf32> -> vector<32x64xf32>
    %128 = arith.addf %124, %127 : vector<32x64xf32>
    %c4_111 = arith.constant 4 : index
    %c0_112 = arith.constant 0 : index
    %c0_113 = arith.constant 0 : index
    %129 = vector.load %arg12[%c4_111, %c0_112, %c0_113] : memref<6x32x16xf32, #tpu.memory_space<vmem>>, vector<1x32x16xf32>
    %130 = vector.shape_cast %129 : vector<1x32x16xf32> to vector<32x16xf32>
    %cst_114 = arith.constant dense<0.000000e+00> : vector<32x64xf32>
    %131 = tpu.matmul %130, %113, %cst_114 {dimension_numbers = #tpu.dot_dimension_numbers<[1], [0], [0], [1], [0, 0, 1, 1], [], []>} : vector<32x16xf32>, vector<16x64xf32>, vector<32x64xf32> -> vector<32x64xf32>
    %c5_115 = arith.constant 5 : index
    %c0_116 = arith.constant 0 : index
    %c0_117 = arith.constant 0 : index
    %132 = vector.load %arg12[%c5_115, %c0_116, %c0_117] : memref<6x32x16xf32, #tpu.memory_space<vmem>>, vector<1x32x16xf32>
    %133 = vector.shape_cast %132 : vector<1x32x16xf32> to vector<32x16xf32>
    %cst_118 = arith.constant dense<0.000000e+00> : vector<32x64xf32>
    %134 = tpu.matmul %133, %114, %cst_118 {dimension_numbers = #tpu.dot_dimension_numbers<[1], [0], [0], [1], [0, 0, 1, 1], [], []>} : vector<32x16xf32>, vector<16x64xf32>, vector<32x64xf32> -> vector<32x64xf32>
    %135 = arith.addf %131, %134 : vector<32x64xf32>
    %136 = tpu.concatenate %121, %128, %135 in 1 : vector<32x64xf32>, vector<32x64xf32>, vector<32x64xf32> -> vector<32x192xf32>
    %c0_119 = arith.constant 0 : index
    %c0_120 = arith.constant 0 : index
    %137 = vector.load %arg13[%c0_119, %c0_120] : memref<192x256xf32, #tpu.memory_space<vmem>>, vector<192x256xf32>
    %cst_121 = arith.constant dense<0.000000e+00> : vector<32x256xf32>
    %138 = tpu.matmul %136, %137, %cst_121 {dimension_numbers = #tpu.dot_dimension_numbers<[1], [0], [0], [1], [0, 0, 1, 1], [], []>} : vector<32x192xf32>, vector<192x256xf32>, vector<32x256xf32> -> vector<32x256xf32>
    %c0_122 = arith.constant 0 : index
    %c0_123 = arith.constant 0 : index
    %139 = vector.load %arg14[%c0_122, %c0_123] : memref<1x256xf32, #tpu.memory_space<vmem>>, vector<1x256xf32>
    %140 = vector.broadcast %139 : vector<1x256xf32> to vector<32x256xf32>
    %141 = arith.addf %138, %140 : vector<32x256xf32>
    %cst_124 = arith.constant 0.000000e+00 : f32
    %142 = vector.broadcast %cst_124 : f32 to vector<32x256xf32>
    %143 = arith.cmpf oge, %141, %142 : vector<32x256xf32>
    %cst_125 = arith.constant 0.00999999977 : f32
    %144 = vector.broadcast %cst_125 : f32 to vector<32x256xf32>
    %145 = arith.mulf %144, %141 : vector<32x256xf32>
    %146 = arith.select %143, %141, %145 : vector<32x256xi1>, vector<32x256xf32>
    %c0_126 = arith.constant 0 : index
    %c0_127 = arith.constant 0 : index
    %147 = vector.load %arg15[%c0_126, %c0_127] : memref<256x128xf32, #tpu.memory_space<vmem>>, vector<256x128xf32>
    %cst_128 = arith.constant dense<0.000000e+00> : vector<32x128xf32>
    %148 = tpu.matmul %146, %147, %cst_128 {dimension_numbers = #tpu.dot_dimension_numbers<[1], [0], [0], [1], [0, 0, 1, 1], [], []>} : vector<32x256xf32>, vector<256x128xf32>, vector<32x128xf32> -> vector<32x128xf32>
    %c0_129 = arith.constant 0 : index
    %c0_130 = arith.constant 0 : index
    %149 = vector.load %arg16[%c0_129, %c0_130] : memref<1x128xf32, #tpu.memory_space<vmem>>, vector<1x128xf32>
    %150 = vector.broadcast %149 : vector<1x128xf32> to vector<32x128xf32>
    %151 = arith.addf %148, %150 : vector<32x128xf32>
    %c0_131 = arith.constant 0 : index
    %c0_132 = arith.constant 0 : index
    %152 = vector.load %arg17[%c0_131, %c0_132] : memref<32x128xf32, #tpu.memory_space<vmem>>, vector<32x128xf32>
    tpu.vector_store %arg17[%c0_131, %c0_132], %151 {strides = array<i32>} : memref<32x128xf32, #tpu.memory_space<vmem>>, vector<32x128xf32>,
    return
  }
}

</mosaic_0001>

<llo_original>
// kernel: decoder_forward.1
$region0: #{decoder_forward.1}
  #allocation0 [shape = 'u32[]', space=smem, size = 0x4, offset = 0x4, fixed_abs, tag = 'smem constant byte address 0x4 - core index']
  #allocation1 [shape = 'u32[144,128]{1,0:T(1,128)}', space=vmem, size = 0x12000, scoped, tag = 'internal scratch']
  %s0 = inlined_call_operand.vmem [shape: f32[2,64], index: 0, kind: input, shape index: {}]
  %s1 = inlined_call_operand.vmem [shape: f32[64,128], index: 1, kind: input, shape index: {}]
  %s2 = inlined_call_operand.vmem [shape: f32[1,128], index: 2, kind: input, shape index: {}]
  %s3 = inlined_call_operand.vmem [shape: f32[6,4,2], index: 3, kind: input, shape index: {}]
  %s4 = inlined_call_operand.hbm [shape: f32[192,128], index: 4, kind: input, shape index: {}]
  %s5 = inlined_call_operand.vmem [shape: f32[1,128], index: 5, kind: input, shape index: {}]
  %s6 = inlined_call_operand.vmem [shape: f32[6,8,4], index: 6, kind: input, shape index: {}]
  %s7 = inlined_call_operand.hbm [shape: f32[192,128], index: 7, kind: input, shape index: {}]
  %s8 = inlined_call_operand.vmem [shape: f32[1,128], index: 8, kind: input, shape index: {}]
  %s9 = inlined_call_operand.vmem [shape: f32[6,16,8], index: 9, kind: input, shape index: {}]
  %s10 = inlined_call_operand.hbm [shape: f32[192,128], index: 10, kind: input, shape index: {}]
  %s11 = inlined_call_operand.vmem [shape: f32[1,128], index: 11, kind: input, shape index: {}]
  %s12 = inlined_call_operand.vmem [shape: f32[6,32,16], index: 12, kind: input, shape index: {}]
  %s13 = inlined_call_operand.vmem [shape: f32[192,256], index: 13, kind: input, shape index: {}]
  %s14 = inlined_call_operand.vmem [shape: f32[1,256], index: 14, kind: input, shape index: {}]
  %s15 = inlined_call_operand.hbm [shape: f32[256,128], index: 15, kind: input, shape index: {}]
  %s16 = inlined_call_operand.vmem [shape: f32[1,128], index: 16, kind: input, shape index: {}]
  %s17 = inlined_call_operand.vmem [shape: f32[32,128], index: 17, kind: output, shape index: {}]
  %s18 = sld [smem:[#allocation0]]
  $region94: #{decoder_forward.1} parent=0
    _
  %s20 = ssub.s32 1, %s18
  %s21 = scalar_select 0, %s20, %s18
  $region1: #{decoder_forward.1} parent=0
    #allocation2 [shape = 'u8[98304]{0}', space=vmem, size = 0x18000, scoped, tag = 'input window, operand 4, single buffered']
    #allocation3 [shape = 's32[1]{0}', space=sflag, size = 0x4, scoped, tag = 'scoped memory for decoder_forward.1']
    #allocation4 [shape = 'u8[98304]{0}', space=vmem, size = 0x18000, scoped, tag = 'input window, operand 7, single buffered']
    #allocation5 [shape = 's32[1]{0}', space=sflag, size = 0x4, scoped, tag = 'scoped memory for decoder_forward.1']
    #allocation6 [shape = 'u8[98304]{0}', space=vmem, size = 0x18000, scoped, tag = 'input window, operand 10, single buffered']
    #allocation7 [shape = 'u8[131072]{0}', space=vmem, size = 0x20000, scoped, tag = 'input window, operand 15, single buffered']
    #allocation8 [shape = 's32[1]{0}', space=sflag, size = 0x4, scoped, tag = 'scoped memory for decoder_forward.1']
    %22 = vsyncpa [#allocation3], 0
    %23 = vsyncpa [#allocation5], 0
    %24 = vsyncpa [#allocation8], 0
    // Predicated region
    $region2: #{decoder_forward.1} parent=1 // pred_check
      _
    $region3: #{decoder_forward.1} parent=1 // pred_check_branch
      %26 = sbr.rel (0) target = $region5
    $region4: #{decoder_forward.1} parent=1 // pred_region
      _
    $region5: #{decoder_forward.1} parent=1 // pred_fallthru
      _
    // Predicated region
    $region6: #{decoder_forward.1} parent=1 // pred_check
      _
    $region7: #{decoder_forward.1} parent=1 // pred_check_branch
      %28 = sbr.rel (0) target = $region9
    $region8: #{decoder_forward.1} parent=1 // pred_region
      _
    $region9: #{decoder_forward.1} parent=1 // pred_fallthru
      _
    // Predicated region
    $region10: #{decoder_forward.1} parent=1 // pred_check
      _
    $region11: #{decoder_forward.1} parent=1 // pred_check_branch
      %30 = sbr.rel (0) target = $region13
    $region12: #{decoder_forward.1} parent=1 // pred_region
      _
    $region13: #{decoder_forward.1} parent=1 // pred_fallthru
      _
    // Predicated region
    $region14: #{decoder_forward.1} parent=1 // pred_check
      _
    $region15: #{decoder_forward.1} parent=1 // pred_check_branch
      %32 = sbr.rel (0) target = $region17
    $region16: #{decoder_forward.1} parent=1 // pred_region
      _
    $region17: #{decoder_forward.1} parent=1 // pred_fallthru
      _
    // Predicated region
    $region18: #{decoder_forward.1} parent=1 // pred_check
      _
    $region19: #{decoder_forward.1} parent=1 // pred_check_branch
      %34 = sbr.rel (0) target = $region21
    $region20: #{decoder_forward.1} parent=1 // pred_region
      %s36 = ssub.s32 3072, 3072
      %37 = vsyncadd [#allocation3], %s36
      %s38 = sshll.u32 [#allocation2], 4
      %s39 = int_to_ptr.vmem [resolvable:$true] %s38
      %44 = dma.hbm_to_vmem [thread:$0]  %s4, 3072, %s39, [#allocation3], 128, 128, 8
    $region21: #{decoder_forward.1} parent=1 // pred_fallthru
      _
    // Predicated region
    $region22: #{decoder_forward.1} parent=1 // pred_check
      _
    $region23: #{decoder_forward.1} parent=1 // pred_check_branch
      %46 = sbr.rel (0) target = $region25
    $region24: #{decoder_forward.1} parent=1 // pred_region
      _
    $region25: #{decoder_forward.1} parent=1 // pred_fallthru
      _
    // Predicated region
    $region26: #{decoder_forward.1} parent=1 // pred_check
      _
    $region27: #{decoder_forward.1} parent=1 // pred_check_branch
      %48 = sbr.rel (0) target = $region29
    $region28: #{decoder_forward.1} parent=1 // pred_region
      _
    $region29: #{decoder_forward.1} parent=1 // pred_fallthru
      _
    // Predicated region
    $region30: #{decoder_forward.1} parent=1 // pred_check
      _
    $region31: #{decoder_forward.1} parent=1 // pred_check_branch
      %50 = sbr.rel (0) target = $region33
    $region32: #{decoder_forward.1} parent=1 // pred_region
      %s52 = ssub.s32 3072, 3072
      %53 = vsyncadd [#allocation5], %s52
      %s54 = sshll.u32 [#allocation4], 4
      %s55 = int_to_ptr.vmem [resolvable:$true] %s54
      %60 = dma.hbm_to_vmem [thread:$0]  %s7, 3072, %s55, [#allocation5], 128, 128, 8
    $region33: #{decoder_forward.1} parent=1 // pred_fallthru
      _
    // Predicated region
    $region34: #{decoder_forward.1} parent=1 // pred_check
      _
    $region35: #{decoder_forward.1} parent=1 // pred_check_branch
      %62 = sbr.rel (0) target = $region37
    $region36: #{decoder_forward.1} parent=1 // pred_region
      _
    $region37: #{decoder_forward.1} parent=1 // pred_fallthru
      _
    // Predicated region
    $region38: #{decoder_forward.1} parent=1 // pred_check
      _
    $region39: #{decoder_forward.1} parent=1 // pred_check_branch
      %64 = sbr.rel (0) target = $region41
    $region40: #{decoder_forward.1} parent=1 // pred_region
      _
    $region41: #{decoder_forward.1} parent=1 // pred_fallthru
      _
    // Predicated region
    $region42: #{decoder_forward.1} parent=1 // pred_check
      _
    $region43: #{decoder_forward.1} parent=1 // pred_check_branch
      %66 = sbr.rel (0) target = $region45
    $region44: #{decoder_forward.1} parent=1 // pred_region
      %s68 = ssub.s32 3072, 3072
      %69 = vsyncadd [#allocation5], %s68
      %s70 = sshll.u32 [#allocation6], 4
      %s71 = int_to_ptr.vmem [resolvable:$true] %s70
      %76 = dma.hbm_to_vmem [thread:$0]  %s10, 3072, %s71, [#allocation5], 128, 128, 8
    $region45: #{decoder_forward.1} parent=1 // pred_fallthru
      _
    // Predicated region
    $region46: #{decoder_forward.1} parent=1 // pred_check
      _
    $region47: #{decoder_forward.1} parent=1 // pred_check_branch
      %78 = sbr.rel (0) target = $region49
    $region48: #{decoder_forward.1} parent=1 // pred_region
      _
    $region49: #{decoder_forward.1} parent=1 // pred_fallthru
      _
    // Predicated region
    $region50: #{decoder_forward.1} parent=1 // pred_check
      _
    $region51: #{decoder_forward.1} parent=1 // pred_check_branch
      %80 = sbr.rel (0) target = $region53
    $region52: #{decoder_forward.1} parent=1 // pred_region
      _
    $region53: #{decoder_forward.1} parent=1 // pred_fallthru
      _
    // Predicated region
    $region54: #{decoder_forward.1} parent=1 // pred_check
      _
    $region55: #{decoder_forward.1} parent=1 // pred_check_branch
      %82 = sbr.rel (0) target = $region57
    $region56: #{decoder_forward.1} parent=1 // pred_region
      _
    $region57: #{decoder_forward.1} parent=1 // pred_fallthru
      _
    // Predicated region
    $region58: #{decoder_forward.1} parent=1 // pred_check
      _
    $region59: #{decoder_forward.1} parent=1 // pred_check_branch
      %84 = sbr.rel (0) target = $region61
    $region60: #{decoder_forward.1} parent=1 // pred_region
      _
    $region61: #{decoder_forward.1} parent=1 // pred_fallthru
      _
    // Predicated region
    $region62: #{decoder_forward.1} parent=1 // pred_check
      _
    $region63: #{decoder_forward.1} parent=1 // pred_check_branch
      %86 = sbr.rel (0) target = $region65
    $region64: #{decoder_forward.1} parent=1 // pred_region
      %s88 = ssub.s32 4096, 4096
      %89 = vsyncadd [#allocation8], %s88
      %s90 = sshll.u32 [#allocation7], 4
      %s91 = int_to_ptr.vmem [resolvable:$true] %s90
      %96 = dma.hbm_to_vmem [thread:$0]  %s15, 4096, %s91, [#allocation8], 128, 128, 8
    $region65: #{decoder_forward.1} parent=1 // pred_fallthru
      _
    // Predicated region
    $region66: #{decoder_forward.1} parent=1 // pred_check
      _
    $region67: #{decoder_forward.1} parent=1 // pred_check_branch
      %98 = sbr.rel (0) target = $region69
    $region68: #{decoder_forward.1} parent=1 // pred_region
      _
    $region69: #{decoder_forward.1} parent=1 // pred_fallthru
      _
    // Predicated region
    $region70: #{decoder_forward.1} parent=1 // pred_check
      _
    $region71: #{decoder_forward.1} parent=1 // pred_check_branch
      %100 = sbr.rel (0) target = $region73
    $region72: #{decoder_forward.1} parent=1 // pred_region
      %101 = dma.done [#allocation3], 3072
    $region73: #{decoder_forward.1} parent=1 // pred_fallthru
      _
    // Predicated region
    $region74: #{decoder_forward.1} parent=1 // pred_check
      _
    $region75: #{decoder_forward.1} parent=1 // pred_check_branch
      %103 = sbr.rel (0) target = $region77
    $region76: #{decoder_forward.1} parent=1 // pred_region
      %104 = dma.done [#allocation5], 3072
    $region77: #{decoder_forward.1} parent=1 // pred_fallthru
      _
    // Predicated region
    $region78: #{decoder_forward.1} parent=1 // pred_check
      _
    $region79: #{decoder_forward.1} parent=1 // pred_check_branch
      %106 = sbr.rel (0) target = $region81
    $region80: #{decoder_forward.1} parent=1 // pred_region
      %107 = dma.done [#allocation5], 3072
    $region81: #{decoder_forward.1} parent=1 // pred_fallthru
      _
    // Predicated region
    $region82: #{decoder_forward.1} parent=1 // pred_check
      _
    $region83: #{decoder_forward.1} parent=1 // pred_check_branch
      %109 = sbr.rel (0) target = $region85
    $region84: #{decoder_forward.1} parent=1 // pred_region
      %110 = dma.done [#allocation8], 4096
    $region85: #{decoder_forward.1} parent=1 // pred_fallthru
      _
    %v111 = vld [vmem:[%s0] sm:$0x3]
    %v112 = vld [vmem:[%s1] sm:$0xff]
    %v113 = vld [vmem:[%s1 + $0x8] sm:$0xff]
    %v114 = vld [vmem:[%s1 + $0x10] sm:$0xff]
    %v115 = vld [vmem:[%s1 + $0x18] sm:$0xff]
    %v116 = vld [vmem:[%s1 + $0x20] sm:$0xff]
    %v117 = vld [vmem:[%s1 + $0x28] sm:$0xff]
    %v118 = vld [vmem:[%s1 + $0x30] sm:$0xff]
    %v119 = vld [vmem:[%s1 + $0x38] sm:$0xff]
    %v120 = vld [vmem:[%s2] sm:$0x1]
    %v122 = vlaneseq
    %v123 = vshrl.u32 %v122, 7
    %v124 = vsub.s32 0, %v123
    %v125 = vrot.slane %v120, %v124
    %vm127 = vcmask 523264
    %v129 = vsel %vm127, %v111, 0
    %131 = vmatprep.subr.mxu0 0.0
    %132 = vmatpush1.msra.mxu0 0.0
    %133 = vmatprep.subr.mxu0 0.0
    %134 = vmatpush1.msra.mxu0 0.0
    %135 = vmatprep.subr.mxu0 0.0
    %136 = vmatpush1.msra.mxu0 0.0
    %137 = vmatprep.subr.mxu0 0.0
    %138 = vmatpush1.msra.mxu0 0.0
    %139 = vmatprep.subr.mxu0 0.0
    %140 = vmatpush1.msra.mxu0 0.0
    %141 = vmatprep.subr.mxu0 0.0
    %142 = vmatpush1.msra.mxu0 0.0
    %143 = vmatprep.subr.mxu0 0.0
    %144 = vmatpush1.msra.mxu0 0.0
    %145 = vmatprep.subr.mxu0 0.0
    %146 = vmatpush1.msra.mxu0 0.0
    %147 = vmatprep.subr.mxu0 0.0
    %148 = vmatpush1.msra.mxu0 %v119
    %149 = vmatprep.subr.mxu0 0.0
    %150 = vmatpush1.msra.mxu0 %v118
    %151 = vmatprep.subr.mxu0 0.0
    %152 = vmatpush1.msra.mxu0 %v117
    %153 = vmatprep.subr.mxu0 0.0
    %154 = vmatpush1.msra.mxu0 %v116
    %155 = vmatprep.subr.mxu0 0.0
    %156 = vmatpush1.msra.mxu0 %v115
    %157 = vmatprep.subr.mxu0 0.0
    %158 = vmatpush1.msra.mxu0 %v114
    %159 = vmatprep.subr.mxu0 0.0
    %160 = vmatpush1.msra.mxu0 %v113
    %161 = vmatprep.subr.mxu0 0.0
    %162 = vmatpush1.msra.mxu0 %v112
    %163 = vmatprep.subr.mxu0 0.0
    %164 = vmatpush2.msra.mxu0 0.0
    %165 = vmatprep.subr.mxu0 0.0
    %166 = vmatpush2.msra.mxu0 0.0
    %167 = vmatprep.subr.mxu0 0.0
    %168 = vmatpush2.msra.mxu0 0.0
    %169 = vmatprep.subr.mxu0 0.0
    %170 = vmatpush2.msra.mxu0 0.0
    %171 = vmatprep.subr.mxu0 0.0
    %172 = vmatpush2.msra.mxu0 0.0
    %173 = vmatprep.subr.mxu0 0.0
    %174 = vmatpush2.msra.mxu0 0.0
    %175 = vmatprep.subr.mxu0 0.0
    %176 = vmatpush2.msra.mxu0 0.0
    %177 = vmatprep.subr.mxu0 0.0
    %178 = vmatpush2.msra.mxu0 0.0
    %179 = vmatprep.subr.mxu0 0.0
    %180 = vmatpush2.msra.mxu0 0.0
    %181 = vmatprep.subr.mxu0 0.0
    %182 = vmatpush2.msra.mxu0 0.0
    %183 = vmatprep.subr.mxu0 0.0
    %184 = vmatpush2.msra.mxu0 0.0
    %185 = vmatprep.subr.mxu0 0.0
    %186 = vmatpush2.msra.mxu0 0.0
    %187 = vmatprep.subr.mxu0 0.0
    %188 = vmatpush2.msra.mxu0 0.0
    %189 = vmatprep.subr.mxu0 0.0
    %190 = vmatpush2.msra.mxu0 0.0
    %191 = vmatprep.subr.mxu0 0.0
    %192 = vmatpush2.msra.mxu0 0.0
    %193 = vmatprep.subr.mxu0 0.0
    %194 = vmatpush2.msra.mxu0 0.0
    %195 = vmatprep.mubr.f32.mxu0 0.0
    %196 = vmatmul.mubr.f32.gmra.mxu0 %v129
    %v197 = vpop.f32.mrf.mxu0
    %v198 = vadd.f32 %v125, %v197
    %v199 = vpop.f32.mrf.mxu0
    %200 = vdwg.mxu0
    %vm201 = vcmp.ge.f32.partialorder %v198, 0.0
    %v202 = vmul.f32 %v198, 0.01
    %v203 = vsel %vm201, %v198, %v202
    %v204 = vld [vmem:[%s3] sm:$0xf]
    %s205 = scalar_lea.vmem %s3, 4
    %v206 = vld [vmem:[%s205] sm:$0xf]
    %208 = vrot.lane.b32.xlu0 %v203, 64
    %v209 = vpop.permute.xlu0 %208
    %vm210 = vcmask 15360
    %v212 = vsel %vm210, %v206, 0
    %vm214 = vcmask 1041408
    %v215 = vsel %vm214, %v209, 0
    %217 = vmatprep.subr.mxu0 0.0
    %218 = vmatpush1.msra.mxu0 0.0
    %219 = vmatprep.subr.mxu0 0.0
    %220 = vmatpush1.msra.mxu0 0.0
    %221 = vmatprep.subr.mxu0 0.0
    %222 = vmatpush1.msra.mxu0 0.0
    %223 = vmatprep.subr.mxu0 0.0
    %224 = vmatpush1.msra.mxu0 0.0
    %225 = vmatprep.subr.mxu0 0.0
    %226 = vmatpush1.msra.mxu0 0.0
    %227 = vmatprep.subr.mxu0 0.0
    %228 = vmatpush1.msra.mxu0 0.0
    %229 = vmatprep.subr.mxu0 0.0
    %230 = vmatpush1.msra.mxu0 0.0
    %231 = vmatprep.subr.mxu0 0.0
    %232 = vmatpush1.msra.mxu0 0.0
    %233 = vmatprep.subr.mxu0 0.0
    %234 = vmatpush1.msra.mxu0 0.0
    %235 = vmatprep.subr.mxu0 0.0
    %236 = vmatpush1.msra.mxu0 0.0
    %237 = vmatprep.subr.mxu0 0.0
    %238 = vmatpush1.msra.mxu0 0.0
    %239 = vmatprep.subr.mxu0 0.0
    %240 = vmatpush1.msra.mxu0 0.0
    %241 = vmatprep.subr.mxu0 0.0
    %242 = vmatpush1.msra.mxu0 0.0
    %243 = vmatprep.subr.mxu0 0.0
    %244 = vmatpush1.msra.mxu0 0.0
    %245 = vmatprep.subr.mxu0 0.0
    %246 = vmatpush1.msra.mxu0 0.0
    %247 = vmatprep.subr.mxu0 0.0
    %248 = vmatpush1.msra.mxu0 %v215
    %249 = vmatprep.subr.mxu0 0.0
    %250 = vmatpush2.msra.mxu0 0.0
    %251 = vmatprep.subr.mxu0 0.0
    %252 = vmatpush2.msra.mxu0 0.0
    %253 = vmatprep.subr.mxu0 0.0
    %254 = vmatpush2.msra.mxu0 0.0
    %255 = vmatprep.subr.mxu0 0.0
    %256 = vmatpush2.msra.mxu0 0.0
    %257 = vmatprep.subr.mxu0 0.0
    %258 = vmatpush2.msra.mxu0 0.0
    %259 = vmatprep.subr.mxu0 0.0
    %260 = vmatpush2.msra.mxu0 0.0
    %261 = vmatprep.subr.mxu0 0.0
    %262 = vmatpush2.msra.mxu0 0.0
    %263 = vmatprep.subr.mxu0 0.0
    %264 = vmatpush2.msra.mxu0 0.0
    %265 = vmatprep.subr.mxu0 0.0
    %266 = vmatpush2.msra.mxu0 0.0
    %267 = vmatprep.subr.mxu0 0.0
    %268 = vmatpush2.msra.mxu0 0.0
    %269 = vmatprep.subr.mxu0 0.0
    %270 = vmatpush2.msra.mxu0 0.0
    %271 = vmatprep.subr.mxu0 0.0
    %272 = vmatpush2.msra.mxu0 0.0
    %273 = vmatprep.subr.mxu0 0.0
    %274 = vmatpush2.msra.mxu0 0.0
    %275 = vmatprep.subr.mxu0 0.0
    %276 = vmatpush2.msra.mxu0 0.0
    %277 = vmatprep.subr.mxu0 0.0
    %278 = vmatpush2.msra.mxu0 0.0
    %279 = vmatprep.subr.mxu0 0.0
    %280 = vmatpush2.msra.mxu0 0.0
    %281 = vmatprep.mubr.f32.mxu0 0.0
    %282 = vmatmul.mubr.f32.gmra.mxu0 %v212
    %v283 = vpop.f32.mrf.mxu0
    %v284 = vadd.f32 0.0, %v283
    %v285 = vpop.f32.mrf.mxu0
    %286 = vdwg.mxu0
    %v288 = vsel %vm210, %v204, 0
    %v290 = vsel %vm214, %v203, 0
    %292 = vmatprep.subr.mxu0 0.0
    %293 = vmatpush1.msra.mxu0 0.0
    %294 = vmatprep.subr.mxu0 0.0
    %295 = vmatpush1.msra.mxu0 0.0
    %296 = vmatprep.subr.mxu0 0.0
    %297 = vmatpush1.msra.mxu0 0.0
    %298 = vmatprep.subr.mxu0 0.0
    %299 = vmatpush1.msra.mxu0 0.0
    %300 = vmatprep.subr.mxu0 0.0
    %301 = vmatpush1.msra.mxu0 0.0
    %302 = vmatprep.subr.mxu0 0.0
    %303 = vmatpush1.msra.mxu0 0.0
    %304 = vmatprep.subr.mxu0 0.0
    %305 = vmatpush1.msra.mxu0 0.0
    %306 = vmatprep.subr.mxu0 0.0
    %307 = vmatpush1.msra.mxu0 0.0
    %308 = vmatprep.subr.mxu0 0.0
    %309 = vmatpush1.msra.mxu0 0.0
    %310 = vmatprep.subr.mxu0 0.0
    %311 = vmatpush1.msra.mxu0 0.0
    %312 = vmatprep.subr.mxu0 0.0
    %313 = vmatpush1.msra.mxu0 0.0
    %314 = vmatprep.subr.mxu0 0.0
    %315 = vmatpush1.msra.mxu0 0.0
    %316 = vmatprep.subr.mxu0 0.0
    %317 = vmatpush1.msra.mxu0 0.0
    %318 = vmatprep.subr.mxu0 0.0
    %319 = vmatpush1.msra.mxu0 0.0
    %320 = vmatprep.subr.mxu0 0.0
    %321 = vmatpush1.msra.mxu0 0.0
    %322 = vmatprep.subr.mxu0 0.0
    %323 = vmatpush1.msra.mxu0 %v290
    %324 = vmatprep.subr.mxu0 0.0
    %325 = vmatpush2.msra.mxu0 0.0
    %326 = vmatprep.subr.mxu0 0.0
    %327 = vmatpush2.msra.mxu0 0.0
    %328 = vmatprep.subr.mxu0 0.0
    %329 = vmatpush2.msra.mxu0 0.0
    %330 = vmatprep.subr.mxu0 0.0
    %331 = vmatpush2.msra.mxu0 0.0
    %332 = vmatprep.subr.mxu0 0.0
    %333 = vmatpush2.msra.mxu0 0.0
    %334 = vmatprep.subr.mxu0 0.0
    %335 = vmatpush2.msra.mxu0 0.0
    %336 = vmatprep.subr.mxu0 0.0
    %337 = vmatpush2.msra.mxu0 0.0
    %338 = vmatprep.subr.mxu0 0.0
    %339 = vmatpush2.msra.mxu0 0.0
    %340 = vmatprep.subr.mxu0 0.0
    %341 = vmatpush2.msra.mxu0 0.0
    %342 = vmatprep.subr.mxu0 0.0
    %343 = vmatpush2.msra.mxu0 0.0
    %344 = vmatprep.subr.mxu0 0.0
    %345 = vmatpush2.msra.mxu0 0.0
    %346 = vmatprep.subr.mxu0 0.0
    %347 = vmatpush2.msra.mxu0 0.0
    %348 = vmatprep.subr.mxu0 0.0
    %349 = vmatpush2.msra.mxu0 0.0
    %350 = vmatprep.subr.mxu0 0.0
    %351 = vmatpush2.msra.mxu0 0.0
    %352 = vmatprep.subr.mxu0 0.0
    %353 = vmatpush2.msra.mxu0 0.0
    %354 = vmatprep.subr.mxu0 0.0
    %355 = vmatpush2.msra.mxu0 0.0
    %356 = vmatprep.mubr.f32.mxu0 0.0
    %357 = vmatmul.mubr.f32.gmra.mxu0 %v288
    %v358 = vpop.f32.mrf.mxu0
    %v359 = vadd.f32 %v284, %v358
    %v360 = vpop.f32.mrf.mxu0
    %361 = vdwg.mxu0
    %s362 = scalar_lea.vmem %s3, 8
    %v363 = vld [vmem:[%s362] sm:$0xf]
    %s364 = scalar_lea.vmem %s3, 12
    %v365 = vld [vmem:[%s364] sm:$0xf]
    %v367 = vsel %vm210, %v365, 0
    %369 = vmatprep.subr.mxu0 0.0
    %370 = vmatpush1.msra.mxu0 0.0
    %371 = vmatprep.subr.mxu0 0.0
    %372 = vmatpush1.msra.mxu0 0.0
    %373 = vmatprep.subr.mxu0 0.0
    %374 = vmatpush1.msra.mxu0 0.0
    %375 = vmatprep.subr.mxu0 0.0
    %376 = vmatpush1.msra.mxu0 0.0
    %377 = vmatprep.subr.mxu0 0.0
    %378 = vmatpush1.msra.mxu0 0.0
    %379 = vmatprep.subr.mxu0 0.0
    %380 = vmatpush1.msra.mxu0 0.0
    %381 = vmatprep.subr.mxu0 0.0
    %382 = vmatpush1.msra.mxu0 0.0
    %383 = vmatprep.subr.mxu0 0.0
    %384 = vmatpush1.msra.mxu0 0.0
    %385 = vmatprep.subr.mxu0 0.0
    %386 = vmatpush1.msra.mxu0 0.0
    %387 = vmatprep.subr.mxu0 0.0
    %388 = vmatpush1.msra.mxu0 0.0
    %389 = vmatprep.subr.mxu0 0.0
    %390 = vmatpush1.msra.mxu0 0.0
    %391 = vmatprep.subr.mxu0 0.0
    %392 = vmatpush1.msra.mxu0 0.0
    %393 = vmatprep.subr.mxu0 0.0
    %394 = vmatpush1.msra.mxu0 0.0
    %395 = vmatprep.subr.mxu0 0.0
    %396 = vmatpush1.msra.mxu0 0.0
    %397 = vmatprep.subr.mxu0 0.0
    %398 = vmatpush1.msra.mxu0 0.0
    %399 = vmatprep.subr.mxu0 0.0
    %400 = vmatpush1.msra.mxu0 %v215
    %401 = vmatprep.subr.mxu0 0.0
    %402 = vmatpush2.msra.mxu0 0.0
    %403 = vmatprep.subr.mxu0 0.0
    %404 = vmatpush2.msra.mxu0 0.0
    %405 = vmatprep.subr.mxu0 0.0
    %406 = vmatpush2.msra.mxu0 0.0
    %407 = vmatprep.subr.mxu0 0.0
    %408 = vmatpush2.msra.mxu0 0.0
    %409 = vmatprep.subr.mxu0 0.0
    %410 = vmatpush2.msra.mxu0 0.0
    %411 = vmatprep.subr.mxu0 0.0
    %412 = vmatpush2.msra.mxu0 0.0
    %413 = vmatprep.subr.mxu0 0.0
    %414 = vmatpush2.msra.mxu0 0.0
    %415 = vmatprep.subr.mxu0 0.0
    %416 = vmatpush2.msra.mxu0 0.0
    %417 = vmatprep.subr.mxu0 0.0
    %418 = vmatpush2.msra.mxu0 0.0
    %419 = vmatprep.subr.mxu0 0.0
    %420 = vmatpush2.msra.mxu0 0.0
    %421 = vmatprep.subr.mxu0 0.0
    %422 = vmatpush2.msra.mxu0 0.0
    %423 = vmatprep.subr.mxu0 0.0
    %424 = vmatpush2.msra.mxu0 0.0
    %425 = vmatprep.subr.mxu0 0.0
    %426 = vmatpush2.msra.mxu0 0.0
    %427 = vmatprep.subr.mxu0 0.0
    %428 = vmatpush2.msra.mxu0 0.0
    %429 = vmatprep.subr.mxu0 0.0
    %430 = vmatpush2.msra.mxu0 0.0
    %431 = vmatprep.subr.mxu0 0.0
    %432 = vmatpush2.msra.mxu0 0.0
    %433 = vmatprep.mubr.f32.mxu0 0.0
    %434 = vmatmul.mubr.f32.gmra.mxu0 %v367
    %v435 = vpop.f32.mrf.mxu0
    %v436 = vadd.f32 0.0, %v435
    %v437 = vpop.f32.mrf.mxu0
    %438 = vdwg.mxu0
    %v440 = vsel %vm210, %v363, 0
    %442 = vmatprep.subr.mxu0 0.0
    %443 = vmatpush1.msra.mxu0 0.0
    %444 = vmatprep.subr.mxu0 0.0
    %445 = vmatpush1.msra.mxu0 0.0
    %446 = vmatprep.subr.mxu0 0.0
    %447 = vmatpush1.msra.mxu0 0.0
    %448 = vmatprep.subr.mxu0 0.0
    %449 = vmatpush1.msra.mxu0 0.0
    %450 = vmatprep.subr.mxu0 0.0
    %451 = vmatpush1.msra.mxu0 0.0
    %452 = vmatprep.subr.mxu0 0.0
    %453 = vmatpush1.msra.mxu0 0.0
    %454 = vmatprep.subr.mxu0 0.0
    %455 = vmatpush1.msra.mxu0 0.0
    %456 = vmatprep.subr.mxu0 0.0
    %457 = vmatpush1.msra.mxu0 0.0
    %458 = vmatprep.subr.mxu0 0.0
    %459 = vmatpush1.msra.mxu0 0.0
    %460 = vmatprep.subr.mxu0 0.0
    %461 = vmatpush1.msra.mxu0 0.0
    %462 = vmatprep.subr.mxu0 0.0
    %463 = vmatpush1.msra.mxu0 0.0
    %464 = vmatprep.subr.mxu0 0.0
    %465 = vmatpush1.msra.mxu0 0.0
    %466 = vmatprep.subr.mxu0 0.0
    %467 = vmatpush1.msra.mxu0 0.0
    %468 = vmatprep.subr.mxu0 0.0
    %469 = vmatpush1.msra.mxu0 0.0
    %470 = vmatprep.subr.mxu0 0.0
    %471 = vmatpush1.msra.mxu0 0.0
    %472 = vmatprep.subr.mxu0 0.0
    %473 = vmatpush1.msra.mxu0 %v290
    %474 = vmatprep.subr.mxu0 0.0
    %475 = vmatpush2.msra.mxu0 0.0
    %476 = vmatprep.subr.mxu0 0.0
    %477 = vmatpush2.msra.mxu0 0.0
    %478 = vmatprep.subr.mxu0 0.0
    %479 = vmatpush2.msra.mxu0 0.0
    %480 = vmatprep.subr.mxu0 0.0
    %481 = vmatpush2.msra.mxu0 0.0
    %482 = vmatprep.subr.mxu0 0.0
    %483 = vmatpush2.msra.mxu0 0.0
    %484 = vmatprep.subr.mxu0 0.0
    %485 = vmatpush2.msra.mxu0 0.0
    %486 = vmatprep.subr.mxu0 0.0
    %487 = vmatpush2.msra.mxu0 0.0
    %488 = vmatprep.subr.mxu0 0.0
    %489 = vmatpush2.msra.mxu0 0.0
    %490 = vmatprep.subr.mxu0 0.0
    %491 = vmatpush2.msra.mxu0 0.0
    %492 = vmatprep.subr.mxu0 0.0
    %493 = vmatpush2.msra.mxu0 0.0
    %494 = vmatprep.subr.mxu0 0.0
    %495 = vmatpush2.msra.mxu0 0.0
    %496 = vmatprep.subr.mxu0 0.0
    %497 = vmatpush2.msra.mxu0 0.0
    %498 = vmatprep.subr.mxu0 0.0
    %499 = vmatpush2.msra.mxu0 0.0
    %500 = vmatprep.subr.mxu0 0.0
    %501 = vmatpush2.msra.mxu0 0.0
    %502 = vmatprep.subr.mxu0 0.0
    %503 = vmatpush2.msra.mxu0 0.0
    %504 = vmatprep.subr.mxu0 0.0
    %505 = vmatpush2.msra.mxu0 0.0
    %506 = vmatprep.mubr.f32.mxu0 0.0
    %507 = vmatmul.mubr.f32.gmra.mxu0 %v440
    %v508 = vpop.f32.mrf.mxu0
    %v509 = vadd.f32 %v436, %v508
    %v510 = vpop.f32.mrf.mxu0
    %511 = vdwg.mxu0
    %s512 = scalar_lea.vmem %s3, 16
    %v513 = vld [vmem:[%s512] sm:$0xf]
    %s514 = scalar_lea.vmem %s3, 20
    %v515 = vld [vmem:[%s514] sm:$0xf]
    %v517 = vsel %vm210, %v515, 0
    %519 = vmatprep.subr.mxu0 0.0
    %520 = vmatpush1.msra.mxu0 0.0
    %521 = vmatprep.subr.mxu0 0.0
    %522 = vmatpush1.msra.mxu0 0.0
    %523 = vmatprep.subr.mxu0 0.0
    %524 = vmatpush1.msra.mxu0 0.0
    %525 = vmatprep.subr.mxu0 0.0
    %526 = vmatpush1.msra.mxu0 0.0
    %527 = vmatprep.subr.mxu0 0.0
    %528 = vmatpush1.msra.mxu0 0.0
    %529 = vmatprep.subr.mxu0 0.0
    %530 = vmatpush1.msra.mxu0 0.0
    %531 = vmatprep.subr.mxu0 0.0
    %532 = vmatpush1.msra.mxu0 0.0
    %533 = vmatprep.subr.mxu0 0.0
    %534 = vmatpush1.msra.mxu0 0.0
    %535 = vmatprep.subr.mxu0 0.0
    %536 = vmatpush1.msra.mxu0 0.0
    %537 = vmatprep.subr.mxu0 0.0
    %538 = vmatpush1.msra.mxu0 0.0
    %539 = vmatprep.subr.mxu0 0.0
    %540 = vmatpush1.msra.mxu0 0.0
    %541 = vmatprep.subr.mxu0 0.0
    %542 = vmatpush1.msra.mxu0 0.0
    %543 = vmatprep.subr.mxu0 0.0
    %544 = vmatpush1.msra.mxu0 0.0
    %545 = vmatprep.subr.mxu0 0.0
    %546 = vmatpush1.msra.mxu0 0.0
    %547 = vmatprep.subr.mxu0 0.0
    %548 = vmatpush1.msra.mxu0 0.0
    %549 = vmatprep.subr.mxu0 0.0
    %550 = vmatpush1.msra.mxu0 %v215
    %551 = vmatprep.subr.mxu0 0.0
    %552 = vmatpush2.msra.mxu0 0.0
    %553 = vmatprep.subr.mxu0 0.0
    %554 = vmatpush2.msra.mxu0 0.0
    %555 = vmatprep.subr.mxu0 0.0
    %556 = vmatpush2.msra.mxu0 0.0
    %557 = vmatprep.subr.mxu0 0.0
    %558 = vmatpush2.msra.mxu0 0.0
    %559 = vmatprep.subr.mxu0 0.0
    %560 = vmatpush2.msra.mxu0 0.0
    %561 = vmatprep.subr.mxu0 0.0
    %562 = vmatpush2.msra.mxu0 0.0
    %563 = vmatprep.subr.mxu0 0.0
    %564 = vmatpush2.msra.mxu0 0.0
    %565 = vmatprep.subr.mxu0 0.0
    %566 = vmatpush2.msra.mxu0 0.0
    %567 = vmatprep.subr.mxu0 0.0
    %568 = vmatpush2.msra.mxu0 0.0
    %569 = vmatprep.subr.mxu0 0.0
    %570 = vmatpush2.msra.mxu0 0.0
    %571 = vmatprep.subr.mxu0 0.0
    %572 = vmatpush2.msra.mxu0 0.0
    %573 = vmatprep.subr.mxu0 0.0
    %574 = vmatpush2.msra.mxu0 0.0
    %575 = vmatprep.subr.mxu0 0.0
    %576 = vmatpush2.msra.mxu0 0.0
    %577 = vmatprep.subr.mxu0 0.0
    %578 = vmatpush2.msra.mxu0 0.0
    %579 = vmatprep.subr.mxu0 0.0
    %580 = vmatpush2.msra.mxu0 0.0
    %581 = vmatprep.subr.mxu0 0.0
    %582 = vmatpush2.msra.mxu0 0.0
    %583 = vmatprep.mubr.f32.mxu0 0.0
    %584 = vmatmul.mubr.f32.gmra.mxu0 %v517
    %v585 = vpop.f32.mrf.mxu0
    %v586 = vadd.f32 0.0, %v585
    %v587 = vpop.f32.mrf.mxu0
    %588 = vdwg.mxu0
    %v590 = vsel %vm210, %v513, 0
    %592 = vmatprep.subr.mxu0 0.0
    %593 = vmatpush1.msra.mxu0 0.0
    %594 = vmatprep.subr.mxu0 0.0
    %595 = vmatpush1.msra.mxu0 0.0
    %596 = vmatprep.subr.mxu0 0.0
    %597 = vmatpush1.msra.mxu0 0.0
    %598 = vmatprep.subr.mxu0 0.0
    %599 = vmatpush1.msra.mxu0 0.0
    %600 = vmatprep.subr.mxu0 0.0
    %601 = vmatpush1.msra.mxu0 0.0
    %602 = vmatprep.subr.mxu0 0.0
    %603 = vmatpush1.msra.mxu0 0.0
    %604 = vmatprep.subr.mxu0 0.0
    %605 = vmatpush1.msra.mxu0 0.0
    %606 = vmatprep.subr.mxu0 0.0
    %607 = vmatpush1.msra.mxu0 0.0
    %608 = vmatprep.subr.mxu0 0.0
    %609 = vmatpush1.msra.mxu0 0.0
    %610 = vmatprep.subr.mxu0 0.0
    %611 = vmatpush1.msra.mxu0 0.0
    %612 = vmatprep.subr.mxu0 0.0
    %613 = vmatpush1.msra.mxu0 0.0
    %614 = vmatprep.subr.mxu0 0.0
    %615 = vmatpush1.msra.mxu0 0.0
    %616 = vmatprep.subr.mxu0 0.0
    %617 = vmatpush1.msra.mxu0 0.0
    %618 = vmatprep.subr.mxu0 0.0
    %619 = vmatpush1.msra.mxu0 0.0
    %620 = vmatprep.subr.mxu0 0.0
    %621 = vmatpush1.msra.mxu0 0.0
    %622 = vmatprep.subr.mxu0 0.0
    %623 = vmatpush1.msra.mxu0 %v290
    %624 = vmatprep.subr.mxu0 0.0
    %625 = vmatpush2.msra.mxu0 0.0
    %626 = vmatprep.subr.mxu0 0.0
    %627 = vmatpush2.msra.mxu0 0.0
    %628 = vmatprep.subr.mxu0 0.0
    %629 = vmatpush2.msra.mxu0 0.0
    %630 = vmatprep.subr.mxu0 0.0
    %631 = vmatpush2.msra.mxu0 0.0
    %632 = vmatprep.subr.mxu0 0.0
    %633 = vmatpush2.msra.mxu0 0.0
    %634 = vmatprep.subr.mxu0 0.0
    %635 = vmatpush2.msra.mxu0 0.0
    %636 = vmatprep.subr.mxu0 0.0
    %637 = vmatpush2.msra.mxu0 0.0
    %638 = vmatprep.subr.mxu0 0.0
    %639 = vmatpush2.msra.mxu0 0.0
    %640 = vmatprep.subr.mxu0 0.0
    %641 = vmatpush2.msra.mxu0 0.0
    %642 = vmatprep.subr.mxu0 0.0
    %643 = vmatpush2.msra.mxu0 0.0
    %644 = vmatprep.subr.mxu0 0.0
    %645 = vmatpush2.msra.mxu0 0.0
    %646 = vmatprep.subr.mxu0 0.0
    %647 = vmatpush2.msra.mxu0 0.0
    %648 = vmatprep.subr.mxu0 0.0
    %649 = vmatpush2.msra.mxu0 0.0
    %650 = vmatprep.subr.mxu0 0.0
    %651 = vmatpush2.msra.mxu0 0.0
    %652 = vmatprep.subr.mxu0 0.0
    %653 = vmatpush2.msra.mxu0 0.0
    %654 = vmatprep.subr.mxu0 0.0
    %655 = vmatpush2.msra.mxu0 0.0
    %656 = vmatprep.mubr.f32.mxu0 0.0
    %657 = vmatmul.mubr.f32.gmra.mxu0 %v590
    %v658 = vpop.f32.mrf.mxu0
    %v659 = vadd.f32 %v586, %v658
    %v660 = vpop.f32.mrf.mxu0
    %661 = vdwg.mxu0
    %663 = vrot.lane.b32.xlu0 %v509, 64
    %v664 = vpop.permute.xlu0 %663
    %v666 = vsel %vm127, %v359, %v664
    %v667 = vld [vmem:[#allocation2] sm:$0xff]
    %v668 = vld [vmem:[#allocation2 + $0x8] sm:$0xff]
    %v669 = vld [vmem:[#allocation2 + $0x10] sm:$0xff]
    %v670 = vld [vmem:[#allocation2 + $0x18] sm:$0xff]
    %v671 = vld [vmem:[#allocation2 + $0x20] sm:$0xff]
    %v672 = vld [vmem:[#allocation2 + $0x28] sm:$0xff]
    %v673 = vld [vmem:[#allocation2 + $0x30] sm:$0xff]
    %v674 = vld [vmem:[#allocation2 + $0x38] sm:$0xff]
    %v675 = vld [vmem:[#allocation2 + $0x40] sm:$0xff]
    %v676 = vld [vmem:[#allocation2 + $0x48] sm:$0xff]
    %v677 = vld [vmem:[#allocation2 + $0x50] sm:$0xff]
    %v678 = vld [vmem:[#allocation2 + $0x58] sm:$0xff]
    %v679 = vld [vmem:[#allocation2 + $0x60] sm:$0xff]
    %v680 = vld [vmem:[#allocation2 + $0x68] sm:$0xff]
    %v681 = vld [vmem:[#allocation2 + $0x70] sm:$0xff]
    %v682 = vld [vmem:[#allocation2 + $0x78] sm:$0xff]
    %v683 = vld [vmem:[#allocation2 + $0x80] sm:$0xff]
    %v684 = vld [vmem:[#allocation2 + $0x88] sm:$0xff]
    %v685 = vld [vmem:[#allocation2 + $0x90] sm:$0xff]
    %v686 = vld [vmem:[#allocation2 + $0x98] sm:$0xff]
    %v687 = vld [vmem:[#allocation2 + $0xa0] sm:$0xff]
    %v688 = vld [vmem:[#allocation2 + $0xa8] sm:$0xff]
    %v689 = vld [vmem:[#allocation2 + $0xb0] sm:$0xff]
    %v690 = vld [vmem:[#allocation2 + $0xb8] sm:$0xff]
    %v691 = vld [vmem:[%s5] sm:$0x1]
    %v693 = vlaneseq
    %v694 = vshrl.u32 %v693, 7
    %v695 = vsub.s32 0, %v694
    %v696 = vrot.slane %v691, %v695
    %v699 = vsel %vm127, %v659, 0
    %701 = vmatprep.subr.mxu0 0.0
    %702 = vmatpush1.msra.mxu0 %v682
    %703 = vmatprep.subr.mxu0 0.0
    %704 = vmatpush1.msra.mxu0 %v681
    %705 = vmatprep.subr.mxu0 0.0
    %706 = vmatpush1.msra.mxu0 %v680
    %707 = vmatprep.subr.mxu0 0.0
    %708 = vmatpush1.msra.mxu0 %v679
    %709 = vmatprep.subr.mxu0 0.0
    %710 = vmatpush1.msra.mxu0 %v678
    %711 = vmatprep.subr.mxu0 0.0
    %712 = vmatpush1.msra.mxu0 %v677
    %713 = vmatprep.subr.mxu0 0.0
    %714 = vmatpush1.msra.mxu0 %v676
    %715 = vmatprep.subr.mxu0 0.0
    %716 = vmatpush1.msra.mxu0 %v675
    %717 = vmatprep.subr.mxu0 0.0
    %718 = vmatpush1.msra.mxu0 %v674
    %719 = vmatprep.subr.mxu0 0.0
    %720 = vmatpush1.msra.mxu0 %v673
    %721 = vmatprep.subr.mxu0 0.0
    %722 = vmatpush1.msra.mxu0 %v672
    %723 = vmatprep.subr.mxu0 0.0
    %724 = vmatpush1.msra.mxu0 %v671
    %725 = vmatprep.subr.mxu0 0.0
    %726 = vmatpush1.msra.mxu0 %v670
    %727 = vmatprep.subr.mxu0 0.0
    %728 = vmatpush1.msra.mxu0 %v669
    %729 = vmatprep.subr.mxu0 0.0
    %730 = vmatpush1.msra.mxu0 %v668
    %731 = vmatprep.subr.mxu0 0.0
    %732 = vmatpush1.msra.mxu0 %v667
    %733 = vmatprep.subr.mxu0 0.0
    %734 = vmatpush2.msra.mxu0 0.0
    %735 = vmatprep.subr.mxu0 0.0
    %736 = vmatpush2.msra.mxu0 0.0
    %737 = vmatprep.subr.mxu0 0.0
    %738 = vmatpush2.msra.mxu0 0.0
    %739 = vmatprep.subr.mxu0 0.0
    %740 = vmatpush2.msra.mxu0 0.0
    %741 = vmatprep.subr.mxu0 0.0
    %742 = vmatpush2.msra.mxu0 0.0
    %743 = vmatprep.subr.mxu0 0.0
    %744 = vmatpush2.msra.mxu0 0.0
    %745 = vmatprep.subr.mxu0 0.0
    %746 = vmatpush2.msra.mxu0 0.0
    %747 = vmatprep.subr.mxu0 0.0
    %748 = vmatpush2.msra.mxu0 0.0
    %749 = vmatprep.subr.mxu0 0.0
    %750 = vmatpush2.msra.mxu0 %v690
    %751 = vmatprep.subr.mxu0 0.0
    %752 = vmatpush2.msra.mxu0 %v689
    %753 = vmatprep.subr.mxu0 0.0
    %754 = vmatpush2.msra.mxu0 %v688
    %755 = vmatprep.subr.mxu0 0.0
    %756 = vmatpush2.msra.mxu0 %v687
    %757 = vmatprep.subr.mxu0 0.0
    %758 = vmatpush2.msra.mxu0 %v686
    %759 = vmatprep.subr.mxu0 0.0
    %760 = vmatpush2.msra.mxu0 %v685
    %761 = vmatprep.subr.mxu0 0.0
    %762 = vmatpush2.msra.mxu0 %v684
    %763 = vmatprep.subr.mxu0 0.0
    %764 = vmatpush2.msra.mxu0 %v683
    %765 = vmatprep.mubr.f32.mxu0 %v699
    %766 = vmatmul.mubr.f32.gmra.mxu0 %v666
    %v767 = vpop.f32.mrf.mxu0
    %v768 = vadd.f32 %v696, %v767
    %v769 = vpop.f32.mrf.mxu0
    %770 = vdwg.mxu0
    %vm771 = vcmp.ge.f32.partialorder %v768, 0.0
    %v772 = vmul.f32 %v768, 0.01
    %v773 = vsel %vm771, %v768, %v772
    %v774 = vld [vmem:[%s6] sm:$0xff]
    %s775 = scalar_lea.vmem %s6, 8
    %v776 = vld [vmem:[%s775] sm:$0xff]
    %778 = vrot.lane.b32.xlu0 %v773, 64
    %v779 = vpop.permute.xlu0 %778
    %vm780 = vcmask 31744
    %v782 = vsel %vm780, %v776, 0
    %vm784 = vcmask 1043456
    %v785 = vsel %vm784, %v779, 0
    %787 = vmatprep.subr.mxu0 0.0
    %788 = vmatpush1.msra.mxu0 0.0
    %789 = vmatprep.subr.mxu0 0.0
    %790 = vmatpush1.msra.mxu0 0.0
    %791 = vmatprep.subr.mxu0 0.0
    %792 = vmatpush1.msra.mxu0 0.0
    %793 = vmatprep.subr.mxu0 0.0
    %794 = vmatpush1.msra.mxu0 0.0
    %795 = vmatprep.subr.mxu0 0.0
    %796 = vmatpush1.msra.mxu0 0.0
    %797 = vmatprep.subr.mxu0 0.0
    %798 = vmatpush1.msra.mxu0 0.0
    %799 = vmatprep.subr.mxu0 0.0
    %800 = vmatpush1.msra.mxu0 0.0
    %801 = vmatprep.subr.mxu0 0.0
    %802 = vmatpush1.msra.mxu0 0.0
    %803 = vmatprep.subr.mxu0 0.0
    %804 = vmatpush1.msra.mxu0 0.0
    %805 = vmatprep.subr.mxu0 0.0
    %806 = vmatpush1.msra.mxu0 0.0
    %807 = vmatprep.subr.mxu0 0.0
    %808 = vmatpush1.msra.mxu0 0.0
    %809 = vmatprep.subr.mxu0 0.0
    %810 = vmatpush1.msra.mxu0 0.0
    %811 = vmatprep.subr.mxu0 0.0
    %812 = vmatpush1.msra.mxu0 0.0
    %813 = vmatprep.subr.mxu0 0.0
    %814 = vmatpush1.msra.mxu0 0.0
    %815 = vmatprep.subr.mxu0 0.0
    %816 = vmatpush1.msra.mxu0 0.0
    %817 = vmatprep.subr.mxu0 0.0
    %818 = vmatpush1.msra.mxu0 %v785
    %819 = vmatprep.subr.mxu0 0.0
    %820 = vmatpush2.msra.mxu0 0.0
    %821 = vmatprep.subr.mxu0 0.0
    %822 = vmatpush2.msra.mxu0 0.0
    %823 = vmatprep.subr.mxu0 0.0
    %824 = vmatpush2.msra.mxu0 0.0
    %825 = vmatprep.subr.mxu0 0.0
    %826 = vmatpush2.msra.mxu0 0.0
    %827 = vmatprep.subr.mxu0 0.0
    %828 = vmatpush2.msra.mxu0 0.0
    %829 = vmatprep.subr.mxu0 0.0
    %830 = vmatpush2.msra.mxu0 0.0
    %831 = vmatprep.subr.mxu0 0.0
    %832 = vmatpush2.msra.mxu0 0.0
    %833 = vmatprep.subr.mxu0 0.0
    %834 = vmatpush2.msra.mxu0 0.0
    %835 = vmatprep.subr.mxu0 0.0
    %836 = vmatpush2.msra.mxu0 0.0
    %837 = vmatprep.subr.mxu0 0.0
    %838 = vmatpush2.msra.mxu0 0.0
    %839 = vmatprep.subr.mxu0 0.0
    %840 = vmatpush2.msra.mxu0 0.0
    %841 = vmatprep.subr.mxu0 0.0
    %842 = vmatpush2.msra.mxu0 0.0
    %843 = vmatprep.subr.mxu0 0.0
    %844 = vmatpush2.msra.mxu0 0.0
    %845 = vmatprep.subr.mxu0 0.0
    %846 = vmatpush2.msra.mxu0 0.0
    %847 = vmatprep.subr.mxu0 0.0
    %848 = vmatpush2.msra.mxu0 0.0
    %849 = vmatprep.subr.mxu0 0.0
    %850 = vmatpush2.msra.mxu0 0.0
    %851 = vmatprep.mubr.f32.mxu0 0.0
    %852 = vmatmul.mubr.f32.gmra.mxu0 %v782
    %v853 = vpop.f32.mrf.mxu0
    %v854 = vadd.f32 0.0, %v853
    %v855 = vpop.f32.mrf.mxu0
    %856 = vdwg.mxu0
    %v858 = vsel %vm780, %v774, 0
    %v860 = vsel %vm784, %v773, 0
    %862 = vmatprep.subr.mxu0 0.0
    %863 = vmatpush1.msra.mxu0 0.0
    %864 = vmatprep.subr.mxu0 0.0
    %865 = vmatpush1.msra.mxu0 0.0
    %866 = vmatprep.subr.mxu0 0.0
    %867 = vmatpush1.msra.mxu0 0.0
    %868 = vmatprep.subr.mxu0 0.0
    %869 = vmatpush1.msra.mxu0 0.0
    %870 = vmatprep.subr.mxu0 0.0
    %871 = vmatpush1.msra.mxu0 0.0
    %872 = vmatprep.subr.mxu0 0.0
    %873 = vmatpush1.msra.mxu0 0.0
    %874 = vmatprep.subr.mxu0 0.0
    %875 = vmatpush1.msra.mxu0 0.0
    %876 = vmatprep.subr.mxu0 0.0
    %877 = vmatpush1.msra.mxu0 0.0
    %878 = vmatprep.subr.mxu0 0.0
    %879 = vmatpush1.msra.mxu0 0.0
    %880 = vmatprep.subr.mxu0 0.0
    %881 = vmatpush1.msra.mxu0 0.0
    %882 = vmatprep.subr.mxu0 0.0
    %883 = vmatpush1.msra.mxu0 0.0
    %884 = vmatprep.subr.mxu0 0.0
    %885 = vmatpush1.msra.mxu0 0.0
    %886 = vmatprep.subr.mxu0 0.0
    %887 = vmatpush1.msra.mxu0 0.0
    %888 = vmatprep.subr.mxu0 0.0
    %889 = vmatpush1.msra.mxu0 0.0
    %890 = vmatprep.subr.mxu0 0.0
    %891 = vmatpush1.msra.mxu0 0.0
    %892 = vmatprep.subr.mxu0 0.0
    %893 = vmatpush1.msra.mxu0 %v860
    %894 = vmatprep.subr.mxu0 0.0
    %895 = vmatpush2.msra.mxu0 0.0
    %896 = vmatprep.subr.mxu0 0.0
    %897 = vmatpush2.msra.mxu0 0.0
    %898 = vmatprep.subr.mxu0 0.0
    %899 = vmatpush2.msra.mxu0 0.0
    %900 = vmatprep.subr.mxu0 0.0
    %901 = vmatpush2.msra.mxu0 0.0
    %902 = vmatprep.subr.mxu0 0.0
    %903 = vmatpush2.msra.mxu0 0.0
    %904 = vmatprep.subr.mxu0 0.0
    %905 = vmatpush2.msra.mxu0 0.0
    %906 = vmatprep.subr.mxu0 0.0
    %907 = vmatpush2.msra.mxu0 0.0
    %908 = vmatprep.subr.mxu0 0.0
    %909 = vmatpush2.msra.mxu0 0.0
    %910 = vmatprep.subr.mxu0 0.0
    %911 = vmatpush2.msra.mxu0 0.0
    %912 = vmatprep.subr.mxu0 0.0
    %913 = vmatpush2.msra.mxu0 0.0
    %914 = vmatprep.subr.mxu0 0.0
    %915 = vmatpush2.msra.mxu0 0.0
    %916 = vmatprep.subr.mxu0 0.0
    %917 = vmatpush2.msra.mxu0 0.0
    %918 = vmatprep.subr.mxu0 0.0
    %919 = vmatpush2.msra.mxu0 0.0
    %920 = vmatprep.subr.mxu0 0.0
    %921 = vmatpush2.msra.mxu0 0.0
    %922 = vmatprep.subr.mxu0 0.0
    %923 = vmatpush2.msra.mxu0 0.0
    %924 = vmatprep.subr.mxu0 0.0
    %925 = vmatpush2.msra.mxu0 0.0
    %926 = vmatprep.mubr.f32.mxu0 0.0
    %927 = vmatmul.mubr.f32.gmra.mxu0 %v858
    %v928 = vpop.f32.mrf.mxu0
    %v929 = vadd.f32 %v854, %v928
    %v930 = vpop.f32.mrf.mxu0
    %931 = vdwg.mxu0
    %s932 = scalar_lea.vmem %s6, 16
    %v933 = vld [vmem:[%s932] sm:$0xff]
    %s934 = scalar_lea.vmem %s6, 24
    %v935 = vld [vmem:[%s934] sm:$0xff]
    %v937 = vsel %vm780, %v935, 0
    %939 = vmatprep.subr.mxu0 0.0
    %940 = vmatpush1.msra.mxu0 0.0
    %941 = vmatprep.subr.mxu0 0.0
    %942 = vmatpush1.msra.mxu0 0.0
    %943 = vmatprep.subr.mxu0 0.0
    %944 = vmatpush1.msra.mxu0 0.0
    %945 = vmatprep.subr.mxu0 0.0
    %946 = vmatpush1.msra.mxu0 0.0
    %947 = vmatprep.subr.mxu0 0.0
    %948 = vmatpush1.msra.mxu0 0.0
    %949 = vmatprep.subr.mxu0 0.0
    %950 = vmatpush1.msra.mxu0 0.0
    %951 = vmatprep.subr.mxu0 0.0
    %952 = vmatpush1.msra.mxu0 0.0
    %953 = vmatprep.subr.mxu0 0.0
    %954 = vmatpush1.msra.mxu0 0.0
    %955 = vmatprep.subr.mxu0 0.0
    %956 = vmatpush1.msra.mxu0 0.0
    %957 = vmatprep.subr.mxu0 0.0
    %958 = vmatpush1.msra.mxu0 0.0
    %959 = vmatprep.subr.mxu0 0.0
    %960 = vmatpush1.msra.mxu0 0.0
    %961 = vmatprep.subr.mxu0 0.0
    %962 = vmatpush1.msra.mxu0 0.0
    %963 = vmatprep.subr.mxu0 0.0
    %964 = vmatpush1.msra.mxu0 0.0
    %965 = vmatprep.subr.mxu0 0.0
    %966 = vmatpush1.msra.mxu0 0.0
    %967 = vmatprep.subr.mxu0 0.0
    %968 = vmatpush1.msra.mxu0 0.0
    %969 = vmatprep.subr.mxu0 0.0
    %970 = vmatpush1.msra.mxu0 %v785
    %971 = vmatprep.subr.mxu0 0.0
    %972 = vmatpush2.msra.mxu0 0.0
    %973 = vmatprep.subr.mxu0 0.0
    %974 = vmatpush2.msra.mxu0 0.0
    %975 = vmatprep.subr.mxu0 0.0
    %976 = vmatpush2.msra.mxu0 0.0
    %977 = vmatprep.subr.mxu0 0.0
    %978 = vmatpush2.msra.mxu0 0.0
    %979 = vmatprep.subr.mxu0 0.0
    %980 = vmatpush2.msra.mxu0 0.0
    %981 = vmatprep.subr.mxu0 0.0
    %982 = vmatpush2.msra.mxu0 0.0
    %983 = vmatprep.subr.mxu0 0.0
    %984 = vmatpush2.msra.mxu0 0.0
    %985 = vmatprep.subr.mxu0 0.0
    %986 = vmatpush2.msra.mxu0 0.0
    %987 = vmatprep.subr.mxu0 0.0
    %988 = vmatpush2.msra.mxu0 0.0
    %989 = vmatprep.subr.mxu0 0.0
    %990 = vmatpush2.msra.mxu0 0.0
    %991 = vmatprep.subr.mxu0 0.0
    %992 = vmatpush2.msra.mxu0 0.0
    %993 = vmatprep.subr.mxu0 0.0
    %994 = vmatpush2.msra.mxu0 0.0
    %995 = vmatprep.subr.mxu0 0.0
    %996 = vmatpush2.msra.mxu0 0.0
    %997 = vmatprep.subr.mxu0 0.0
    %998 = vmatpush2.msra.mxu0 0.0
    %999 = vmatprep.subr.mxu0 0.0
    %1000 = vmatpush2.msra.mxu0 0.0
    %1001 = vmatprep.subr.mxu0 0.0
    %1002 = vmatpush2.msra.mxu0 0.0
    %1003 = vmatprep.mubr.f32.mxu0 0.0
    %1004 = vmatmul.mubr.f32.gmra.mxu0 %v937
    %v1005 = vpop.f32.mrf.mxu0
    %v1006 = vadd.f32 0.0, %v1005
    %v1007 = vpop.f32.mrf.mxu0
    %1008 = vdwg.mxu0
    %v1010 = vsel %vm780, %v933, 0
    %1012 = vmatprep.subr.mxu0 0.0
    %1013 = vmatpush1.msra.mxu0 0.0
    %1014 = vmatprep.subr.mxu0 0.0
    %1015 = vmatpush1.msra.mxu0 0.0
    %1016 = vmatprep.subr.mxu0 0.0
    %1017 = vmatpush1.msra.mxu0 0.0
    %1018 = vmatprep.subr.mxu0 0.0
    %1019 = vmatpush1.msra.mxu0 0.0
    %1020 = vmatprep.subr.mxu0 0.0
    %1021 = vmatpush1.msra.mxu0 0.0
    %1022 = vmatprep.subr.mxu0 0.0
    %1023 = vmatpush1.msra.mxu0 0.0
    %1024 = vmatprep.subr.mxu0 0.0
    %1025 = vmatpush1.msra.mxu0 0.0
    %1026 = vmatprep.subr.mxu0 0.0
    %1027 = vmatpush1.msra.mxu0 0.0
    %1028 = vmatprep.subr.mxu0 0.0
    %1029 = vmatpush1.msra.mxu0 0.0
    %1030 = vmatprep.subr.mxu0 0.0
    %1031 = vmatpush1.msra.mxu0 0.0
    %1032 = vmatprep.subr.mxu0 0.0
    %1033 = vmatpush1.msra.mxu0 0.0
    %1034 = vmatprep.subr.mxu0 0.0
    %1035 = vmatpush1.msra.mxu0 0.0
    %1036 = vmatprep.subr.mxu0 0.0
    %1037 = vmatpush1.msra.mxu0 0.0
    %1038 = vmatprep.subr.mxu0 0.0
    %1039 = vmatpush1.msra.mxu0 0.0
    %1040 = vmatprep.subr.mxu0 0.0
    %1041 = vmatpush1.msra.mxu0 0.0
    %1042 = vmatprep.subr.mxu0 0.0
    %1043 = vmatpush1.msra.mxu0 %v860
    %1044 = vmatprep.subr.mxu0 0.0
    %1045 = vmatpush2.msra.mxu0 0.0
    %1046 = vmatprep.subr.mxu0 0.0
    %1047 = vmatpush2.msra.mxu0 0.0
    %1048 = vmatprep.subr.mxu0 0.0
    %1049 = vmatpush2.msra.mxu0 0.0
    %1050 = vmatprep.subr.mxu0 0.0
    %1051 = vmatpush2.msra.mxu0 0.0
    %1052 = vmatprep.subr.mxu0 0.0
    %1053 = vmatpush2.msra.mxu0 0.0
    %1054 = vmatprep.subr.mxu0 0.0
    %1055 = vmatpush2.msra.mxu0 0.0
    %1056 = vmatprep.subr.mxu0 0.0
    %1057 = vmatpush2.msra.mxu0 0.0
    %1058 = vmatprep.subr.mxu0 0.0
    %1059 = vmatpush2.msra.mxu0 0.0
    %1060 = vmatprep.subr.mxu0 0.0
    %1061 = vmatpush2.msra.mxu0 0.0
    %1062 = vmatprep.subr.mxu0 0.0
    %1063 = vmatpush2.msra.mxu0 0.0
    %1064 = vmatprep.subr.mxu0 0.0
    %1065 = vmatpush2.msra.mxu0 0.0
    %1066 = vmatprep.subr.mxu0 0.0
    %1067 = vmatpush2.msra.mxu0 0.0
    %1068 = vmatprep.subr.mxu0 0.0
    %1069 = vmatpush2.msra.mxu0 0.0
    %1070 = vmatprep.subr.mxu0 0.0
    %1071 = vmatpush2.msra.mxu0 0.0
    %1072 = vmatprep.subr.mxu0 0.0
    %1073 = vmatpush2.msra.mxu0 0.0
    %1074 = vmatprep.subr.mxu0 0.0
    %1075 = vmatpush2.msra.mxu0 0.0
    %1076 = vmatprep.mubr.f32.mxu0 0.0
    %1077 = vmatmul.mubr.f32.gmra.mxu0 %v1010
    %v1078 = vpop.f32.mrf.mxu0
    %v1079 = vadd.f32 %v1006, %v1078
    %v1080 = vpop.f32.mrf.mxu0
    %1081 = vdwg.mxu0
    %s1082 = scalar_lea.vmem %s6, 32
    %v1083 = vld [vmem:[%s1082] sm:$0xff]
    %s1084 = scalar_lea.vmem %s6, 40
    %v1085 = vld [vmem:[%s1084] sm:$0xff]
    %v1087 = vsel %vm780, %v1085, 0
    %1089 = vmatprep.subr.mxu0 0.0
    %1090 = vmatpush1.msra.mxu0 0.0
    %1091 = vmatprep.subr.mxu0 0.0
    %1092 = vmatpush1.msra.mxu0 0.0
    %1093 = vmatprep.subr.mxu0 0.0
    %1094 = vmatpush1.msra.mxu0 0.0
    %1095 = vmatprep.subr.mxu0 0.0
    %1096 = vmatpush1.msra.mxu0 0.0
    %1097 = vmatprep.subr.mxu0 0.0
    %1098 = vmatpush1.msra.mxu0 0.0
    %1099 = vmatprep.subr.mxu0 0.0
    %1100 = vmatpush1.msra.mxu0 0.0
    %1101 = vmatprep.subr.mxu0 0.0
    %1102 = vmatpush1.msra.mxu0 0.0
    %1103 = vmatprep.subr.mxu0 0.0
    %1104 = vmatpush1.msra.mxu0 0.0
    %1105 = vmatprep.subr.mxu0 0.0
    %1106 = vmatpush1.msra.mxu0 0.0
    %1107 = vmatprep.subr.mxu0 0.0
    %1108 = vmatpush1.msra.mxu0 0.0
    %1109 = vmatprep.subr.mxu0 0.0
    %1110 = vmatpush1.msra.mxu0 0.0
    %1111 = vmatprep.subr.mxu0 0.0
    %1112 = vmatpush1.msra.mxu0 0.0
    %1113 = vmatprep.subr.mxu0 0.0
    %1114 = vmatpush1.msra.mxu0 0.0
    %1115 = vmatprep.subr.mxu0 0.0
    %1116 = vmatpush1.msra.mxu0 0.0
    %1117 = vmatprep.subr.mxu0 0.0
    %1118 = vmatpush1.msra.mxu0 0.0
    %1119 = vmatprep.subr.mxu0 0.0
    %1120 = vmatpush1.msra.mxu0 %v785
    %1121 = vmatprep.subr.mxu0 0.0
    %1122 = vmatpush2.msra.mxu0 0.0
    %1123 = vmatprep.subr.mxu0 0.0
    %1124 = vmatpush2.msra.mxu0 0.0
    %1125 = vmatprep.subr.mxu0 0.0
    %1126 = vmatpush2.msra.mxu0 0.0
    %1127 = vmatprep.subr.mxu0 0.0
    %1128 = vmatpush2.msra.mxu0 0.0
    %1129 = vmatprep.subr.mxu0 0.0
    %1130 = vmatpush2.msra.mxu0 0.0
    %1131 = vmatprep.subr.mxu0 0.0
    %1132 = vmatpush2.msra.mxu0 0.0
    %1133 = vmatprep.subr.mxu0 0.0
    %1134 = vmatpush2.msra.mxu0 0.0
    %1135 = vmatprep.subr.mxu0 0.0
    %1136 = vmatpush2.msra.mxu0 0.0
    %1137 = vmatprep.subr.mxu0 0.0
    %1138 = vmatpush2.msra.mxu0 0.0
    %1139 = vmatprep.subr.mxu0 0.0
    %1140 = vmatpush2.msra.mxu0 0.0
    %1141 = vmatprep.subr.mxu0 0.0
    %1142 = vmatpush2.msra.mxu0 0.0
    %1143 = vmatprep.subr.mxu0 0.0
    %1144 = vmatpush2.msra.mxu0 0.0
    %1145 = vmatprep.subr.mxu0 0.0
    %1146 = vmatpush2.msra.mxu0 0.0
    %1147 = vmatprep.subr.mxu0 0.0
    %1148 = vmatpush2.msra.mxu0 0.0
    %1149 = vmatprep.subr.mxu0 0.0
    %1150 = vmatpush2.msra.mxu0 0.0
    %1151 = vmatprep.subr.mxu0 0.0
    %1152 = vmatpush2.msra.mxu0 0.0
    %1153 = vmatprep.mubr.f32.mxu0 0.0
    %1154 = vmatmul.mubr.f32.gmra.mxu0 %v1087
    %v1155 = vpop.f32.mrf.mxu0
    %v1156 = vadd.f32 0.0, %v1155
    %v1157 = vpop.f32.mrf.mxu0
    %1158 = vdwg.mxu0
    %v1160 = vsel %vm780, %v1083, 0
    %1162 = vmatprep.subr.mxu0 0.0
    %1163 = vmatpush1.msra.mxu0 0.0
    %1164 = vmatprep.subr.mxu0 0.0
    %1165 = vmatpush1.msra.mxu0 0.0
    %1166 = vmatprep.subr.mxu0 0.0
    %1167 = vmatpush1.msra.mxu0 0.0
    %1168 = vmatprep.subr.mxu0 0.0
    %1169 = vmatpush1.msra.mxu0 0.0
    %1170 = vmatprep.subr.mxu0 0.0
    %1171 = vmatpush1.msra.mxu0 0.0
    %1172 = vmatprep.subr.mxu0 0.0
    %1173 = vmatpush1.msra.mxu0 0.0
    %1174 = vmatprep.subr.mxu0 0.0
    %1175 = vmatpush1.msra.mxu0 0.0
    %1176 = vmatprep.subr.mxu0 0.0
    %1177 = vmatpush1.msra.mxu0 0.0
    %1178 = vmatprep.subr.mxu0 0.0
    %1179 = vmatpush1.msra.mxu0 0.0
    %1180 = vmatprep.subr.mxu0 0.0
    %1181 = vmatpush1.msra.mxu0 0.0
    %1182 = vmatprep.subr.mxu0 0.0
    %1183 = vmatpush1.msra.mxu0 0.0
    %1184 = vmatprep.subr.mxu0 0.0
    %1185 = vmatpush1.msra.mxu0 0.0
    %1186 = vmatprep.subr.mxu0 0.0
    %1187 = vmatpush1.msra.mxu0 0.0
    %1188 = vmatprep.subr.mxu0 0.0
    %1189 = vmatpush1.msra.mxu0 0.0
    %1190 = vmatprep.subr.mxu0 0.0
    %1191 = vmatpush1.msra.mxu0 0.0
    %1192 = vmatprep.subr.mxu0 0.0
    %1193 = vmatpush1.msra.mxu0 %v860
    %1194 = vmatprep.subr.mxu0 0.0
    %1195 = vmatpush2.msra.mxu0 0.0
    %1196 = vmatprep.subr.mxu0 0.0
    %1197 = vmatpush2.msra.mxu0 0.0
    %1198 = vmatprep.subr.mxu0 0.0
    %1199 = vmatpush2.msra.mxu0 0.0
    %1200 = vmatprep.subr.mxu0 0.0
    %1201 = vmatpush2.msra.mxu0 0.0
    %1202 = vmatprep.subr.mxu0 0.0
    %1203 = vmatpush2.msra.mxu0 0.0
    %1204 = vmatprep.subr.mxu0 0.0
    %1205 = vmatpush2.msra.mxu0 0.0
    %1206 = vmatprep.subr.mxu0 0.0
    %1207 = vmatpush2.msra.mxu0 0.0
    %1208 = vmatprep.subr.mxu0 0.0
    %1209 = vmatpush2.msra.mxu0 0.0
    %1210 = vmatprep.subr.mxu0 0.0
    %1211 = vmatpush2.msra.mxu0 0.0
    %1212 = vmatprep.subr.mxu0 0.0
    %1213 = vmatpush2.msra.mxu0 0.0
    %1214 = vmatprep.subr.mxu0 0.0
    %1215 = vmatpush2.msra.mxu0 0.0
    %1216 = vmatprep.subr.mxu0 0.0
    %1217 = vmatpush2.msra.mxu0 0.0
    %1218 = vmatprep.subr.mxu0 0.0
    %1219 = vmatpush2.msra.mxu0 0.0
    %1220 = vmatprep.subr.mxu0 0.0
    %1221 = vmatpush2.msra.mxu0 0.0
    %1222 = vmatprep.subr.mxu0 0.0
    %1223 = vmatpush2.msra.mxu0 0.0
    %1224 = vmatprep.subr.mxu0 0.0
    %1225 = vmatpush2.msra.mxu0 0.0
    %1226 = vmatprep.mubr.f32.mxu0 0.0
    %1227 = vmatmul.mubr.f32.gmra.mxu0 %v1160
    %v1228 = vpop.f32.mrf.mxu0
    %v1229 = vadd.f32 %v1156, %v1228
    %v1230 = vpop.f32.mrf.mxu0
    %1231 = vdwg.mxu0
    %1233 = vrot.lane.b32.xlu0 %v1079, 64
    %v1234 = vpop.permute.xlu0 %1233
    %v1236 = vsel %vm127, %v929, %v1234
    %v1237 = vld [vmem:[#allocation4] sm:$0xff]
    %v1238 = vld [vmem:[#allocation4 + $0x8] sm:$0xff]
    %v1239 = vld [vmem:[#allocation4 + $0x10] sm:$0xff]
    %v1240 = vld [vmem:[#allocation4 + $0x18] sm:$0xff]
    %v1241 = vld [vmem:[#allocation4 + $0x20] sm:$0xff]
    %v1242 = vld [vmem:[#allocation4 + $0x28] sm:$0xff]
    %v1243 = vld [vmem:[#allocation4 + $0x30] sm:$0xff]
    %v1244 = vld [vmem:[#allocation4 + $0x38] sm:$0xff]
    %v1245 = vld [vmem:[#allocation4 + $0x40] sm:$0xff]
    %v1246 = vld [vmem:[#allocation4 + $0x48] sm:$0xff]
    %v1247 = vld [vmem:[#allocation4 + $0x50] sm:$0xff]
    %v1248 = vld [vmem:[#allocation4 + $0x58] sm:$0xff]
    %v1249 = vld [vmem:[#allocation4 + $0x60] sm:$0xff]
    %v1250 = vld [vmem:[#allocation4 + $0x68] sm:$0xff]
    %v1251 = vld [vmem:[#allocation4 + $0x70] sm:$0xff]
    %v1252 = vld [vmem:[#allocation4 + $0x78] sm:$0xff]
    %v1253 = vld [vmem:[#allocation4 + $0x80] sm:$0xff]
    %v1254 = vld [vmem:[#allocation4 + $0x88] sm:$0xff]
    %v1255 = vld [vmem:[#allocation4 + $0x90] sm:$0xff]
    %v1256 = vld [vmem:[#allocation4 + $0x98] sm:$0xff]
    %v1257 = vld [vmem:[#allocation4 + $0xa0] sm:$0xff]
    %v1258 = vld [vmem:[#allocation4 + $0xa8] sm:$0xff]
    %v1259 = vld [vmem:[#allocation4 + $0xb0] sm:$0xff]
    %v1260 = vld [vmem:[#allocation4 + $0xb8] sm:$0xff]
    %v1261 = vld [vmem:[%s8] sm:$0x1]
    %v1263 = vlaneseq
    %v1264 = vshrl.u32 %v1263, 7
    %v1265 = vsub.s32 0, %v1264
    %v1266 = vrot.slane %v1261, %v1265
    %v1269 = vsel %vm127, %v1229, 0
    %1271 = vmatprep.subr.mxu0 0.0
    %1272 = vmatpush1.msra.mxu0 %v1252
    %1273 = vmatprep.subr.mxu0 0.0
    %1274 = vmatpush1.msra.mxu0 %v1251
    %1275 = vmatprep.subr.mxu0 0.0
    %1276 = vmatpush1.msra.mxu0 %v1250
    %1277 = vmatprep.subr.mxu0 0.0
    %1278 = vmatpush1.msra.mxu0 %v1249
    %1279 = vmatprep.subr.mxu0 0.0
    %1280 = vmatpush1.msra.mxu0 %v1248
    %1281 = vmatprep.subr.mxu0 0.0
    %1282 = vmatpush1.msra.mxu0 %v1247
    %1283 = vmatprep.subr.mxu0 0.0
    %1284 = vmatpush1.msra.mxu0 %v1246
    %1285 = vmatprep.subr.mxu0 0.0
    %1286 = vmatpush1.msra.mxu0 %v1245
    %1287 = vmatprep.subr.mxu0 0.0
    %1288 = vmatpush1.msra.mxu0 %v1244
    %1289 = vmatprep.subr.mxu0 0.0
    %1290 = vmatpush1.msra.mxu0 %v1243
    %1291 = vmatprep.subr.mxu0 0.0
    %1292 = vmatpush1.msra.mxu0 %v1242
    %1293 = vmatprep.subr.mxu0 0.0
    %1294 = vmatpush1.msra.mxu0 %v1241
    %1295 = vmatprep.subr.mxu0 0.0
    %1296 = vmatpush1.msra.mxu0 %v1240
    %1297 = vmatprep.subr.mxu0 0.0
    %1298 = vmatpush1.msra.mxu0 %v1239
    %1299 = vmatprep.subr.mxu0 0.0
    %1300 = vmatpush1.msra.mxu0 %v1238
    %1301 = vmatprep.subr.mxu0 0.0
    %1302 = vmatpush1.msra.mxu0 %v1237
    %1303 = vmatprep.subr.mxu0 0.0
    %1304 = vmatpush2.msra.mxu0 0.0
    %1305 = vmatprep.subr.mxu0 0.0
    %1306 = vmatpush2.msra.mxu0 0.0
    %1307 = vmatprep.subr.mxu0 0.0
    %1308 = vmatpush2.msra.mxu0 0.0
    %1309 = vmatprep.subr.mxu0 0.0
    %1310 = vmatpush2.msra.mxu0 0.0
    %1311 = vmatprep.subr.mxu0 0.0
    %1312 = vmatpush2.msra.mxu0 0.0
    %1313 = vmatprep.subr.mxu0 0.0
    %1314 = vmatpush2.msra.mxu0 0.0
    %1315 = vmatprep.subr.mxu0 0.0
    %1316 = vmatpush2.msra.mxu0 0.0
    %1317 = vmatprep.subr.mxu0 0.0
    %1318 = vmatpush2.msra.mxu0 0.0
    %1319 = vmatprep.subr.mxu0 0.0
    %1320 = vmatpush2.msra.mxu0 %v1260
    %1321 = vmatprep.subr.mxu0 0.0
    %1322 = vmatpush2.msra.mxu0 %v1259
    %1323 = vmatprep.subr.mxu0 0.0
    %1324 = vmatpush2.msra.mxu0 %v1258
    %1325 = vmatprep.subr.mxu0 0.0
    %1326 = vmatpush2.msra.mxu0 %v1257
    %1327 = vmatprep.subr.mxu0 0.0
    %1328 = vmatpush2.msra.mxu0 %v1256
    %1329 = vmatprep.subr.mxu0 0.0
    %1330 = vmatpush2.msra.mxu0 %v1255
    %1331 = vmatprep.subr.mxu0 0.0
    %1332 = vmatpush2.msra.mxu0 %v1254
    %1333 = vmatprep.subr.mxu0 0.0
    %1334 = vmatpush2.msra.mxu0 %v1253
    %1335 = vmatprep.mubr.f32.mxu0 %v1269
    %1336 = vmatmul.mubr.f32.gmra.mxu0 %v1236
    %v1337 = vpop.f32.mrf.mxu0
    %v1338 = vadd.f32 %v1266, %v1337
    %v1339 = vpop.f32.mrf.mxu0
    %1340 = vdwg.mxu0
    %vm1341 = vcmp.ge.f32.partialorder %v1338, 0.0
    %v1342 = vmul.f32 %v1338, 0.01
    %v1343 = vsel %vm1341, %v1338, %v1342
    %v1344 = vld [vmem:[%s9] sm:$0xff]
    %v1345 = vld [vmem:[%s9 + $0x8] sm:$0xff]
    %s1346 = scalar_lea.vmem %s9, 16
    %v1347 = vld [vmem:[%s1346] sm:$0xff]
    %v1348 = vld [vmem:[%s1346 + $0x8] sm:$0xff]
    %1350 = vrot.lane.b32.xlu0 %v1343, 64
    %v1351 = vpop.permute.xlu0 %1350
    %vm1353 = vcmask 64512
    %v1355 = vsel %vm1353, %v1347, 0
    %v1358 = vsel %vm1353, %v1348, 0
    %1360 = vmatprep.subr.mxu0 0.0
    %1361 = vmatpush1.msra.mxu0 0.0
    %1362 = vmatprep.subr.mxu0 0.0
    %1363 = vmatpush1.msra.mxu0 0.0
    %1364 = vmatprep.subr.mxu0 0.0
    %1365 = vmatpush1.msra.mxu0 0.0
    %1366 = vmatprep.subr.mxu0 0.0
    %1367 = vmatpush1.msra.mxu0 0.0
    %1368 = vmatprep.subr.mxu0 0.0
    %1369 = vmatpush1.msra.mxu0 0.0
    %1370 = vmatprep.subr.mxu0 0.0
    %1371 = vmatpush1.msra.mxu0 0.0
    %1372 = vmatprep.subr.mxu0 0.0
    %1373 = vmatpush1.msra.mxu0 0.0
    %1374 = vmatprep.subr.mxu0 0.0
    %1375 = vmatpush1.msra.mxu0 0.0
    %1376 = vmatprep.subr.mxu0 0.0
    %1377 = vmatpush1.msra.mxu0 0.0
    %1378 = vmatprep.subr.mxu0 0.0
    %1379 = vmatpush1.msra.mxu0 0.0
    %1380 = vmatprep.subr.mxu0 0.0
    %1381 = vmatpush1.msra.mxu0 0.0
    %1382 = vmatprep.subr.mxu0 0.0
    %1383 = vmatpush1.msra.mxu0 0.0
    %1384 = vmatprep.subr.mxu0 0.0
    %1385 = vmatpush1.msra.mxu0 0.0
    %1386 = vmatprep.subr.mxu0 0.0
    %1387 = vmatpush1.msra.mxu0 0.0
    %1388 = vmatprep.subr.mxu0 0.0
    %1389 = vmatpush1.msra.mxu0 0.0
    %1390 = vmatprep.subr.mxu0 0.0
    %1391 = vmatpush1.msra.mxu0 %v1351
    %1392 = vmatprep.subr.mxu0 0.0
    %1393 = vmatpush2.msra.mxu0 0.0
    %1394 = vmatprep.subr.mxu0 0.0
    %1395 = vmatpush2.msra.mxu0 0.0
    %1396 = vmatprep.subr.mxu0 0.0
    %1397 = vmatpush2.msra.mxu0 0.0
    %1398 = vmatprep.subr.mxu0 0.0
    %1399 = vmatpush2.msra.mxu0 0.0
    %1400 = vmatprep.subr.mxu0 0.0
    %1401 = vmatpush2.msra.mxu0 0.0
    %1402 = vmatprep.subr.mxu0 0.0
    %1403 = vmatpush2.msra.mxu0 0.0
    %1404 = vmatprep.subr.mxu0 0.0
    %1405 = vmatpush2.msra.mxu0 0.0
    %1406 = vmatprep.subr.mxu0 0.0
    %1407 = vmatpush2.msra.mxu0 0.0
    %1408 = vmatprep.subr.mxu0 0.0
    %1409 = vmatpush2.msra.mxu0 0.0
    %1410 = vmatprep.subr.mxu0 0.0
    %1411 = vmatpush2.msra.mxu0 0.0
    %1412 = vmatprep.subr.mxu0 0.0
    %1413 = vmatpush2.msra.mxu0 0.0
    %1414 = vmatprep.subr.mxu0 0.0
    %1415 = vmatpush2.msra.mxu0 0.0
    %1416 = vmatprep.subr.mxu0 0.0
    %1417 = vmatpush2.msra.mxu0 0.0
    %1418 = vmatprep.subr.mxu0 0.0
    %1419 = vmatpush2.msra.mxu0 0.0
    %1420 = vmatprep.subr.mxu0 0.0
    %1421 = vmatpush2.msra.mxu0 0.0
    %1422 = vmatprep.subr.mxu0 0.0
    %1423 = vmatpush2.msra.mxu0 0.0
    %1424 = vmatprep.mubr.f32.mxu0 0.0
    %1425 = vmatmul.mubr.f32.gmra.mxu0 %v1355
    %v1426 = vpop.f32.mrf.mxu0
    %v1427 = vadd.f32 0.0, %v1426
    %v1428 = vpop.f32.mrf.mxu0
    %1429 = vmatprep.mubr.f32.mxu0 0.0
    %1430 = vmatmul.mubr.f32.gmra.mxu0 %v1358
    %v1431 = vpop.f32.mrf.mxu0
    %v1432 = vadd.f32 0.0, %v1431
    %v1433 = vpop.f32.mrf.mxu0
    %1434 = vdwg.mxu0
    %v1436 = vsel %vm1353, %v1344, 0
    %v1439 = vsel %vm1353, %v1345, 0
    %1441 = vmatprep.subr.mxu0 0.0
    %1442 = vmatpush1.msra.mxu0 0.0
    %1443 = vmatprep.subr.mxu0 0.0
    %1444 = vmatpush1.msra.mxu0 0.0
    %1445 = vmatprep.subr.mxu0 0.0
    %1446 = vmatpush1.msra.mxu0 0.0
    %1447 = vmatprep.subr.mxu0 0.0
    %1448 = vmatpush1.msra.mxu0 0.0
    %1449 = vmatprep.subr.mxu0 0.0
    %1450 = vmatpush1.msra.mxu0 0.0
    %1451 = vmatprep.subr.mxu0 0.0
    %1452 = vmatpush1.msra.mxu0 0.0
    %1453 = vmatprep.subr.mxu0 0.0
    %1454 = vmatpush1.msra.mxu0 0.0
    %1455 = vmatprep.subr.mxu0 0.0
    %1456 = vmatpush1.msra.mxu0 0.0
    %1457 = vmatprep.subr.mxu0 0.0
    %1458 = vmatpush1.msra.mxu0 0.0
    %1459 = vmatprep.subr.mxu0 0.0
    %1460 = vmatpush1.msra.mxu0 0.0
    %1461 = vmatprep.subr.mxu0 0.0
    %1462 = vmatpush1.msra.mxu0 0.0
    %1463 = vmatprep.subr.mxu0 0.0
    %1464 = vmatpush1.msra.mxu0 0.0
    %1465 = vmatprep.subr.mxu0 0.0
    %1466 = vmatpush1.msra.mxu0 0.0
    %1467 = vmatprep.subr.mxu0 0.0
    %1468 = vmatpush1.msra.mxu0 0.0
    %1469 = vmatprep.subr.mxu0 0.0
    %1470 = vmatpush1.msra.mxu0 0.0
    %1471 = vmatprep.subr.mxu0 0.0
    %1472 = vmatpush1.msra.mxu0 %v1343
    %1473 = vmatprep.subr.mxu0 0.0
    %1474 = vmatpush2.msra.mxu0 0.0
    %1475 = vmatprep.subr.mxu0 0.0
    %1476 = vmatpush2.msra.mxu0 0.0
    %1477 = vmatprep.subr.mxu0 0.0
    %1478 = vmatpush2.msra.mxu0 0.0
    %1479 = vmatprep.subr.mxu0 0.0
    %1480 = vmatpush2.msra.mxu0 0.0
    %1481 = vmatprep.subr.mxu0 0.0
    %1482 = vmatpush2.msra.mxu0 0.0
    %1483 = vmatprep.subr.mxu0 0.0
    %1484 = vmatpush2.msra.mxu0 0.0
    %1485 = vmatprep.subr.mxu0 0.0
    %1486 = vmatpush2.msra.mxu0 0.0
    %1487 = vmatprep.subr.mxu0 0.0
    %1488 = vmatpush2.msra.mxu0 0.0
    %1489 = vmatprep.subr.mxu0 0.0
    %1490 = vmatpush2.msra.mxu0 0.0
    %1491 = vmatprep.subr.mxu0 0.0
    %1492 = vmatpush2.msra.mxu0 0.0
    %1493 = vmatprep.subr.mxu0 0.0
    %1494 = vmatpush2.msra.mxu0 0.0
    %1495 = vmatprep.subr.mxu0 0.0
    %1496 = vmatpush2.msra.mxu0 0.0
    %1497 = vmatprep.subr.mxu0 0.0
    %1498 = vmatpush2.msra.mxu0 0.0
    %1499 = vmatprep.subr.mxu0 0.0
    %1500 = vmatpush2.msra.mxu0 0.0
    %1501 = vmatprep.subr.mxu0 0.0
    %1502 = vmatpush2.msra.mxu0 0.0
    %1503 = vmatprep.subr.mxu0 0.0
    %1504 = vmatpush2.msra.mxu0 0.0
    %1505 = vmatprep.mubr.f32.mxu0 0.0
    %1506 = vmatmul.mubr.f32.gmra.mxu0 %v1436
    %v1507 = vpop.f32.mrf.mxu0
    %v1508 = vadd.f32 %v1427, %v1507
    %v1509 = vpop.f32.mrf.mxu0
    %1510 = vmatprep.mubr.f32.mxu0 0.0
    %1511 = vmatmul.mubr.f32.gmra.mxu0 %v1439
    %v1512 = vpop.f32.mrf.mxu0
    %v1513 = vadd.f32 %v1432, %v1512
    %v1514 = vpop.f32.mrf.mxu0
    %1515 = vdwg.mxu0
    %s1516 = scalar_lea.vmem %s9, 32
    %v1517 = vld [vmem:[%s1516] sm:$0xff]
    %v1518 = vld [vmem:[%s1516 + $0x8] sm:$0xff]
    %s1519 = scalar_lea.vmem %s9, 48
    %v1520 = vld [vmem:[%s1519] sm:$0xff]
    %v1521 = vld [vmem:[%s1519 + $0x8] sm:$0xff]
    %v1523 = vsel %vm1353, %v1520, 0
    %v1526 = vsel %vm1353, %v1521, 0
    %1528 = vmatprep.subr.mxu0 0.0
    %1529 = vmatpush1.msra.mxu0 0.0
    %1530 = vmatprep.subr.mxu0 0.0
    %1531 = vmatpush1.msra.mxu0 0.0
    %1532 = vmatprep.subr.mxu0 0.0
    %1533 = vmatpush1.msra.mxu0 0.0
    %1534 = vmatprep.subr.mxu0 0.0
    %1535 = vmatpush1.msra.mxu0 0.0
    %1536 = vmatprep.subr.mxu0 0.0
    %1537 = vmatpush1.msra.mxu0 0.0
    %1538 = vmatprep.subr.mxu0 0.0
    %1539 = vmatpush1.msra.mxu0 0.0
    %1540 = vmatprep.subr.mxu0 0.0
    %1541 = vmatpush1.msra.mxu0 0.0
    %1542 = vmatprep.subr.mxu0 0.0
    %1543 = vmatpush1.msra.mxu0 0.0
    %1544 = vmatprep.subr.mxu0 0.0
    %1545 = vmatpush1.msra.mxu0 0.0
    %1546 = vmatprep.subr.mxu0 0.0
    %1547 = vmatpush1.msra.mxu0 0.0
    %1548 = vmatprep.subr.mxu0 0.0
    %1549 = vmatpush1.msra.mxu0 0.0
    %1550 = vmatprep.subr.mxu0 0.0
    %1551 = vmatpush1.msra.mxu0 0.0
    %1552 = vmatprep.subr.mxu0 0.0
    %1553 = vmatpush1.msra.mxu0 0.0
    %1554 = vmatprep.subr.mxu0 0.0
    %1555 = vmatpush1.msra.mxu0 0.0
    %1556 = vmatprep.subr.mxu0 0.0
    %1557 = vmatpush1.msra.mxu0 0.0
    %1558 = vmatprep.subr.mxu0 0.0
    %1559 = vmatpush1.msra.mxu0 %v1351
    %1560 = vmatprep.subr.mxu0 0.0
    %1561 = vmatpush2.msra.mxu0 0.0
    %1562 = vmatprep.subr.mxu0 0.0
    %1563 = vmatpush2.msra.mxu0 0.0
    %1564 = vmatprep.subr.mxu0 0.0
    %1565 = vmatpush2.msra.mxu0 0.0
    %1566 = vmatprep.subr.mxu0 0.0
    %1567 = vmatpush2.msra.mxu0 0.0
    %1568 = vmatprep.subr.mxu0 0.0
    %1569 = vmatpush2.msra.mxu0 0.0
    %1570 = vmatprep.subr.mxu0 0.0
    %1571 = vmatpush2.msra.mxu0 0.0
    %1572 = vmatprep.subr.mxu0 0.0
    %1573 = vmatpush2.msra.mxu0 0.0
    %1574 = vmatprep.subr.mxu0 0.0
    %1575 = vmatpush2.msra.mxu0 0.0
    %1576 = vmatprep.subr.mxu0 0.0
    %1577 = vmatpush2.msra.mxu0 0.0
    %1578 = vmatprep.subr.mxu0 0.0
    %1579 = vmatpush2.msra.mxu0 0.0
    %1580 = vmatprep.subr.mxu0 0.0
    %1581 = vmatpush2.msra.mxu0 0.0
    %1582 = vmatprep.subr.mxu0 0.0
    %1583 = vmatpush2.msra.mxu0 0.0
    %1584 = vmatprep.subr.mxu0 0.0
    %1585 = vmatpush2.msra.mxu0 0.0
    %1586 = vmatprep.subr.mxu0 0.0
    %1587 = vmatpush2.msra.mxu0 0.0
    %1588 = vmatprep.subr.mxu0 0.0
    %1589 = vmatpush2.msra.mxu0 0.0
    %1590 = vmatprep.subr.mxu0 0.0
    %1591 = vmatpush2.msra.mxu0 0.0
    %1592 = vmatprep.mubr.f32.mxu0 0.0
    %1593 = vmatmul.mubr.f32.gmra.mxu0 %v1523
    %v1594 = vpop.f32.mrf.mxu0
    %v1595 = vadd.f32 0.0, %v1594
    %v1596 = vpop.f32.mrf.mxu0
    %1597 = vmatprep.mubr.f32.mxu0 0.0
    %1598 = vmatmul.mubr.f32.gmra.mxu0 %v1526
    %v1599 = vpop.f32.mrf.mxu0
    %v1600 = vadd.f32 0.0, %v1599
    %v1601 = vpop.f32.mrf.mxu0
    %1602 = vdwg.mxu0
    %v1604 = vsel %vm1353, %v1517, 0
    %v1607 = vsel %vm1353, %v1518, 0
    %1609 = vmatprep.subr.mxu0 0.0
    %1610 = vmatpush1.msra.mxu0 0.0
    %1611 = vmatprep.subr.mxu0 0.0
    %1612 = vmatpush1.msra.mxu0 0.0
    %1613 = vmatprep.subr.mxu0 0.0
    %1614 = vmatpush1.msra.mxu0 0.0
    %1615 = vmatprep.subr.mxu0 0.0
    %1616 = vmatpush1.msra.mxu0 0.0
    %1617 = vmatprep.subr.mxu0 0.0
    %1618 = vmatpush1.msra.mxu0 0.0
    %1619 = vmatprep.subr.mxu0 0.0
    %1620 = vmatpush1.msra.mxu0 0.0
    %1621 = vmatprep.subr.mxu0 0.0
    %1622 = vmatpush1.msra.mxu0 0.0
    %1623 = vmatprep.subr.mxu0 0.0
    %1624 = vmatpush1.msra.mxu0 0.0
    %1625 = vmatprep.subr.mxu0 0.0
    %1626 = vmatpush1.msra.mxu0 0.0
    %1627 = vmatprep.subr.mxu0 0.0
    %1628 = vmatpush1.msra.mxu0 0.0
    %1629 = vmatprep.subr.mxu0 0.0
    %1630 = vmatpush1.msra.mxu0 0.0
    %1631 = vmatprep.subr.mxu0 0.0
    %1632 = vmatpush1.msra.mxu0 0.0
    %1633 = vmatprep.subr.mxu0 0.0
    %1634 = vmatpush1.msra.mxu0 0.0
    %1635 = vmatprep.subr.mxu0 0.0
    %1636 = vmatpush1.msra.mxu0 0.0
    %1637 = vmatprep.subr.mxu0 0.0
    %1638 = vmatpush1.msra.mxu0 0.0
    %1639 = vmatprep.subr.mxu0 0.0
    %1640 = vmatpush1.msra.mxu0 %v1343
    %1641 = vmatprep.subr.mxu0 0.0
    %1642 = vmatpush2.msra.mxu0 0.0
    %1643 = vmatprep.subr.mxu0 0.0
    %1644 = vmatpush2.msra.mxu0 0.0
    %1645 = vmatprep.subr.mxu0 0.0
    %1646 = vmatpush2.msra.mxu0 0.0
    %1647 = vmatprep.subr.mxu0 0.0
    %1648 = vmatpush2.msra.mxu0 0.0
    %1649 = vmatprep.subr.mxu0 0.0
    %1650 = vmatpush2.msra.mxu0 0.0
    %1651 = vmatprep.subr.mxu0 0.0
    %1652 = vmatpush2.msra.mxu0 0.0
    %1653 = vmatprep.subr.mxu0 0.0
    %1654 = vmatpush2.msra.mxu0 0.0
    %1655 = vmatprep.subr.mxu0 0.0
    %1656 = vmatpush2.msra.mxu0 0.0
    %1657 = vmatprep.subr.mxu0 0.0
    %1658 = vmatpush2.msra.mxu0 0.0
    %1659 = vmatprep.subr.mxu0 0.0
    %1660 = vmatpush2.msra.mxu0 0.0
    %1661 = vmatprep.subr.mxu0 0.0
    %1662 = vmatpush2.msra.mxu0 0.0
    %1663 = vmatprep.subr.mxu0 0.0
    %1664 = vmatpush2.msra.mxu0 0.0
    %1665 = vmatprep.subr.mxu0 0.0
    %1666 = vmatpush2.msra.mxu0 0.0
    %1667 = vmatprep.subr.mxu0 0.0
    %1668 = vmatpush2.msra.mxu0 0.0
    %1669 = vmatprep.subr.mxu0 0.0
    %1670 = vmatpush2.msra.mxu0 0.0
    %1671 = vmatprep.subr.mxu0 0.0
    %1672 = vmatpush2.msra.mxu0 0.0
    %1673 = vmatprep.mubr.f32.mxu0 0.0
    %1674 = vmatmul.mubr.f32.gmra.mxu0 %v1604
    %v1675 = vpop.f32.mrf.mxu0
    %v1676 = vadd.f32 %v1595, %v1675
    %v1677 = vpop.f32.mrf.mxu0
    %1678 = vmatprep.mubr.f32.mxu0 0.0
    %1679 = vmatmul.mubr.f32.gmra.mxu0 %v1607
    %v1680 = vpop.f32.mrf.mxu0
    %v1681 = vadd.f32 %v1600, %v1680
    %v1682 = vpop.f32.mrf.mxu0
    %1683 = vdwg.mxu0
    %s1684 = scalar_lea.vmem %s9, 64
    %v1685 = vld [vmem:[%s1684] sm:$0xff]
    %v1686 = vld [vmem:[%s1684 + $0x8] sm:$0xff]
    %s1687 = scalar_lea.vmem %s9, 80
    %v1688 = vld [vmem:[%s1687] sm:$0xff]
    %v1689 = vld [vmem:[%s1687 + $0x8] sm:$0xff]
    %v1691 = vsel %vm1353, %v1688, 0
    %v1694 = vsel %vm1353, %v1689, 0
    %1696 = vmatprep.subr.mxu0 0.0
    %1697 = vmatpush1.msra.mxu0 0.0
    %1698 = vmatprep.subr.mxu0 0.0
    %1699 = vmatpush1.msra.mxu0 0.0
    %1700 = vmatprep.subr.mxu0 0.0
    %1701 = vmatpush1.msra.mxu0 0.0
    %1702 = vmatprep.subr.mxu0 0.0
    %1703 = vmatpush1.msra.mxu0 0.0
    %1704 = vmatprep.subr.mxu0 0.0
    %1705 = vmatpush1.msra.mxu0 0.0
    %1706 = vmatprep.subr.mxu0 0.0
    %1707 = vmatpush1.msra.mxu0 0.0
    %1708 = vmatprep.subr.mxu0 0.0
    %1709 = vmatpush1.msra.mxu0 0.0
    %1710 = vmatprep.subr.mxu0 0.0
    %1711 = vmatpush1.msra.mxu0 0.0
    %1712 = vmatprep.subr.mxu0 0.0
    %1713 = vmatpush1.msra.mxu0 0.0
    %1714 = vmatprep.subr.mxu0 0.0
    %1715 = vmatpush1.msra.mxu0 0.0
    %1716 = vmatprep.subr.mxu0 0.0
    %1717 = vmatpush1.msra.mxu0 0.0
    %1718 = vmatprep.subr.mxu0 0.0
    %1719 = vmatpush1.msra.mxu0 0.0
    %1720 = vmatprep.subr.mxu0 0.0
    %1721 = vmatpush1.msra.mxu0 0.0
    %1722 = vmatprep.subr.mxu0 0.0
    %1723 = vmatpush1.msra.mxu0 0.0
    %1724 = vmatprep.subr.mxu0 0.0
    %1725 = vmatpush1.msra.mxu0 0.0
    %1726 = vmatprep.subr.mxu0 0.0
    %1727 = vmatpush1.msra.mxu0 %v1351
    %1728 = vmatprep.subr.mxu0 0.0
    %1729 = vmatpush2.msra.mxu0 0.0
    %1730 = vmatprep.subr.mxu0 0.0
    %1731 = vmatpush2.msra.mxu0 0.0
    %1732 = vmatprep.subr.mxu0 0.0
    %1733 = vmatpush2.msra.mxu0 0.0
    %1734 = vmatprep.subr.mxu0 0.0
    %1735 = vmatpush2.msra.mxu0 0.0
    %1736 = vmatprep.subr.mxu0 0.0
    %1737 = vmatpush2.msra.mxu0 0.0
    %1738 = vmatprep.subr.mxu0 0.0
    %1739 = vmatpush2.msra.mxu0 0.0
    %1740 = vmatprep.subr.mxu0 0.0
    %1741 = vmatpush2.msra.mxu0 0.0
    %1742 = vmatprep.subr.mxu0 0.0
    %1743 = vmatpush2.msra.mxu0 0.0
    %1744 = vmatprep.subr.mxu0 0.0
    %1745 = vmatpush2.msra.mxu0 0.0
    %1746 = vmatprep.subr.mxu0 0.0
    %1747 = vmatpush2.msra.mxu0 0.0
    %1748 = vmatprep.subr.mxu0 0.0
    %1749 = vmatpush2.msra.mxu0 0.0
    %1750 = vmatprep.subr.mxu0 0.0
    %1751 = vmatpush2.msra.mxu0 0.0
    %1752 = vmatprep.subr.mxu0 0.0
    %1753 = vmatpush2.msra.mxu0 0.0
    %1754 = vmatprep.subr.mxu0 0.0
    %1755 = vmatpush2.msra.mxu0 0.0
    %1756 = vmatprep.subr.mxu0 0.0
    %1757 = vmatpush2.msra.mxu0 0.0
    %1758 = vmatprep.subr.mxu0 0.0
    %1759 = vmatpush2.msra.mxu0 0.0
    %1760 = vmatprep.mubr.f32.mxu0 0.0
    %1761 = vmatmul.mubr.f32.gmra.mxu0 %v1691
    %v1762 = vpop.f32.mrf.mxu0
    %v1763 = vadd.f32 0.0, %v1762
    %v1764 = vpop.f32.mrf.mxu0
    %1765 = vmatprep.mubr.f32.mxu0 0.0
    %1766 = vmatmul.mubr.f32.gmra.mxu0 %v1694
    %v1767 = vpop.f32.mrf.mxu0
    %v1768 = vadd.f32 0.0, %v1767
    %v1769 = vpop.f32.mrf.mxu0
    %1770 = vdwg.mxu0
    %v1772 = vsel %vm1353, %v1685, 0
    %v1775 = vsel %vm1353, %v1686, 0
    %1777 = vmatprep.subr.mxu0 0.0
    %1778 = vmatpush1.msra.mxu0 0.0
    %1779 = vmatprep.subr.mxu0 0.0
    %1780 = vmatpush1.msra.mxu0 0.0
    %1781 = vmatprep.subr.mxu0 0.0
    %1782 = vmatpush1.msra.mxu0 0.0
    %1783 = vmatprep.subr.mxu0 0.0
    %1784 = vmatpush1.msra.mxu0 0.0
    %1785 = vmatprep.subr.mxu0 0.0
    %1786 = vmatpush1.msra.mxu0 0.0
    %1787 = vmatprep.subr.mxu0 0.0
    %1788 = vmatpush1.msra.mxu0 0.0
    %1789 = vmatprep.subr.mxu0 0.0
    %1790 = vmatpush1.msra.mxu0 0.0
    %1791 = vmatprep.subr.mxu0 0.0
    %1792 = vmatpush1.msra.mxu0 0.0
    %1793 = vmatprep.subr.mxu0 0.0
    %1794 = vmatpush1.msra.mxu0 0.0
    %1795 = vmatprep.subr.mxu0 0.0
    %1796 = vmatpush1.msra.mxu0 0.0
    %1797 = vmatprep.subr.mxu0 0.0
    %1798 = vmatpush1.msra.mxu0 0.0
    %1799 = vmatprep.subr.mxu0 0.0
    %1800 = vmatpush1.msra.mxu0 0.0
    %1801 = vmatprep.subr.mxu0 0.0
    %1802 = vmatpush1.msra.mxu0 0.0
    %1803 = vmatprep.subr.mxu0 0.0
    %1804 = vmatpush1.msra.mxu0 0.0
    %1805 = vmatprep.subr.mxu0 0.0
    %1806 = vmatpush1.msra.mxu0 0.0
    %1807 = vmatprep.subr.mxu0 0.0
    %1808 = vmatpush1.msra.mxu0 %v1343
    %1809 = vmatprep.subr.mxu0 0.0
    %1810 = vmatpush2.msra.mxu0 0.0
    %1811 = vmatprep.subr.mxu0 0.0
    %1812 = vmatpush2.msra.mxu0 0.0
    %1813 = vmatprep.subr.mxu0 0.0
    %1814 = vmatpush2.msra.mxu0 0.0
    %1815 = vmatprep.subr.mxu0 0.0
    %1816 = vmatpush2.msra.mxu0 0.0
    %1817 = vmatprep.subr.mxu0 0.0
    %1818 = vmatpush2.msra.mxu0 0.0
    %1819 = vmatprep.subr.mxu0 0.0
    %1820 = vmatpush2.msra.mxu0 0.0
    %1821 = vmatprep.subr.mxu0 0.0
    %1822 = vmatpush2.msra.mxu0 0.0
    %1823 = vmatprep.subr.mxu0 0.0
    %1824 = vmatpush2.msra.mxu0 0.0
    %1825 = vmatprep.subr.mxu0 0.0
    %1826 = vmatpush2.msra.mxu0 0.0
    %1827 = vmatprep.subr.mxu0 0.0
    %1828 = vmatpush2.msra.mxu0 0.0
    %1829 = vmatprep.subr.mxu0 0.0
    %1830 = vmatpush2.msra.mxu0 0.0
    %1831 = vmatprep.subr.mxu0 0.0
    %1832 = vmatpush2.msra.mxu0 0.0
    %1833 = vmatprep.subr.mxu0 0.0
    %1834 = vmatpush2.msra.mxu0 0.0
    %1835 = vmatprep.subr.mxu0 0.0
    %1836 = vmatpush2.msra.mxu0 0.0
    %1837 = vmatprep.subr.mxu0 0.0
    %1838 = vmatpush2.msra.mxu0 0.0
    %1839 = vmatprep.subr.mxu0 0.0
    %1840 = vmatpush2.msra.mxu0 0.0
    %1841 = vmatprep.mubr.f32.mxu0 0.0
    %1842 = vmatmul.mubr.f32.gmra.mxu0 %v1772
    %v1843 = vpop.f32.mrf.mxu0
    %v1844 = vadd.f32 %v1763, %v1843
    %v1845 = vpop.f32.mrf.mxu0
    %1846 = vmatprep.mubr.f32.mxu0 0.0
    %1847 = vmatmul.mubr.f32.gmra.mxu0 %v1775
    %v1848 = vpop.f32.mrf.mxu0
    %v1849 = vadd.f32 %v1768, %v1848
    %v1850 = vpop.f32.mrf.mxu0
    %1851 = vdwg.mxu0
    %1854 = vrot.lane.b32.xlu0 %v1676, 64
    %v1855 = vpop.permute.xlu0 %1854
    %1856 = vrot.lane.b32.xlu0 %v1681, 64
    %v1857 = vpop.permute.xlu0 %1856
    %v1860 = vsel %vm127, %v1508, %v1855
    %v1861 = vsel %vm127, %v1513, %v1857
    %v1862 = vld [vmem:[#allocation6] sm:$0xff]
    %v1863 = vld [vmem:[#allocation6 + $0x8] sm:$0xff]
    %v1864 = vld [vmem:[#allocation6 + $0x10] sm:$0xff]
    %v1865 = vld [vmem:[#allocation6 + $0x18] sm:$0xff]
    %v1866 = vld [vmem:[#allocation6 + $0x20] sm:$0xff]
    %v1867 = vld [vmem:[#allocation6 + $0x28] sm:$0xff]
    %v1868 = vld [vmem:[#allocation6 + $0x30] sm:$0xff]
    %v1869 = vld [vmem:[#allocation6 + $0x38] sm:$0xff]
    %v1870 = vld [vmem:[#allocation6 + $0x40] sm:$0xff]
    %v1871 = vld [vmem:[#allocation6 + $0x48] sm:$0xff]
    %v1872 = vld [vmem:[#allocation6 + $0x50] sm:$0xff]
    %v1873 = vld [vmem:[#allocation6 + $0x58] sm:$0xff]
    %v1874 = vld [vmem:[#allocation6 + $0x60] sm:$0xff]
    %v1875 = vld [vmem:[#allocation6 + $0x68] sm:$0xff]
    %v1876 = vld [vmem:[#allocation6 + $0x70] sm:$0xff]
    %v1877 = vld [vmem:[#allocation6 + $0x78] sm:$0xff]
    %v1878 = vld [vmem:[#allocation6 + $0x80] sm:$0xff]
    %v1879 = vld [vmem:[#allocation6 + $0x88] sm:$0xff]
    %v1880 = vld [vmem:[#allocation6 + $0x90] sm:$0xff]
    %v1881 = vld [vmem:[#allocation6 + $0x98] sm:$0xff]
    %v1882 = vld [vmem:[#allocation6 + $0xa0] sm:$0xff]
    %v1883 = vld [vmem:[#allocation6 + $0xa8] sm:$0xff]
    %v1884 = vld [vmem:[#allocation6 + $0xb0] sm:$0xff]
    %v1885 = vld [vmem:[#allocation6 + $0xb8] sm:$0xff]
    %v1886 = vld [vmem:[%s11] sm:$0x1]
    %v1888 = vlaneseq
    %v1889 = vshrl.u32 %v1888, 7
    %v1890 = vsub.s32 0, %v1889
    %v1891 = vrot.slane %v1886, %v1890
    %v1894 = vsel %vm127, %v1844, 0
    %v1897 = vsel %vm127, %v1849, 0
    %1899 = vmatprep.subr.mxu0 0.0
    %1900 = vmatpush1.msra.mxu0 %v1877
    %1901 = vmatprep.subr.mxu0 0.0
    %1902 = vmatpush1.msra.mxu0 %v1876
    %1903 = vmatprep.subr.mxu0 0.0
    %1904 = vmatpush1.msra.mxu0 %v1875
    %1905 = vmatprep.subr.mxu0 0.0
    %1906 = vmatpush1.msra.mxu0 %v1874
    %1907 = vmatprep.subr.mxu0 0.0
    %1908 = vmatpush1.msra.mxu0 %v1873
    %1909 = vmatprep.subr.mxu0 0.0
    %1910 = vmatpush1.msra.mxu0 %v1872
    %1911 = vmatprep.subr.mxu0 0.0
    %1912 = vmatpush1.msra.mxu0 %v1871
    %1913 = vmatprep.subr.mxu0 0.0
    %1914 = vmatpush1.msra.mxu0 %v1870
    %1915 = vmatprep.subr.mxu0 0.0
    %1916 = vmatpush1.msra.mxu0 %v1869
    %1917 = vmatprep.subr.mxu0 0.0
    %1918 = vmatpush1.msra.mxu0 %v1868
    %1919 = vmatprep.subr.mxu0 0.0
    %1920 = vmatpush1.msra.mxu0 %v1867
    %1921 = vmatprep.subr.mxu0 0.0
    %1922 = vmatpush1.msra.mxu0 %v1866
    %1923 = vmatprep.subr.mxu0 0.0
    %1924 = vmatpush1.msra.mxu0 %v1865
    %1925 = vmatprep.subr.mxu0 0.0
    %1926 = vmatpush1.msra.mxu0 %v1864
    %1927 = vmatprep.subr.mxu0 0.0
    %1928 = vmatpush1.msra.mxu0 %v1863
    %1929 = vmatprep.subr.mxu0 0.0
    %1930 = vmatpush1.msra.mxu0 %v1862
    %1931 = vmatprep.subr.mxu0 0.0
    %1932 = vmatpush2.msra.mxu0 0.0
    %1933 = vmatprep.subr.mxu0 0.0
    %1934 = vmatpush2.msra.mxu0 0.0
    %1935 = vmatprep.subr.mxu0 0.0
    %1936 = vmatpush2.msra.mxu0 0.0
    %1937 = vmatprep.subr.mxu0 0.0
    %1938 = vmatpush2.msra.mxu0 0.0
    %1939 = vmatprep.subr.mxu0 0.0
    %1940 = vmatpush2.msra.mxu0 0.0
    %1941 = vmatprep.subr.mxu0 0.0
    %1942 = vmatpush2.msra.mxu0 0.0
    %1943 = vmatprep.subr.mxu0 0.0
    %1944 = vmatpush2.msra.mxu0 0.0
    %1945 = vmatprep.subr.mxu0 0.0
    %1946 = vmatpush2.msra.mxu0 0.0
    %1947 = vmatprep.subr.mxu0 0.0
    %1948 = vmatpush2.msra.mxu0 %v1885
    %1949 = vmatprep.subr.mxu0 0.0
    %1950 = vmatpush2.msra.mxu0 %v1884
    %1951 = vmatprep.subr.mxu0 0.0
    %1952 = vmatpush2.msra.mxu0 %v1883
    %1953 = vmatprep.subr.mxu0 0.0
    %1954 = vmatpush2.msra.mxu0 %v1882
    %1955 = vmatprep.subr.mxu0 0.0
    %1956 = vmatpush2.msra.mxu0 %v1881
    %1957 = vmatprep.subr.mxu0 0.0
    %1958 = vmatpush2.msra.mxu0 %v1880
    %1959 = vmatprep.subr.mxu0 0.0
    %1960 = vmatpush2.msra.mxu0 %v1879
    %1961 = vmatprep.subr.mxu0 0.0
    %1962 = vmatpush2.msra.mxu0 %v1878
    %1963 = vmatprep.mubr.f32.mxu0 %v1894
    %1964 = vmatmul.mubr.f32.gmra.mxu0 %v1860
    %v1965 = vpop.f32.mrf.mxu0
    %v1966 = vadd.f32 %v1891, %v1965
    %v1967 = vpop.f32.mrf.mxu0
    %1968 = vmatprep.mubr.f32.mxu0 %v1897
    %1969 = vmatmul.mubr.f32.gmra.mxu0 %v1861
    %v1970 = vpop.f32.mrf.mxu0
    %v1971 = vadd.f32 %v1891, %v1970
    %v1972 = vpop.f32.mrf.mxu0
    %1973 = vdwg.mxu0
    %vm1974 = vcmp.ge.f32.partialorder %v1966, 0.0
    %vm1975 = vcmp.ge.f32.partialorder %v1971, 0.0
    %v1976 = vmul.f32 %v1966, 0.01
    %v1977 = vmul.f32 %v1971, 0.01
    %v1978 = vsel %vm1974, %v1966, %v1976
    %v1979 = vsel %vm1975, %v1971, %v1977
    %v1980 = vld [vmem:[%s12] sm:$0xff]
    %v1981 = vld [vmem:[%s12 + $0x8] sm:$0xff]
    %v1982 = vld [vmem:[%s12 + $0x10] sm:$0xff]
    %v1983 = vld [vmem:[%s12 + $0x18] sm:$0xff]
    %s1984 = scalar_lea.vmem %s12, 32
    %v1985 = vld [vmem:[%s1984] sm:$0xff]
    %v1986 = vld [vmem:[%s1984 + $0x8] sm:$0xff]
    %v1987 = vld [vmem:[%s1984 + $0x10] sm:$0xff]
    %v1988 = vld [vmem:[%s1984 + $0x18] sm:$0xff]
    %1991 = vrot.lane.b32.xlu0 %v1978, 64
    %v1992 = vpop.permute.xlu0 %1991
    %1993 = vrot.lane.b32.xlu0 %v1979, 64
    %v1994 = vpop.permute.xlu0 %1993
    %vm1997 = vcmask 130048
    %v1999 = vsel %vm1997, %v1985, 0
    %v2002 = vsel %vm1997, %v1986, 0
    %v2005 = vsel %vm1997, %v1987, 0
    %v2008 = vsel %vm1997, %v1988, 0
    %2010 = vmatprep.subr.mxu0 0.0
    %2011 = vmatpush1.msra.mxu0 0.0
    %2012 = vmatprep.subr.mxu0 0.0
    %2013 = vmatpush1.msra.mxu0 0.0
    %2014 = vmatprep.subr.mxu0 0.0
    %2015 = vmatpush1.msra.mxu0 0.0
    %2016 = vmatprep.subr.mxu0 0.0
    %2017 = vmatpush1.msra.mxu0 0.0
    %2018 = vmatprep.subr.mxu0 0.0
    %2019 = vmatpush1.msra.mxu0 0.0
    %2020 = vmatprep.subr.mxu0 0.0
    %2021 = vmatpush1.msra.mxu0 0.0
    %2022 = vmatprep.subr.mxu0 0.0
    %2023 = vmatpush1.msra.mxu0 0.0
    %2024 = vmatprep.subr.mxu0 0.0
    %2025 = vmatpush1.msra.mxu0 0.0
    %2026 = vmatprep.subr.mxu0 0.0
    %2027 = vmatpush1.msra.mxu0 0.0
    %2028 = vmatprep.subr.mxu0 0.0
    %2029 = vmatpush1.msra.mxu0 0.0
    %2030 = vmatprep.subr.mxu0 0.0
    %2031 = vmatpush1.msra.mxu0 0.0
    %2032 = vmatprep.subr.mxu0 0.0
    %2033 = vmatpush1.msra.mxu0 0.0
    %2034 = vmatprep.subr.mxu0 0.0
    %2035 = vmatpush1.msra.mxu0 0.0
    %2036 = vmatprep.subr.mxu0 0.0
    %2037 = vmatpush1.msra.mxu0 0.0
    %2038 = vmatprep.subr.mxu0 0.0
    %2039 = vmatpush1.msra.mxu0 %v1994
    %2040 = vmatprep.subr.mxu0 0.0
    %2041 = vmatpush1.msra.mxu0 %v1992
    %2042 = vmatprep.subr.mxu0 0.0
    %2043 = vmatpush2.msra.mxu0 0.0
    %2044 = vmatprep.subr.mxu0 0.0
    %2045 = vmatpush2.msra.mxu0 0.0
    %2046 = vmatprep.subr.mxu0 0.0
    %2047 = vmatpush2.msra.mxu0 0.0
    %2048 = vmatprep.subr.mxu0 0.0
    %2049 = vmatpush2.msra.mxu0 0.0
    %2050 = vmatprep.subr.mxu0 0.0
    %2051 = vmatpush2.msra.mxu0 0.0
    %2052 = vmatprep.subr.mxu0 0.0
    %2053 = vmatpush2.msra.mxu0 0.0
    %2054 = vmatprep.subr.mxu0 0.0
    %2055 = vmatpush2.msra.mxu0 0.0
    %2056 = vmatprep.subr.mxu0 0.0
    %2057 = vmatpush2.msra.mxu0 0.0
    %2058 = vmatprep.subr.mxu0 0.0
    %2059 = vmatpush2.msra.mxu0 0.0
    %2060 = vmatprep.subr.mxu0 0.0
    %2061 = vmatpush2.msra.mxu0 0.0
    %2062 = vmatprep.subr.mxu0 0.0
    %2063 = vmatpush2.msra.mxu0 0.0
    %2064 = vmatprep.subr.mxu0 0.0
    %2065 = vmatpush2.msra.mxu0 0.0
    %2066 = vmatprep.subr.mxu0 0.0
    %2067 = vmatpush2.msra.mxu0 0.0
    %2068 = vmatprep.subr.mxu0 0.0
    %2069 = vmatpush2.msra.mxu0 0.0
    %2070 = vmatprep.subr.mxu0 0.0
    %2071 = vmatpush2.msra.mxu0 0.0
    %2072 = vmatprep.subr.mxu0 0.0
    %2073 = vmatpush2.msra.mxu0 0.0
    %2074 = vmatprep.mubr.f32.mxu0 0.0
    %2075 = vmatmul.mubr.f32.gmra.mxu0 %v1999
    %v2076 = vpop.f32.mrf.mxu0
    %v2077 = vadd.f32 0.0, %v2076
    %v2078 = vpop.f32.mrf.mxu0
    %2079 = vmatprep.mubr.f32.mxu0 0.0
    %2080 = vmatmul.mubr.f32.gmra.mxu0 %v2002
    %v2081 = vpop.f32.mrf.mxu0
    %v2082 = vadd.f32 0.0, %v2081
    %v2083 = vpop.f32.mrf.mxu0
    %2084 = vmatprep.mubr.f32.mxu0 0.0
    %2085 = vmatmul.mubr.f32.gmra.mxu0 %v2005
    %v2086 = vpop.f32.mrf.mxu0
    %v2087 = vadd.f32 0.0, %v2086
    %v2088 = vpop.f32.mrf.mxu0
    %2089 = vmatprep.mubr.f32.mxu0 0.0
    %2090 = vmatmul.mubr.f32.gmra.mxu0 %v2008
    %v2091 = vpop.f32.mrf.mxu0
    %v2092 = vadd.f32 0.0, %v2091
    %v2093 = vpop.f32.mrf.mxu0
    %2094 = vdwg.mxu0
    %v2096 = vsel %vm1997, %v1980, 0
    %v2099 = vsel %vm1997, %v1981, 0
    %v2102 = vsel %vm1997, %v1982, 0
    %v2105 = vsel %vm1997, %v1983, 0
    %2107 = vmatprep.subr.mxu0 0.0
    %2108 = vmatpush1.msra.mxu0 0.0
    %2109 = vmatprep.subr.mxu0 0.0
    %2110 = vmatpush1.msra.mxu0 0.0
    %2111 = vmatprep.subr.mxu0 0.0
    %2112 = vmatpush1.msra.mxu0 0.0
    %2113 = vmatprep.subr.mxu0 0.0
    %2114 = vmatpush1.msra.mxu0 0.0
    %2115 = vmatprep.subr.mxu0 0.0
    %2116 = vmatpush1.msra.mxu0 0.0
    %2117 = vmatprep.subr.mxu0 0.0
    %2118 = vmatpush1.msra.mxu0 0.0
    %2119 = vmatprep.subr.mxu0 0.0
    %2120 = vmatpush1.msra.mxu0 0.0
    %2121 = vmatprep.subr.mxu0 0.0
    %2122 = vmatpush1.msra.mxu0 0.0
    %2123 = vmatprep.subr.mxu0 0.0
    %2124 = vmatpush1.msra.mxu0 0.0
    %2125 = vmatprep.subr.mxu0 0.0
    %2126 = vmatpush1.msra.mxu0 0.0
    %2127 = vmatprep.subr.mxu0 0.0
    %2128 = vmatpush1.msra.mxu0 0.0
    %2129 = vmatprep.subr.mxu0 0.0
    %2130 = vmatpush1.msra.mxu0 0.0
    %2131 = vmatprep.subr.mxu0 0.0
    %2132 = vmatpush1.msra.mxu0 0.0
    %2133 = vmatprep.subr.mxu0 0.0
    %2134 = vmatpush1.msra.mxu0 0.0
    %2135 = vmatprep.subr.mxu0 0.0
    %2136 = vmatpush1.msra.mxu0 %v1979
    %2137 = vmatprep.subr.mxu0 0.0
    %2138 = vmatpush1.msra.mxu0 %v1978
    %2139 = vmatprep.subr.mxu0 0.0
    %2140 = vmatpush2.msra.mxu0 0.0
    %2141 = vmatprep.subr.mxu0 0.0
    %2142 = vmatpush2.msra.mxu0 0.0
    %2143 = vmatprep.subr.mxu0 0.0
    %2144 = vmatpush2.msra.mxu0 0.0
    %2145 = vmatprep.subr.mxu0 0.0
    %2146 = vmatpush2.msra.mxu0 0.0
    %2147 = vmatprep.subr.mxu0 0.0
    %2148 = vmatpush2.msra.mxu0 0.0
    %2149 = vmatprep.subr.mxu0 0.0
    %2150 = vmatpush2.msra.mxu0 0.0
    %2151 = vmatprep.subr.mxu0 0.0
    %2152 = vmatpush2.msra.mxu0 0.0
    %2153 = vmatprep.subr.mxu0 0.0
    %2154 = vmatpush2.msra.mxu0 0.0
    %2155 = vmatprep.subr.mxu0 0.0
    %2156 = vmatpush2.msra.mxu0 0.0
    %2157 = vmatprep.subr.mxu0 0.0
    %2158 = vmatpush2.msra.mxu0 0.0
    %2159 = vmatprep.subr.mxu0 0.0
    %2160 = vmatpush2.msra.mxu0 0.0
    %2161 = vmatprep.subr.mxu0 0.0
    %2162 = vmatpush2.msra.mxu0 0.0
    %2163 = vmatprep.subr.mxu0 0.0
    %2164 = vmatpush2.msra.mxu0 0.0
    %2165 = vmatprep.subr.mxu0 0.0
    %2166 = vmatpush2.msra.mxu0 0.0
    %2167 = vmatprep.subr.mxu0 0.0
    %2168 = vmatpush2.msra.mxu0 0.0
    %2169 = vmatprep.subr.mxu0 0.0
    %2170 = vmatpush2.msra.mxu0 0.0
    %2171 = vmatprep.mubr.f32.mxu0 0.0
    %2172 = vmatmul.mubr.f32.gmra.mxu0 %v2096
    %v2173 = vpop.f32.mrf.mxu0
    %v2174 = vadd.f32 %v2077, %v2173
    %v2175 = vpop.f32.mrf.mxu0
    %2176 = vmatprep.mubr.f32.mxu0 0.0
    %2177 = vmatmul.mubr.f32.gmra.mxu0 %v2099
    %v2178 = vpop.f32.mrf.mxu0
    %v2179 = vadd.f32 %v2082, %v2178
    %v2180 = vpop.f32.mrf.mxu0
    %2181 = vmatprep.mubr.f32.mxu0 0.0
    %2182 = vmatmul.mubr.f32.gmra.mxu0 %v2102
    %v2183 = vpop.f32.mrf.mxu0
    %v2184 = vadd.f32 %v2087, %v2183
    %v2185 = vpop.f32.mrf.mxu0
    %2186 = vmatprep.mubr.f32.mxu0 0.0
    %2187 = vmatmul.mubr.f32.gmra.mxu0 %v2105
    %v2188 = vpop.f32.mrf.mxu0
    %v2189 = vadd.f32 %v2092, %v2188
    %v2190 = vpop.f32.mrf.mxu0
    %2191 = vdwg.mxu0
    %s2192 = scalar_lea.vmem %s12, 64
    %v2193 = vld [vmem:[%s2192] sm:$0xff]
    %v2194 = vld [vmem:[%s2192 + $0x8] sm:$0xff]
    %v2195 = vld [vmem:[%s2192 + $0x10] sm:$0xff]
    %v2196 = vld [vmem:[%s2192 + $0x18] sm:$0xff]
    %s2197 = scalar_lea.vmem %s12, 96
    %v2198 = vld [vmem:[%s2197] sm:$0xff]
    %v2199 = vld [vmem:[%s2197 + $0x8] sm:$0xff]
    %v2200 = vld [vmem:[%s2197 + $0x10] sm:$0xff]
    %v2201 = vld [vmem:[%s2197 + $0x18] sm:$0xff]
    %v2203 = vsel %vm1997, %v2198, 0
    %v2206 = vsel %vm1997, %v2199, 0
    %v2209 = vsel %vm1997, %v2200, 0
    %v2212 = vsel %vm1997, %v2201, 0
    %2214 = vmatprep.subr.mxu0 0.0
    %2215 = vmatpush1.msra.mxu0 0.0
    %2216 = vmatprep.subr.mxu0 0.0
    %2217 = vmatpush1.msra.mxu0 0.0
    %2218 = vmatprep.subr.mxu0 0.0
    %2219 = vmatpush1.msra.mxu0 0.0
    %2220 = vmatprep.subr.mxu0 0.0
    %2221 = vmatpush1.msra.mxu0 0.0
    %2222 = vmatprep.subr.mxu0 0.0
    %2223 = vmatpush1.msra.mxu0 0.0
    %2224 = vmatprep.subr.mxu0 0.0
    %2225 = vmatpush1.msra.mxu0 0.0
    %2226 = vmatprep.subr.mxu0 0.0
    %2227 = vmatpush1.msra.mxu0 0.0
    %2228 = vmatprep.subr.mxu0 0.0
    %2229 = vmatpush1.msra.mxu0 0.0
    %2230 = vmatprep.subr.mxu0 0.0
    %2231 = vmatpush1.msra.mxu0 0.0
    %2232 = vmatprep.subr.mxu0 0.0
    %2233 = vmatpush1.msra.mxu0 0.0
    %2234 = vmatprep.subr.mxu0 0.0
    %2235 = vmatpush1.msra.mxu0 0.0
    %2236 = vmatprep.subr.mxu0 0.0
    %2237 = vmatpush1.msra.mxu0 0.0
    %2238 = vmatprep.subr.mxu0 0.0
    %2239 = vmatpush1.msra.mxu0 0.0
    %2240 = vmatprep.subr.mxu0 0.0
    %2241 = vmatpush1.msra.mxu0 0.0
    %2242 = vmatprep.subr.mxu0 0.0
    %2243 = vmatpush1.msra.mxu0 %v1994
    %2244 = vmatprep.subr.mxu0 0.0
    %2245 = vmatpush1.msra.mxu0 %v1992
    %2246 = vmatprep.subr.mxu0 0.0
    %2247 = vmatpush2.msra.mxu0 0.0
    %2248 = vmatprep.subr.mxu0 0.0
    %2249 = vmatpush2.msra.mxu0 0.0
    %2250 = vmatprep.subr.mxu0 0.0
    %2251 = vmatpush2.msra.mxu0 0.0
    %2252 = vmatprep.subr.mxu0 0.0
    %2253 = vmatpush2.msra.mxu0 0.0
    %2254 = vmatprep.subr.mxu0 0.0
    %2255 = vmatpush2.msra.mxu0 0.0
    %2256 = vmatprep.subr.mxu0 0.0
    %2257 = vmatpush2.msra.mxu0 0.0
    %2258 = vmatprep.subr.mxu0 0.0
    %2259 = vmatpush2.msra.mxu0 0.0
    %2260 = vmatprep.subr.mxu0 0.0
    %2261 = vmatpush2.msra.mxu0 0.0
    %2262 = vmatprep.subr.mxu0 0.0
    %2263 = vmatpush2.msra.mxu0 0.0
    %2264 = vmatprep.subr.mxu0 0.0
    %2265 = vmatpush2.msra.mxu0 0.0
    %2266 = vmatprep.subr.mxu0 0.0
    %2267 = vmatpush2.msra.mxu0 0.0
    %2268 = vmatprep.subr.mxu0 0.0
    %2269 = vmatpush2.msra.mxu0 0.0
    %2270 = vmatprep.subr.mxu0 0.0
    %2271 = vmatpush2.msra.mxu0 0.0
    %2272 = vmatprep.subr.mxu0 0.0
    %2273 = vmatpush2.msra.mxu0 0.0
    %2274 = vmatprep.subr.mxu0 0.0
    %2275 = vmatpush2.msra.mxu0 0.0
    %2276 = vmatprep.subr.mxu0 0.0
    %2277 = vmatpush2.msra.mxu0 0.0
    %2278 = vmatprep.mubr.f32.mxu0 0.0
    %2279 = vmatmul.mubr.f32.gmra.mxu0 %v2203
    %v2280 = vpop.f32.mrf.mxu0
    %v2281 = vadd.f32 0.0, %v2280
    %v2282 = vpop.f32.mrf.mxu0
    %2283 = vmatprep.mubr.f32.mxu0 0.0
    %2284 = vmatmul.mubr.f32.gmra.mxu0 %v2206
    %v2285 = vpop.f32.mrf.mxu0
    %v2286 = vadd.f32 0.0, %v2285
    %v2287 = vpop.f32.mrf.mxu0
    %2288 = vmatprep.mubr.f32.mxu0 0.0
    %2289 = vmatmul.mubr.f32.gmra.mxu0 %v2209
    %v2290 = vpop.f32.mrf.mxu0
    %v2291 = vadd.f32 0.0, %v2290
    %v2292 = vpop.f32.mrf.mxu0
    %2293 = vmatprep.mubr.f32.mxu0 0.0
    %2294 = vmatmul.mubr.f32.gmra.mxu0 %v2212
    %v2295 = vpop.f32.mrf.mxu0
    %v2296 = vadd.f32 0.0, %v2295
    %v2297 = vpop.f32.mrf.mxu0
    %2298 = vdwg.mxu0
    %v2300 = vsel %vm1997, %v2193, 0
    %v2303 = vsel %vm1997, %v2194, 0
    %v2306 = vsel %vm1997, %v2195, 0
    %v2309 = vsel %vm1997, %v2196, 0
    %2311 = vmatprep.subr.mxu0 0.0
    %2312 = vmatpush1.msra.mxu0 0.0
    %2313 = vmatprep.subr.mxu0 0.0
    %2314 = vmatpush1.msra.mxu0 0.0
    %2315 = vmatprep.subr.mxu0 0.0
    %2316 = vmatpush1.msra.mxu0 0.0
    %2317 = vmatprep.subr.mxu0 0.0
    %2318 = vmatpush1.msra.mxu0 0.0
    %2319 = vmatprep.subr.mxu0 0.0
    %2320 = vmatpush1.msra.mxu0 0.0
    %2321 = vmatprep.subr.mxu0 0.0
    %2322 = vmatpush1.msra.mxu0 0.0
    %2323 = vmatprep.subr.mxu0 0.0
    %2324 = vmatpush1.msra.mxu0 0.0
    %2325 = vmatprep.subr.mxu0 0.0
    %2326 = vmatpush1.msra.mxu0 0.0
    %2327 = vmatprep.subr.mxu0 0.0
    %2328 = vmatpush1.msra.mxu0 0.0
    %2329 = vmatprep.subr.mxu0 0.0
    %2330 = vmatpush1.msra.mxu0 0.0
    %2331 = vmatprep.subr.mxu0 0.0
    %2332 = vmatpush1.msra.mxu0 0.0
    %2333 = vmatprep.subr.mxu0 0.0
    %2334 = vmatpush1.msra.mxu0 0.0
    %2335 = vmatprep.subr.mxu0 0.0
    %2336 = vmatpush1.msra.mxu0 0.0
    %2337 = vmatprep.subr.mxu0 0.0
    %2338 = vmatpush1.msra.mxu0 0.0
    %2339 = vmatprep.subr.mxu0 0.0
    %2340 = vmatpush1.msra.mxu0 %v1979
    %2341 = vmatprep.subr.mxu0 0.0
    %2342 = vmatpush1.msra.mxu0 %v1978
    %2343 = vmatprep.subr.mxu0 0.0
    %2344 = vmatpush2.msra.mxu0 0.0
    %2345 = vmatprep.subr.mxu0 0.0
    %2346 = vmatpush2.msra.mxu0 0.0
    %2347 = vmatprep.subr.mxu0 0.0
    %2348 = vmatpush2.msra.mxu0 0.0
    %2349 = vmatprep.subr.mxu0 0.0
    %2350 = vmatpush2.msra.mxu0 0.0
    %2351 = vmatprep.subr.mxu0 0.0
    %2352 = vmatpush2.msra.mxu0 0.0
    %2353 = vmatprep.subr.mxu0 0.0
    %2354 = vmatpush2.msra.mxu0 0.0
    %2355 = vmatprep.subr.mxu0 0.0
    %2356 = vmatpush2.msra.mxu0 0.0
    %2357 = vmatprep.subr.mxu0 0.0
    %2358 = vmatpush2.msra.mxu0 0.0
    %2359 = vmatprep.subr.mxu0 0.0
    %2360 = vmatpush2.msra.mxu0 0.0
    %2361 = vmatprep.subr.mxu0 0.0
    %2362 = vmatpush2.msra.mxu0 0.0
    %2363 = vmatprep.subr.mxu0 0.0
    %2364 = vmatpush2.msra.mxu0 0.0
    %2365 = vmatprep.subr.mxu0 0.0
    %2366 = vmatpush2.msra.mxu0 0.0
    %2367 = vmatprep.subr.mxu0 0.0
    %2368 = vmatpush2.msra.mxu0 0.0
    %2369 = vmatprep.subr.mxu0 0.0
    %2370 = vmatpush2.msra.mxu0 0.0
    %2371 = vmatprep.subr.mxu0 0.0
    %2372 = vmatpush2.msra.mxu0 0.0
    %2373 = vmatprep.subr.mxu0 0.0
    %2374 = vmatpush2.msra.mxu0 0.0
    %2375 = vmatprep.mubr.f32.mxu0 0.0
    %2376 = vmatmul.mubr.f32.gmra.mxu0 %v2300
    %v2377 = vpop.f32.mrf.mxu0
    %v2378 = vadd.f32 %v2281, %v2377
    %v2379 = vpop.f32.mrf.mxu0
    %2380 = vmatprep.mubr.f32.mxu0 0.0
    %2381 = vmatmul.mubr.f32.gmra.mxu0 %v2303
    %v2382 = vpop.f32.mrf.mxu0
    %v2383 = vadd.f32 %v2286, %v2382
    %v2384 = vpop.f32.mrf.mxu0
    %2385 = vmatprep.mubr.f32.mxu0 0.0
    %2386 = vmatmul.mubr.f32.gmra.mxu0 %v2306
    %v2387 = vpop.f32.mrf.mxu0
    %v2388 = vadd.f32 %v2291, %v2387
    %v2389 = vpop.f32.mrf.mxu0
    %2390 = vmatprep.mubr.f32.mxu0 0.0
    %2391 = vmatmul.mubr.f32.gmra.mxu0 %v2309
    %v2392 = vpop.f32.mrf.mxu0
    %v2393 = vadd.f32 %v2296, %v2392
    %v2394 = vpop.f32.mrf.mxu0
    %2395 = vdwg.mxu0
    %s2396 = scalar_lea.vmem %s12, 128
    %v2397 = vld [vmem:[%s2396] sm:$0xff]
    %v2398 = vld [vmem:[%s2396 + $0x8] sm:$0xff]
    %v2399 = vld [vmem:[%s2396 + $0x10] sm:$0xff]
    %v2400 = vld [vmem:[%s2396 + $0x18] sm:$0xff]
    %s2401 = scalar_lea.vmem %s12, 160
    %v2402 = vld [vmem:[%s2401] sm:$0xff]
    %v2403 = vld [vmem:[%s2401 + $0x8] sm:$0xff]
    %v2404 = vld [vmem:[%s2401 + $0x10] sm:$0xff]
    %v2405 = vld [vmem:[%s2401 + $0x18] sm:$0xff]
    %v2407 = vsel %vm1997, %v2402, 0
    %v2410 = vsel %vm1997, %v2403, 0
    %v2413 = vsel %vm1997, %v2404, 0
    %v2416 = vsel %vm1997, %v2405, 0
    %2418 = vmatprep.subr.mxu0 0.0
    %2419 = vmatpush1.msra.mxu0 0.0
    %2420 = vmatprep.subr.mxu0 0.0
    %2421 = vmatpush1.msra.mxu0 0.0
    %2422 = vmatprep.subr.mxu0 0.0
    %2423 = vmatpush1.msra.mxu0 0.0
    %2424 = vmatprep.subr.mxu0 0.0
    %2425 = vmatpush1.msra.mxu0 0.0
    %2426 = vmatprep.subr.mxu0 0.0
    %2427 = vmatpush1.msra.mxu0 0.0
    %2428 = vmatprep.subr.mxu0 0.0
    %2429 = vmatpush1.msra.mxu0 0.0
    %2430 = vmatprep.subr.mxu0 0.0
    %2431 = vmatpush1.msra.mxu0 0.0
    %2432 = vmatprep.subr.mxu0 0.0
    %2433 = vmatpush1.msra.mxu0 0.0
    %2434 = vmatprep.subr.mxu0 0.0
    %2435 = vmatpush1.msra.mxu0 0.0
    %2436 = vmatprep.subr.mxu0 0.0
    %2437 = vmatpush1.msra.mxu0 0.0
    %2438 = vmatprep.subr.mxu0 0.0
    %2439 = vmatpush1.msra.mxu0 0.0
    %2440 = vmatprep.subr.mxu0 0.0
    %2441 = vmatpush1.msra.mxu0 0.0
    %2442 = vmatprep.subr.mxu0 0.0
    %2443 = vmatpush1.msra.mxu0 0.0
    %2444 = vmatprep.subr.mxu0 0.0
    %2445 = vmatpush1.msra.mxu0 0.0
    %2446 = vmatprep.subr.mxu0 0.0
    %2447 = vmatpush1.msra.mxu0 %v1994
    %2448 = vmatprep.subr.mxu0 0.0
    %2449 = vmatpush1.msra.mxu0 %v1992
    %2450 = vmatprep.subr.mxu0 0.0
    %2451 = vmatpush2.msra.mxu0 0.0
    %2452 = vmatprep.subr.mxu0 0.0
    %2453 = vmatpush2.msra.mxu0 0.0
    %2454 = vmatprep.subr.mxu0 0.0
    %2455 = vmatpush2.msra.mxu0 0.0
    %2456 = vmatprep.subr.mxu0 0.0
    %2457 = vmatpush2.msra.mxu0 0.0
    %2458 = vmatprep.subr.mxu0 0.0
    %2459 = vmatpush2.msra.mxu0 0.0
    %2460 = vmatprep.subr.mxu0 0.0
    %2461 = vmatpush2.msra.mxu0 0.0
    %2462 = vmatprep.subr.mxu0 0.0
    %2463 = vmatpush2.msra.mxu0 0.0
    %2464 = vmatprep.subr.mxu0 0.0
    %2465 = vmatpush2.msra.mxu0 0.0
    %2466 = vmatprep.subr.mxu0 0.0
    %2467 = vmatpush2.msra.mxu0 0.0
    %2468 = vmatprep.subr.mxu0 0.0
    %2469 = vmatpush2.msra.mxu0 0.0
    %2470 = vmatprep.subr.mxu0 0.0
    %2471 = vmatpush2.msra.mxu0 0.0
    %2472 = vmatprep.subr.mxu0 0.0
    %2473 = vmatpush2.msra.mxu0 0.0
    %2474 = vmatprep.subr.mxu0 0.0
    %2475 = vmatpush2.msra.mxu0 0.0
    %2476 = vmatprep.subr.mxu0 0.0
    %2477 = vmatpush2.msra.mxu0 0.0
    %2478 = vmatprep.subr.mxu0 0.0
    %2479 = vmatpush2.msra.mxu0 0.0
    %2480 = vmatprep.subr.mxu0 0.0
    %2481 = vmatpush2.msra.mxu0 0.0
    %2482 = vmatprep.mubr.f32.mxu0 0.0
    %2483 = vmatmul.mubr.f32.gmra.mxu0 %v2407
    %v2484 = vpop.f32.mrf.mxu0
    %v2485 = vadd.f32 0.0, %v2484
    %v2486 = vpop.f32.mrf.mxu0
    %2487 = vmatprep.mubr.f32.mxu0 0.0
    %2488 = vmatmul.mubr.f32.gmra.mxu0 %v2410
    %v2489 = vpop.f32.mrf.mxu0
    %v2490 = vadd.f32 0.0, %v2489
    %v2491 = vpop.f32.mrf.mxu0
    %2492 = vmatprep.mubr.f32.mxu0 0.0
    %2493 = vmatmul.mubr.f32.gmra.mxu0 %v2413
    %v2494 = vpop.f32.mrf.mxu0
    %v2495 = vadd.f32 0.0, %v2494
    %v2496 = vpop.f32.mrf.mxu0
    %2497 = vmatprep.mubr.f32.mxu0 0.0
    %2498 = vmatmul.mubr.f32.gmra.mxu0 %v2416
    %v2499 = vpop.f32.mrf.mxu0
    %v2500 = vadd.f32 0.0, %v2499
    %v2501 = vpop.f32.mrf.mxu0
    %2502 = vdwg.mxu0
    %v2504 = vsel %vm1997, %v2397, 0
    %v2507 = vsel %vm1997, %v2398, 0
    %v2510 = vsel %vm1997, %v2399, 0
    %v2513 = vsel %vm1997, %v2400, 0
    %2515 = vmatprep.subr.mxu0 0.0
    %2516 = vmatpush1.msra.mxu0 0.0
    %2517 = vmatprep.subr.mxu0 0.0
    %2518 = vmatpush1.msra.mxu0 0.0
    %2519 = vmatprep.subr.mxu0 0.0
    %2520 = vmatpush1.msra.mxu0 0.0
    %2521 = vmatprep.subr.mxu0 0.0
    %2522 = vmatpush1.msra.mxu0 0.0
    %2523 = vmatprep.subr.mxu0 0.0
    %2524 = vmatpush1.msra.mxu0 0.0
    %2525 = vmatprep.subr.mxu0 0.0
    %2526 = vmatpush1.msra.mxu0 0.0
    %2527 = vmatprep.subr.mxu0 0.0
    %2528 = vmatpush1.msra.mxu0 0.0
    %2529 = vmatprep.subr.mxu0 0.0
    %2530 = vmatpush1.msra.mxu0 0.0
    %2531 = vmatprep.subr.mxu0 0.0
    %2532 = vmatpush1.msra.mxu0 0.0
    %2533 = vmatprep.subr.mxu0 0.0
    %2534 = vmatpush1.msra.mxu0 0.0
    %2535 = vmatprep.subr.mxu0 0.0
    %2536 = vmatpush1.msra.mxu0 0.0
    %2537 = vmatprep.subr.mxu0 0.0
    %2538 = vmatpush1.msra.mxu0 0.0
    %2539 = vmatprep.subr.mxu0 0.0
    %2540 = vmatpush1.msra.mxu0 0.0
    %2541 = vmatprep.subr.mxu0 0.0
    %2542 = vmatpush1.msra.mxu0 0.0
    %2543 = vmatprep.subr.mxu0 0.0
    %2544 = vmatpush1.msra.mxu0 %v1979
    %2545 = vmatprep.subr.mxu0 0.0
    %2546 = vmatpush1.msra.mxu0 %v1978
    %2547 = vmatprep.subr.mxu0 0.0
    %2548 = vmatpush2.msra.mxu0 0.0
    %2549 = vmatprep.subr.mxu0 0.0
    %2550 = vmatpush2.msra.mxu0 0.0
    %2551 = vmatprep.subr.mxu0 0.0
    %2552 = vmatpush2.msra.mxu0 0.0
    %2553 = vmatprep.subr.mxu0 0.0
    %2554 = vmatpush2.msra.mxu0 0.0
    %2555 = vmatprep.subr.mxu0 0.0
    %2556 = vmatpush2.msra.mxu0 0.0
    %2557 = vmatprep.subr.mxu0 0.0
    %2558 = vmatpush2.msra.mxu0 0.0
    %2559 = vmatprep.subr.mxu0 0.0
    %2560 = vmatpush2.msra.mxu0 0.0
    %2561 = vmatprep.subr.mxu0 0.0
    %2562 = vmatpush2.msra.mxu0 0.0
    %2563 = vmatprep.subr.mxu0 0.0
    %2564 = vmatpush2.msra.mxu0 0.0
    %2565 = vmatprep.subr.mxu0 0.0
    %2566 = vmatpush2.msra.mxu0 0.0
    %2567 = vmatprep.subr.mxu0 0.0
    %2568 = vmatpush2.msra.mxu0 0.0
    %2569 = vmatprep.subr.mxu0 0.0
    %2570 = vmatpush2.msra.mxu0 0.0
    %2571 = vmatprep.subr.mxu0 0.0
    %2572 = vmatpush2.msra.mxu0 0.0
    %2573 = vmatprep.subr.mxu0 0.0
    %2574 = vmatpush2.msra.mxu0 0.0
    %2575 = vmatprep.subr.mxu0 0.0
    %2576 = vmatpush2.msra.mxu0 0.0
    %2577 = vmatprep.subr.mxu0 0.0
    %2578 = vmatpush2.msra.mxu0 0.0
    %2579 = vmatprep.mubr.f32.mxu0 0.0
    %2580 = vmatmul.mubr.f32.gmra.mxu0 %v2504
    %v2581 = vpop.f32.mrf.mxu0
    %v2582 = vadd.f32 %v2485, %v2581
    %v2583 = vpop.f32.mrf.mxu0
    %2584 = vmatprep.mubr.f32.mxu0 0.0
    %2585 = vmatmul.mubr.f32.gmra.mxu0 %v2507
    %v2586 = vpop.f32.mrf.mxu0
    %v2587 = vadd.f32 %v2490, %v2586
    %v2588 = vpop.f32.mrf.mxu0
    %2589 = vmatprep.mubr.f32.mxu0 0.0
    %2590 = vmatmul.mubr.f32.gmra.mxu0 %v2510
    %v2591 = vpop.f32.mrf.mxu0
    %v2592 = vadd.f32 %v2495, %v2591
    %v2593 = vpop.f32.mrf.mxu0
    %2594 = vmatprep.mubr.f32.mxu0 0.0
    %2595 = vmatmul.mubr.f32.gmra.mxu0 %v2513
    %v2596 = vpop.f32.mrf.mxu0
    %v2597 = vadd.f32 %v2500, %v2596
    %v2598 = vpop.f32.mrf.mxu0
    %2599 = vdwg.mxu0
    %2604 = vrot.lane.b32.xlu0 %v2378, 64
    %v2605 = vpop.permute.xlu0 %2604
    %2606 = vrot.lane.b32.xlu0 %v2383, 64
    %v2607 = vpop.permute.xlu0 %2606
    %2608 = vrot.lane.b32.xlu0 %v2388, 64
    %v2609 = vpop.permute.xlu0 %2608
    %2610 = vrot.lane.b32.xlu0 %v2393, 64
    %v2611 = vpop.permute.xlu0 %2610
    %v2616 = vsel %vm127, %v2174, %v2605
    %v2617 = vsel %vm127, %v2179, %v2607
    %v2618 = vsel %vm127, %v2184, %v2609
    %v2619 = vsel %vm127, %v2189, %v2611
    %v2620 = vld [vmem:[%s13] sm:$0xff]
    %v2621 = vld [vmem:[%s13 + $0x8] sm:$0xff]
    %v2622 = vld [vmem:[%s13 + $0x10] sm:$0xff]
    %v2623 = vld [vmem:[%s13 + $0x18] sm:$0xff]
    %v2624 = vld [vmem:[%s13 + $0x20] sm:$0xff]
    %v2625 = vld [vmem:[%s13 + $0x28] sm:$0xff]
    %v2626 = vld [vmem:[%s13 + $0x30] sm:$0xff]
    %v2627 = vld [vmem:[%s13 + $0x38] sm:$0xff]
    %v2628 = vld [vmem:[%s13 + $0x40] sm:$0xff]
    %v2629 = vld [vmem:[%s13 + $0x48] sm:$0xff]
    %v2630 = vld [vmem:[%s13 + $0x50] sm:$0xff]
    %v2631 = vld [vmem:[%s13 + $0x58] sm:$0xff]
    %v2632 = vld [vmem:[%s13 + $0x60] sm:$0xff]
    %v2633 = vld [vmem:[%s13 + $0x68] sm:$0xff]
    %v2634 = vld [vmem:[%s13 + $0x70] sm:$0xff]
    %v2635 = vld [vmem:[%s13 + $0x78] sm:$0xff]
    %v2636 = vld [vmem:[%s13 + $0x80] sm:$0xff]
    %v2637 = vld [vmem:[%s13 + $0x88] sm:$0xff]
    %v2638 = vld [vmem:[%s13 + $0x90] sm:$0xff]
    %v2639 = vld [vmem:[%s13 + $0x98] sm:$0xff]
    %v2640 = vld [vmem:[%s13 + $0xa0] sm:$0xff]
    %v2641 = vld [vmem:[%s13 + $0xa8] sm:$0xff]
    %v2642 = vld [vmem:[%s13 + $0xb0] sm:$0xff]
    %v2643 = vld [vmem:[%s13 + $0xb8] sm:$0xff]
    %v2644 = vld [vmem:[%s13 + $0xc0] sm:$0xff]
    %v2645 = vld [vmem:[%s13 + $0xc8] sm:$0xff]
    %v2646 = vld [vmem:[%s13 + $0xd0] sm:$0xff]
    %v2647 = vld [vmem:[%s13 + $0xd8] sm:$0xff]
    %v2648 = vld [vmem:[%s13 + $0xe0] sm:$0xff]
    %v2649 = vld [vmem:[%s13 + $0xe8] sm:$0xff]
    %v2650 = vld [vmem:[%s13 + $0xf0] sm:$0xff]
    %v2651 = vld [vmem:[%s13 + $0xf8] sm:$0xff]
    %v2652 = vld [vmem:[%s13 + $0x100] sm:$0xff]
    %v2653 = vld [vmem:[%s13 + $0x108] sm:$0xff]
    %v2654 = vld [vmem:[%s13 + $0x110] sm:$0xff]
    %v2655 = vld [vmem:[%s13 + $0x118] sm:$0xff]
    %v2656 = vld [vmem:[%s13 + $0x120] sm:$0xff]
    %v2657 = vld [vmem:[%s13 + $0x128] sm:$0xff]
    %v2658 = vld [vmem:[%s13 + $0x130] sm:$0xff]
    %v2659 = vld [vmem:[%s13 + $0x138] sm:$0xff]
    %v2660 = vld [vmem:[%s13 + $0x140] sm:$0xff]
    %v2661 = vld [vmem:[%s13 + $0x148] sm:$0xff]
    %v2662 = vld [vmem:[%s13 + $0x150] sm:$0xff]
    %v2663 = vld [vmem:[%s13 + $0x158] sm:$0xff]
    %v2664 = vld [vmem:[%s13 + $0x160] sm:$0xff]
    %v2665 = vld [vmem:[%s13 + $0x168] sm:$0xff]
    %v2666 = vld [vmem:[%s13 + $0x170] sm:$0xff]
    %v2667 = vld [vmem:[%s13 + $0x178] sm:$0xff]
    %v2668 = vld [vmem:[%s14] sm:$0x3]
    %v2670 = vlaneseq
    %v2671 = vshrl.u32 %v2670, 7
    %v2672 = vsub.s32 0, %v2671
    %v2673 = vrot.slane %v2668, %v2672
    %v2674 = vlaneseq
    %v2675 = vshrl.u32 %v2674, 7
    %v2676 = vsub.s32 1, %v2675
    %v2677 = vrot.slane %v2668, %v2676
    %v2681 = vsel %vm127, %v2582, 0
    %v2684 = vsel %vm127, %v2587, 0
    %v2687 = vsel %vm127, %v2592, 0
    %v2690 = vsel %vm127, %v2597, 0
    %2692 = vmatprep.subr.mxu0 %v2651
    %2693 = vmatpush1.msra.mxu0 %v2650
    %2694 = vmatprep.subr.mxu0 %v2649
    %2695 = vmatpush1.msra.mxu0 %v2648
    %2696 = vmatprep.subr.mxu0 %v2647
    %2697 = vmatpush1.msra.mxu0 %v2646
    %2698 = vmatprep.subr.mxu0 %v2645
    %2699 = vmatpush1.msra.mxu0 %v2644
    %2700 = vmatprep.subr.mxu0 %v2643
    %2701 = vmatpush1.msra.mxu0 %v2642
    %2702 = vmatprep.subr.mxu0 %v2641
    %2703 = vmatpush1.msra.mxu0 %v2640
    %2704 = vmatprep.subr.mxu0 %v2639
    %2705 = vmatpush1.msra.mxu0 %v2638
    %2706 = vmatprep.subr.mxu0 %v2637
    %2707 = vmatpush1.msra.mxu0 %v2636
    %2708 = vmatprep.subr.mxu0 %v2635
    %2709 = vmatpush1.msra.mxu0 %v2634
    %2710 = vmatprep.subr.mxu0 %v2633
    %2711 = vmatpush1.msra.mxu0 %v2632
    %2712 = vmatprep.subr.mxu0 %v2631
    %2713 = vmatpush1.msra.mxu0 %v2630
    %2714 = vmatprep.subr.mxu0 %v2629
    %2715 = vmatpush1.msra.mxu0 %v2628
    %2716 = vmatprep.subr.mxu0 %v2627
    %2717 = vmatpush1.msra.mxu0 %v2626
    %2718 = vmatprep.subr.mxu0 %v2625
    %2719 = vmatpush1.msra.mxu0 %v2624
    %2720 = vmatprep.subr.mxu0 %v2623
    %2721 = vmatpush1.msra.mxu0 %v2622
    %2722 = vmatprep.subr.mxu0 %v2621
    %2723 = vmatpush1.msra.mxu0 %v2620
    %2724 = vmatprep.subr.mxu0 0.0
    %2725 = vmatpush2.msra.mxu0 0.0
    %2726 = vmatprep.subr.mxu0 0.0
    %2727 = vmatpush2.msra.mxu0 0.0
    %2728 = vmatprep.subr.mxu0 0.0
    %2729 = vmatpush2.msra.mxu0 0.0
    %2730 = vmatprep.subr.mxu0 0.0
    %2731 = vmatpush2.msra.mxu0 0.0
    %2732 = vmatprep.subr.mxu0 0.0
    %2733 = vmatpush2.msra.mxu0 0.0
    %2734 = vmatprep.subr.mxu0 0.0
    %2735 = vmatpush2.msra.mxu0 0.0
    %2736 = vmatprep.subr.mxu0 0.0
    %2737 = vmatpush2.msra.mxu0 0.0
    %2738 = vmatprep.subr.mxu0 0.0
    %2739 = vmatpush2.msra.mxu0 0.0
    %2740 = vmatprep.subr.mxu0 %v2667
    %2741 = vmatpush2.msra.mxu0 %v2666
    %2742 = vmatprep.subr.mxu0 %v2665
    %2743 = vmatpush2.msra.mxu0 %v2664
    %2744 = vmatprep.subr.mxu0 %v2663
    %2745 = vmatpush2.msra.mxu0 %v2662
    %2746 = vmatprep.subr.mxu0 %v2661
    %2747 = vmatpush2.msra.mxu0 %v2660
    %2748 = vmatprep.subr.mxu0 %v2659
    %2749 = vmatpush2.msra.mxu0 %v2658
    %2750 = vmatprep.subr.mxu0 %v2657
    %2751 = vmatpush2.msra.mxu0 %v2656
    %2752 = vmatprep.subr.mxu0 %v2655
    %2753 = vmatpush2.msra.mxu0 %v2654
    %2754 = vmatprep.subr.mxu0 %v2653
    %2755 = vmatpush2.msra.mxu0 %v2652
    %2756 = vmatprep.mubr.f32.mxu0 %v2681
    %2757 = vmatmul.mubr.f32.gmra.mxu0 %v2616
    %v2758 = vpop.f32.mrf.mxu0
    %v2759 = vadd.f32 %v2673, %v2758
    %v2760 = vpop.f32.mrf.mxu0
    %v2761 = vadd.f32 %v2677, %v2760
    %2762 = vmatprep.mubr.f32.mxu0 %v2684
    %2763 = vmatmul.mubr.f32.gmra.mxu0 %v2617
    %v2764 = vpop.f32.mrf.mxu0
    %v2765 = vadd.f32 %v2673, %v2764
    %v2766 = vpop.f32.mrf.mxu0
    %v2767 = vadd.f32 %v2677, %v2766
    %2768 = vmatprep.mubr.f32.mxu0 %v2687
    %2769 = vmatmul.mubr.f32.gmra.mxu0 %v2618
    %v2770 = vpop.f32.mrf.mxu0
    %v2771 = vadd.f32 %v2673, %v2770
    %v2772 = vpop.f32.mrf.mxu0
    %v2773 = vadd.f32 %v2677, %v2772
    %2774 = vmatprep.mubr.f32.mxu0 %v2690
    %2775 = vmatmul.mubr.f32.gmra.mxu0 %v2619
    %v2776 = vpop.f32.mrf.mxu0
    %v2777 = vadd.f32 %v2673, %v2776
    %v2778 = vpop.f32.mrf.mxu0
    %v2779 = vadd.f32 %v2677, %v2778
    %2780 = vdwg.mxu0
    %vm2781 = vcmp.ge.f32.partialorder %v2759, 0.0
    %vm2782 = vcmp.ge.f32.partialorder %v2761, 0.0
    %vm2783 = vcmp.ge.f32.partialorder %v2765, 0.0
    %vm2784 = vcmp.ge.f32.partialorder %v2767, 0.0
    %vm2785 = vcmp.ge.f32.partialorder %v2771, 0.0
    %vm2786 = vcmp.ge.f32.partialorder %v2773, 0.0
    %vm2787 = vcmp.ge.f32.partialorder %v2777, 0.0
    %vm2788 = vcmp.ge.f32.partialorder %v2779, 0.0
    %v2789 = vmul.f32 %v2759, 0.01
    %v2790 = vmul.f32 %v2761, 0.01
    %v2791 = vmul.f32 %v2765, 0.01
    %v2792 = vmul.f32 %v2767, 0.01
    %v2793 = vmul.f32 %v2771, 0.01
    %v2794 = vmul.f32 %v2773, 0.01
    %v2795 = vmul.f32 %v2777, 0.01
    %v2796 = vmul.f32 %v2779, 0.01
    %v2797 = vsel %vm2781, %v2759, %v2789
    %v2798 = vsel %vm2782, %v2761, %v2790
    %v2799 = vsel %vm2783, %v2765, %v2791
    %v2800 = vsel %vm2784, %v2767, %v2792
    %v2801 = vsel %vm2785, %v2771, %v2793
    %v2802 = vsel %vm2786, %v2773, %v2794
    %v2803 = vsel %vm2787, %v2777, %v2795
    %v2804 = vsel %vm2788, %v2779, %v2796
    %v2805 = vld [vmem:[#allocation7] sm:$0xff]
    %v2806 = vld [vmem:[#allocation7 + $0x8] sm:$0xff]
    %v2807 = vld [vmem:[#allocation7 + $0x10] sm:$0xff]
    %v2808 = vld [vmem:[#allocation7 + $0x18] sm:$0xff]
    %v2809 = vld [vmem:[#allocation7 + $0x20] sm:$0xff]
    %v2810 = vld [vmem:[#allocation7 + $0x28] sm:$0xff]
    %v2811 = vld [vmem:[#allocation7 + $0x30] sm:$0xff]
    %v2812 = vld [vmem:[#allocation7 + $0x38] sm:$0xff]
    %v2813 = vld [vmem:[#allocation7 + $0x40] sm:$0xff]
    %v2814 = vld [vmem:[#allocation7 + $0x48] sm:$0xff]
    %v2815 = vld [vmem:[#allocation7 + $0x50] sm:$0xff]
    %v2816 = vld [vmem:[#allocation7 + $0x58] sm:$0xff]
    %v2817 = vld [vmem:[#allocation7 + $0x60] sm:$0xff]
    %v2818 = vld [vmem:[#allocation7 + $0x68] sm:$0xff]
    %v2819 = vld [vmem:[#allocation7 + $0x70] sm:$0xff]
    %v2820 = vld [vmem:[#allocation7 + $0x78] sm:$0xff]
    %v2821 = vld [vmem:[#allocation7 + $0x80] sm:$0xff]
    %v2822 = vld [vmem:[#allocation7 + $0x88] sm:$0xff]
    %v2823 = vld [vmem:[#allocation7 + $0x90] sm:$0xff]
    %v2824 = vld [vmem:[#allocation7 + $0x98] sm:$0xff]
    %v2825 = vld [vmem:[#allocation7 + $0xa0] sm:$0xff]
    %v2826 = vld [vmem:[#allocation7 + $0xa8] sm:$0xff]
    %v2827 = vld [vmem:[#allocation7 + $0xb0] sm:$0xff]
    %v2828 = vld [vmem:[#allocation7 + $0xb8] sm:$0xff]
    %v2829 = vld [vmem:[#allocation7 + $0xc0] sm:$0xff]
    %v2830 = vld [vmem:[#allocation7 + $0xc8] sm:$0xff]
    %v2831 = vld [vmem:[#allocation7 + $0xd0] sm:$0xff]
    %v2832 = vld [vmem:[#allocation7 + $0xd8] sm:$0xff]
    %v2833 = vld [vmem:[#allocation7 + $0xe0] sm:$0xff]
    %v2834 = vld [vmem:[#allocation7 + $0xe8] sm:$0xff]
    %v2835 = vld [vmem:[#allocation7 + $0xf0] sm:$0xff]
    %v2836 = vld [vmem:[#allocation7 + $0xf8] sm:$0xff]
    %v2837 = vld [vmem:[%s16] sm:$0x1]
    %v2839 = vlaneseq
    %v2840 = vshrl.u32 %v2839, 7
    %v2841 = vsub.s32 0, %v2840
    %v2842 = vrot.slane %v2837, %v2841
    %2844 = vmatprep.subr.mxu0 0.0
    %2845 = vmatpush1.msra.mxu0 %v2820
    %2846 = vmatprep.subr.mxu0 0.0
    %2847 = vmatpush1.msra.mxu0 %v2819
    %2848 = vmatprep.subr.mxu0 0.0
    %2849 = vmatpush1.msra.mxu0 %v2818
    %2850 = vmatprep.subr.mxu0 0.0
    %2851 = vmatpush1.msra.mxu0 %v2817
    %2852 = vmatprep.subr.mxu0 0.0
    %2853 = vmatpush1.msra.mxu0 %v2816
    %2854 = vmatprep.subr.mxu0 0.0
    %2855 = vmatpush1.msra.mxu0 %v2815
    %2856 = vmatprep.subr.mxu0 0.0
    %2857 = vmatpush1.msra.mxu0 %v2814
    %2858 = vmatprep.subr.mxu0 0.0
    %2859 = vmatpush1.msra.mxu0 %v2813
    %2860 = vmatprep.subr.mxu0 0.0
    %2861 = vmatpush1.msra.mxu0 %v2812
    %2862 = vmatprep.subr.mxu0 0.0
    %2863 = vmatpush1.msra.mxu0 %v2811
    %2864 = vmatprep.subr.mxu0 0.0
    %2865 = vmatpush1.msra.mxu0 %v2810
    %2866 = vmatprep.subr.mxu0 0.0
    %2867 = vmatpush1.msra.mxu0 %v2809
    %2868 = vmatprep.subr.mxu0 0.0
    %2869 = vmatpush1.msra.mxu0 %v2808
    %2870 = vmatprep.subr.mxu0 0.0
    %2871 = vmatpush1.msra.mxu0 %v2807
    %2872 = vmatprep.subr.mxu0 0.0
    %2873 = vmatpush1.msra.mxu0 %v2806
    %2874 = vmatprep.subr.mxu0 0.0
    %2875 = vmatpush1.msra.mxu0 %v2805
    %2876 = vmatprep.subr.mxu0 0.0
    %2877 = vmatpush2.msra.mxu0 %v2836
    %2878 = vmatprep.subr.mxu0 0.0
    %2879 = vmatpush2.msra.mxu0 %v2835
    %2880 = vmatprep.subr.mxu0 0.0
    %2881 = vmatpush2.msra.mxu0 %v2834
    %2882 = vmatprep.subr.mxu0 0.0
    %2883 = vmatpush2.msra.mxu0 %v2833
    %2884 = vmatprep.subr.mxu0 0.0
    %2885 = vmatpush2.msra.mxu0 %v2832
    %2886 = vmatprep.subr.mxu0 0.0
    %2887 = vmatpush2.msra.mxu0 %v2831
    %2888 = vmatprep.subr.mxu0 0.0
    %2889 = vmatpush2.msra.mxu0 %v2830
    %2890 = vmatprep.subr.mxu0 0.0
    %2891 = vmatpush2.msra.mxu0 %v2829
    %2892 = vmatprep.subr.mxu0 0.0
    %2893 = vmatpush2.msra.mxu0 %v2828
    %2894 = vmatprep.subr.mxu0 0.0
    %2895 = vmatpush2.msra.mxu0 %v2827
    %2896 = vmatprep.subr.mxu0 0.0
    %2897 = vmatpush2.msra.mxu0 %v2826
    %2898 = vmatprep.subr.mxu0 0.0
    %2899 = vmatpush2.msra.mxu0 %v2825
    %2900 = vmatprep.subr.mxu0 0.0
    %2901 = vmatpush2.msra.mxu0 %v2824
    %2902 = vmatprep.subr.mxu0 0.0
    %2903 = vmatpush2.msra.mxu0 %v2823
    %2904 = vmatprep.subr.mxu0 0.0
    %2905 = vmatpush2.msra.mxu0 %v2822
    %2906 = vmatprep.subr.mxu0 0.0
    %2907 = vmatpush2.msra.mxu0 %v2821
    %2908 = vmatprep.mubr.f32.mxu0 %v2798
    %2909 = vmatmul.mubr.f32.gmra.mxu0 %v2797
    %v2910 = vpop.f32.mrf.mxu0
    %v2911 = vadd.f32 %v2842, %v2910
    %v2912 = vpop.f32.mrf.mxu0
    %2913 = vmatprep.mubr.f32.mxu0 %v2800
    %2914 = vmatmul.mubr.f32.gmra.mxu0 %v2799
    %v2915 = vpop.f32.mrf.mxu0
    %v2916 = vadd.f32 %v2842, %v2915
    %v2917 = vpop.f32.mrf.mxu0
    %2918 = vmatprep.mubr.f32.mxu0 %v2802
    %2919 = vmatmul.mubr.f32.gmra.mxu0 %v2801
    %v2920 = vpop.f32.mrf.mxu0
    %v2921 = vadd.f32 %v2842, %v2920
    %v2922 = vpop.f32.mrf.mxu0
    %2923 = vmatprep.mubr.f32.mxu0 %v2804
    %2924 = vmatmul.mubr.f32.gmra.mxu0 %v2803
    %v2925 = vpop.f32.mrf.mxu0
    %v2926 = vadd.f32 %v2842, %v2925
    %v2927 = vpop.f32.mrf.mxu0
    %2928 = vdwg.mxu0
    %2929 = vst [vmem:[%s17] sm:$0xff] %v2911
    %2930 = vst [vmem:[%s17 + $0x8] sm:$0xff] %v2916
    %2931 = vst [vmem:[%s17 + $0x10] sm:$0xff] %v2921
    %2932 = vst [vmem:[%s17 + $0x18] sm:$0xff] %v2926
    // Predicated region
    $region86: #{decoder_forward.1} parent=1 // pred_check
      _
    $region87: #{decoder_forward.1} parent=1 // pred_check_branch
      %2934 = sbr.rel (0) target = $region89
    $region88: #{decoder_forward.1} parent=1 // pred_region
      _
    $region89: #{decoder_forward.1} parent=1 // pred_fallthru
      _
    // Predicated region
    $region90: #{decoder_forward.1} parent=1 // pred_check
      _
    $region91: #{decoder_forward.1} parent=1 // pred_check_branch
      %2936 = sbr.rel (0) target = $region93
    $region92: #{decoder_forward.1} parent=1 // pred_region
      _
    $region93: #{decoder_forward.1} parent=1 // pred_fallthru
      _
    %2937 = vsyncpa [#allocation3], 1
    %2938 = vsyncpa [#allocation5], 1
    %2939 = vsyncpa [#allocation8], 1

</llo_original>
